<compile_context>
chip_gen: v7x
topology: tpu7x:2x2x1
jax: 0.10.0
libtpu: 0.0.40
codegen_flags: <defaults>
</compile_context>

<pallas_src>
import jax
import jax.numpy as jnp
from jax.experimental import pallas as pl
from jax.experimental.pallas import tpu as pltpu


# ---------------- model hyper-params (small, consistent with the module) -----
N_NODES = 32          # number of graph nodes
NFEAT = 16            # nfeat
NHID = 32             # nhid
NCLASS = 8            # nclass
DROPOUT = 0.5         # unused at inference (identity)
GRAPH_START_IDX = 8   # graph_start_idx (multiple of 8 -> free sublane slice)

_NEG = -1e30          # padding bias for fake class lanes (exp() underflows to 0)


def _round_up(v, m):
    return ((v + m - 1) // m) * m


# ---------------- parameter packing (2 DMAs instead of 6) --------------------
def pack_params(params):
    """Pack (W1,b1,W2,b2) into one [*,nhid] buffer and (Ws,bs) into one
    lane-padded [*,128] buffer. All row offsets are multiples of 8."""
    w1, b1, w2, b2, ws, bs = params
    nfeat, nhid = w1.shape
    nclass = ws.shape[1]

    r_b1 = nfeat
    r_w2 = _round_up(nfeat + 1, 8)
    r_b2 = r_w2 + nhid
    rows_h = _round_up(r_b2 + 1, 8)

    ph = jnp.zeros((rows_h, nhid), jnp.float32)
    ph = ph.at[0:nfeat].set(w1)
    ph = ph.at[r_b1].set(b1.reshape(-1))
    ph = ph.at[r_w2:r_w2 + nhid].set(w2)
    ph = ph.at[r_b2].set(b2.reshape(-1))

    ncls_pad = _round_up(max(nclass, 128), 128)   # lane-dense head / output
    r_bs = nhid
    rows_w = _round_up(nhid + 1, 8)
    pw = jnp.zeros((rows_w, ncls_pad), jnp.float32)
    pw = pw.at[0:nhid, 0:nclass].set(ws)
    pw = pw.at[r_bs].set(jnp.full((ncls_pad,), _NEG, jnp.float32))
    pw = pw.at[r_bs, 0:nclass].set(bs.reshape(-1))

    layout = dict(nfeat=nfeat, nhid=nhid, nclass=nclass, ncls_pad=ncls_pad,
                  r_b1=r_b1, r_w2=r_w2, r_b2=r_b2, r_bs=r_bs)
    return ph, pw, layout


# ---------------- kernel ------------------------------------------------------
def _make_gcn_kernel(bg, n, start, layout):
    nfeat = layout["nfeat"]
    nhid = layout["nhid"]
    r_b1, r_w2 = layout["r_b1"], layout["r_w2"]
    r_b2, r_bs = layout["r_b2"], layout["r_bs"]
    rows = n - start

    def gcn_kernel(x_ref, adj_ref, ph_ref, pw_ref, out_ref):
        f32 = jnp.float32

        # packed parameters (static, 8-aligned sublane slices)
        w1 = ph_ref[0:nfeat, :]
        b1 = ph_ref[r_b1:r_b1 + 1, :]
        w2 = ph_ref[r_w2:r_w2 + nhid, :]
        b2 = ph_ref[r_b2:r_b2 + 1, :]
        ws = pw_ref[0:nhid, :]                 # [nhid, 128] (cols >= nclass are 0)
        bs = pw_ref[r_bs:r_bs + 1, :]          # [1, 128]    (cols >= nclass are -1e30)

        adj0 = adj_ref[0]                      # [bg, n, n]
        adj1 = adj_ref[1]                      # [bg, n, n]

        def graph_conv(h2d, w, b, a):
            # dense feature transform: one fat [bg*n, .] MXU matmul
            t = jnp.dot(h2d, w, preferred_element_type=f32)          # [bg*n, nhid]
            # per-graph neighborhood aggregation (batched einsum)
            t = jnp.einsum("bij,bjh->bih", a, t.reshape(bg, n, nhid),
                           preferred_element_type=f32)               # [bg, n, nhid]
            return jnp.maximum(t.reshape(bg * n, nhid) + b, 0.0)

        # gc1 + relu   (dropout: identity at eval)
        h = graph_conv(x_ref[...], w1, b1, adj0)
        # gc2 + relu   (dropout: identity at eval)
        h = graph_conv(h, w2, b2, adj1)
        # gc2 again + relu (the PyTorch forward reuses gc2; gc3 is unused)
        h = graph_conv(h, w2, b2, adj1)

        # svm linear head on rows [start:] of each graph; lane-padded classes
        hs = h.reshape(bg, n, nhid)[:, start:, :].reshape(bg * rows, nhid)
        logits = jnp.dot(hs, ws, preferred_element_type=f32) + bs    # [bg*rows, 128]

        # log_softmax along the class dim (padded lanes: exp(-1e30) == 0)
        m = jnp.max(logits, axis=1, keepdims=True)
        z = logits - m
        lse = jnp.log(jnp.sum(jnp.exp(z), axis=1, keepdims=True))
        out_ref[...] = z - lse

    return gcn_kernel


# ---------------- wrapper ------------------------------------------------------
def gcn_forward(x, adj, params, graph_start_idx, graphs_per_step=8):
    """Batched GCN forward.

    x:   [B, N, nfeat] f32
    adj: [B, 2, N, N]  f32  (adj[b, 0], adj[b, 1] as in the module's adj[0]/adj[1])
    Returns log-probs [B, N - graph_start_idx, nclass].
    A single graph (x: [N, nfeat], adj: [2, N, N]) is also accepted.
    """
    if x.ndim == 2:   # original (unbatched) module signature
        return gcn_forward(x[None], adj[None], params, graph_start_idx,
                           graphs_per_step=1)[0]

    B, N, F = x.shape
    assert adj.shape == (B, 2, N, N)
    assert N % 8 == 0, "node count must be sublane-aligned"
    bg = min(graphs_per_step, B)
    assert B % bg == 0, "batch must be divisible by graphs_per_step"

    # graph_start_idx must be a multiple of 8 for a free in-kernel sublane slice;
    # otherwise compute the head on all rows and slice on the host side.
    start_k = graph_start_idx if graph_start_idx % 8 == 0 else 0
    rows_k = N - start_k

    ph, pw, layout = pack_params(params)
    nclass, ncls_pad = layout["nclass"], layout["ncls_pad"]
    nhid, nfeat = layout["nhid"], layout["nfeat"]

    x2 = x.reshape(B * N, F)                       # one stacked slab -> one DMA
    adj_t = jnp.transpose(adj, (1, 0, 2, 3))       # [2, B, N, N] -> one DMA

    grid = (B // bg,)
    kernel = _make_gcn_kernel(bg, N, start_k, layout)

    # advisory cost estimate for the XLA scheduler
    flops = int(B * (2 * N * nfeat * nhid            # gc1 dense
                     + 2 * 2 * N * nhid * nhid       # gc2 dense (x2)
                     + 3 * 2 * N * N * nhid          # 3 aggregations
                     + 2 * rows_k * nhid * ncls_pad  # head
                     ))
    transcendentals = int(B * rows_k * (ncls_pad + 1))
    bytes_accessed = int(4 * (x2.size + adj_t.size + ph.size + pw.size
                              + B * rows_k * ncls_pad))

    out = pl.pallas_call(
        kernel,
        out_shape=jax.ShapeDtypeStruct((B * rows_k, ncls_pad), jnp.float32),
        grid_spec=pltpu.PrefetchScalarGridSpec(
            num_scalar_prefetch=0,
            grid=grid,
            in_specs=[
                pl.BlockSpec((bg * N, F), lambda g: (g, 0)),           # x (stacked)
                pl.BlockSpec((2, bg, N, N), lambda g: (0, g, 0, 0)),   # adj
                pl.BlockSpec(ph.shape, lambda g: (0, 0)),              # packed W1/b1/W2/b2
                pl.BlockSpec(pw.shape, lambda g: (0, 0)),              # packed Ws/bs (lane-dense)
            ],
            out_specs=pl.BlockSpec((bg * rows_k, ncls_pad), lambda g: (g, 0)),
        ),
        compiler_params=pltpu.CompilerParams(
            dimension_semantics=("parallel",)),      # v7x: shard batch steps over 2 TCs
        cost_estimate=pl.CostEstimate(flops=flops,
                                      transcendentals=transcendentals,
                                      bytes_accessed=bytes_accessed),
    )(x2, adj_t, ph, pw)

    out = out[:, :nclass].reshape(B, rows_k, nclass)
    if start_k != graph_start_idx:
        out = out[:, graph_start_idx - start_k:, :]
    return out


# ---------------- init & reference --------------------------------------------
def init_params(key):
    """Deterministic uniform init (Kipf-style 1/sqrt(fan_out)) for all weights."""
    k1, k2, k3, k4, k5, k6 = jax.random.split(key, 6)
    s1 = 1.0 / jnp.sqrt(NHID)
    s2 = 1.0 / jnp.sqrt(NHID)
    s3 = 1.0 / jnp.sqrt(NHID)  # nn.Linear default: 1/sqrt(fan_in) = 1/sqrt(nhid)
    w1 = jax.random.uniform(k1, (NFEAT, NHID), jnp.float32, -s1, s1)
    b1 = jax.random.uniform(k2, (1, NHID), jnp.float32, -s1, s1)
    w2 = jax.random.uniform(k3, (NHID, NHID), jnp.float32, -s2, s2)
    b2 = jax.random.uniform(k4, (1, NHID), jnp.float32, -s2, s2)
    ws = jax.random.uniform(k5, (NHID, NCLASS), jnp.float32, -s3, s3)
    bs = jax.random.uniform(k6, (1, NCLASS), jnp.float32, -s3, s3)
    return (w1, b1, w2, b2, ws, bs)


def gcn_forward_ref(x, adj, params, graph_start_idx):
    """Pure-JAX batched reference for correctness check."""
    w1, b1, w2, b2, ws, bs = params

    def single(xg, ag):
        h = jnp.maximum(ag[0] @ (xg @ w1) + b1, 0.0)
        h = jnp.maximum(ag[1] @ (h @ w2) + b2, 0.0)
        h = jnp.maximum(ag[1] @ (h @ w2) + b2, 0.0)
        logits = h[graph_start_idx:] @ ws + bs
        return jax.nn.log_softmax(logits, axis=1)

    return jax.vmap(single)(x, adj)


if __name__ == "__main__":
    key = jax.random.PRNGKey(0)
    kx, ka, kp = jax.random.split(key, 3)

    B = 16  # batch of graphs: 8 graphs per grid step (256-row matmuls), grid=(2,)
    x = jax.random.normal(kx, (B, N_NODES, NFEAT), jnp.float32)

    # Symmetric, row-normalized adjacency pair per graph.
    a = jax.random.uniform(ka, (B, 2, N_NODES, N_NODES), jnp.float32)
    a = (a + jnp.transpose(a, (0, 1, 3, 2))) * 0.5
    a = a + jnp.eye(N_NODES)[None, None]
    adj = a / jnp.sum(a, axis=-1, keepdims=True)

    params = init_params(kp)

    out = gcn_forward(x, adj, params, GRAPH_START_IDX, graphs_per_step=8)
    out = jax.block_until_ready(out)

    ref = gcn_forward_ref(x, adj, params, GRAPH_START_IDX)
    assert out.shape == (B, N_NODES - GRAPH_START_IDX, NCLASS)
    assert jnp.allclose(out, ref, atol=1e-4, rtol=1e-4)

    print("KERNEL_OK")
</pallas_src>

<mosaic_0001>
module attributes {stable_mosaic.version = 11 : i64} {
  func.func @gcn_kernel(%arg0: i32, %arg1: memref<256x16xf32, #tpu.memory_space<vmem>>, %arg2: memref<2x8x32x32xf32, #tpu.memory_space<vmem>>, %arg3: memref<64x32xf32, #tpu.memory_space<vmem>>, %arg4: memref<40x128xf32, #tpu.memory_space<vmem>>, %arg5: memref<192x128xf32, #tpu.memory_space<vmem>>) attributes {dimension_semantics = [#tpu.dimension_semantics<parallel>], iteration_bounds = array<i64: 2>, scalar_prefetch = 0 : i64, scratch_operands = 0 : i64, tpu.core_type = #tpu.core_type<tc>, window_params = [{transform_indices = @transform_0, window_bounds = array<i64: 256, 16>}, {transform_indices = @transform_1, window_bounds = array<i64: 2, 8, 32, 32>}, {pipeline_mode = #tpu.pipeline_mode<synchronous>, transform_indices = @transform_2, window_bounds = array<i64: 64, 32>}, {pipeline_mode = #tpu.pipeline_mode<synchronous>, transform_indices = @transform_3, window_bounds = array<i64: 40, 128>}, {transform_indices = @transform_4, window_bounds = array<i64: 192, 128>}]} {
    %c0 = arith.constant 0 : index
    %c0_0 = arith.constant 0 : index
    %0 = vector.load %arg3[%c0, %c0_0] : memref<64x32xf32, #tpu.memory_space<vmem>>, vector<16x32xf32>
    %c16 = arith.constant 16 : index
    %c0_1 = arith.constant 0 : index
    %1 = vector.load %arg3[%c16, %c0_1] : memref<64x32xf32, #tpu.memory_space<vmem>>, vector<1x32xf32>
    %c24 = arith.constant 24 : index
    %c0_2 = arith.constant 0 : index
    %2 = vector.load %arg3[%c24, %c0_2] : memref<64x32xf32, #tpu.memory_space<vmem>>, vector<32x32xf32>
    %c56 = arith.constant 56 : index
    %c0_3 = arith.constant 0 : index
    %3 = vector.load %arg3[%c56, %c0_3] : memref<64x32xf32, #tpu.memory_space<vmem>>, vector<1x32xf32>
    %c0_4 = arith.constant 0 : index
    %c0_5 = arith.constant 0 : index
    %4 = vector.load %arg4[%c0_4, %c0_5] : memref<40x128xf32, #tpu.memory_space<vmem>>, vector<32x128xf32>
    %c32 = arith.constant 32 : index
    %c0_6 = arith.constant 0 : index
    %5 = vector.load %arg4[%c32, %c0_6] : memref<40x128xf32, #tpu.memory_space<vmem>>, vector<1x128xf32>
    %c0_7 = arith.constant 0 : index
    %c0_8 = arith.constant 0 : index
    %c0_9 = arith.constant 0 : index
    %c0_10 = arith.constant 0 : index
    %6 = vector.load %arg2[%c0_7, %c0_8, %c0_9, %c0_10] : memref<2x8x32x32xf32, #tpu.memory_space<vmem>>, vector<1x8x32x32xf32>
    %7 = vector.shape_cast %6 : vector<1x8x32x32xf32> to vector<8x32x32xf32>
    %c1 = arith.constant 1 : index
    %c0_11 = arith.constant 0 : index
    %c0_12 = arith.constant 0 : index
    %c0_13 = arith.constant 0 : index
    %8 = vector.load %arg2[%c1, %c0_11, %c0_12, %c0_13] : memref<2x8x32x32xf32, #tpu.memory_space<vmem>>, vector<1x8x32x32xf32>
    %9 = vector.shape_cast %8 : vector<1x8x32x32xf32> to vector<8x32x32xf32>
    %c0_14 = arith.constant 0 : index
    %c0_15 = arith.constant 0 : index
    %10 = vector.load %arg1[%c0_14, %c0_15] : memref<256x16xf32, #tpu.memory_space<vmem>>, vector<256x16xf32>
    %cst = arith.constant dense<0.000000e+00> : vector<256x32xf32>
    %11 = tpu.matmul %10, %0, %cst {dimension_numbers = #tpu.dot_dimension_numbers<[1], [0], [0], [1], [0, 0, 1, 1], [], []>} : vector<256x16xf32>, vector<16x32xf32>, vector<256x32xf32> -> vector<256x32xf32>
    %12 = vector.shape_cast %11 : vector<256x32xf32> to vector<8x32x32xf32>
    "tpu.trace_start"() <{level = 10 : i32, message = "bij,bjh->bih"}> : () -> ()
    %cst_16 = arith.constant dense<0.000000e+00> : vector<8x32x32xf32>
    %13 = tpu.matmul %7, %12, %cst_16 {dimension_numbers = #tpu.dot_dimension_numbers<[2], [1], [1], [2], [0, 0, 0, 1, 1, 2], [0], [0]>} : vector<8x32x32xf32>, vector<8x32x32xf32>, vector<8x32x32xf32> -> vector<8x32x32xf32>
    "tpu.trace_stop"() : () -> ()
    %14 = vector.shape_cast %13 : vector<8x32x32xf32> to vector<256x32xf32>
    %15 = vector.broadcast %1 : vector<1x32xf32> to vector<256x32xf32>
    %16 = arith.addf %14, %15 : vector<256x32xf32>
    %cst_17 = arith.constant 0.000000e+00 : f32
    %17 = vector.broadcast %cst_17 : f32 to vector<256x32xf32>
    %18 = arith.maximumf %16, %17 : vector<256x32xf32>
    %cst_18 = arith.constant dense<0.000000e+00> : vector<256x32xf32>
    %19 = tpu.matmul %18, %2, %cst_18 {dimension_numbers = #tpu.dot_dimension_numbers<[1], [0], [0], [1], [0, 0, 1, 1], [], []>} : vector<256x32xf32>, vector<32x32xf32>, vector<256x32xf32> -> vector<256x32xf32>
    %20 = vector.shape_cast %19 : vector<256x32xf32> to vector<8x32x32xf32>
    "tpu.trace_start"() <{level = 10 : i32, message = "bij,bjh->bih"}> : () -> ()
    %cst_19 = arith.constant dense<0.000000e+00> : vector<8x32x32xf32>
    %21 = tpu.matmul %9, %20, %cst_19 {dimension_numbers = #tpu.dot_dimension_numbers<[2], [1], [1], [2], [0, 0, 0, 1, 1, 2], [0], [0]>} : vector<8x32x32xf32>, vector<8x32x32xf32>, vector<8x32x32xf32> -> vector<8x32x32xf32>
    "tpu.trace_stop"() : () -> ()
    %22 = vector.shape_cast %21 : vector<8x32x32xf32> to vector<256x32xf32>
    %23 = vector.broadcast %3 : vector<1x32xf32> to vector<256x32xf32>
    %24 = arith.addf %22, %23 : vector<256x32xf32>
    %cst_20 = arith.constant 0.000000e+00 : f32
    %25 = vector.broadcast %cst_20 : f32 to vector<256x32xf32>
    %26 = arith.maximumf %24, %25 : vector<256x32xf32>
    %cst_21 = arith.constant dense<0.000000e+00> : vector<256x32xf32>
    %27 = tpu.matmul %26, %2, %cst_21 {dimension_numbers = #tpu.dot_dimension_numbers<[1], [0], [0], [1], [0, 0, 1, 1], [], []>} : vector<256x32xf32>, vector<32x32xf32>, vector<256x32xf32> -> vector<256x32xf32>
    %28 = vector.shape_cast %27 : vector<256x32xf32> to vector<8x32x32xf32>
    "tpu.trace_start"() <{level = 10 : i32, message = "bij,bjh->bih"}> : () -> ()
    %cst_22 = arith.constant dense<0.000000e+00> : vector<8x32x32xf32>
    %29 = tpu.matmul %9, %28, %cst_22 {dimension_numbers = #tpu.dot_dimension_numbers<[2], [1], [1], [2], [0, 0, 0, 1, 1, 2], [0], [0]>} : vector<8x32x32xf32>, vector<8x32x32xf32>, vector<8x32x32xf32> -> vector<8x32x32xf32>
    "tpu.trace_stop"() : () -> ()
    %30 = vector.shape_cast %29 : vector<8x32x32xf32> to vector<256x32xf32>
    %31 = vector.broadcast %3 : vector<1x32xf32> to vector<256x32xf32>
    %32 = arith.addf %30, %31 : vector<256x32xf32>
    %cst_23 = arith.constant 0.000000e+00 : f32
    %33 = vector.broadcast %cst_23 : f32 to vector<256x32xf32>
    %34 = arith.maximumf %32, %33 : vector<256x32xf32>
    %35 = vector.shape_cast %34 : vector<256x32xf32> to vector<8x32x32xf32>
    %36 = vector.extract_strided_slice %35 {offsets = [0, 8, 0], sizes = [8, 24, 32], strides = [1, 1, 1]} : vector<8x32x32xf32> to vector<8x24x32xf32>
    %37 = vector.shape_cast %36 : vector<8x24x32xf32> to vector<192x32xf32>
    %cst_24 = arith.constant dense<0.000000e+00> : vector<192x128xf32>
    %38 = tpu.matmul %37, %4, %cst_24 {dimension_numbers = #tpu.dot_dimension_numbers<[1], [0], [0], [1], [0, 0, 1, 1], [], []>} : vector<192x32xf32>, vector<32x128xf32>, vector<192x128xf32> -> vector<192x128xf32>
    %39 = vector.broadcast %5 : vector<1x128xf32> to vector<192x128xf32>
    %40 = arith.addf %38, %39 : vector<192x128xf32>
    %cst_25 = arith.constant dense<0xFF800000> : vector<192xf32>
    %41 = vector.multi_reduction <maximumf>, %40, %cst_25 [1] : vector<192x128xf32> to vector<192xf32>
    %42 = vector.shape_cast %41 : vector<192xf32> to vector<192x1xf32>
    %43 = vector.broadcast %42 : vector<192x1xf32> to vector<192x128xf32>
    %44 = arith.subf %40, %43 : vector<192x128xf32>
    %45 = math.exp %44 : vector<192x128xf32>
    %cst_26 = arith.constant dense<0.000000e+00> : vector<192xf32>
    %46 = vector.multi_reduction <add>, %45, %cst_26 [1] : vector<192x128xf32> to vector<192xf32>
    %47 = vector.shape_cast %46 : vector<192xf32> to vector<192x1xf32>
    %48 = math.log %47 : vector<192x1xf32>
    %49 = vector.broadcast %48 : vector<192x1xf32> to vector<192x128xf32>
    %50 = arith.subf %44, %49 : vector<192x128xf32>
    %c0_27 = arith.constant 0 : index
    %c0_28 = arith.constant 0 : index
    %51 = vector.load %arg5[%c0_27, %c0_28] : memref<192x128xf32, #tpu.memory_space<vmem>>, vector<192x128xf32>
    tpu.vector_store %arg5[%c0_27, %c0_28], %50 {strides = array<i32>} : memref<192x128xf32, #tpu.memory_space<vmem>>, vector<192x128xf32>,
    return
  }
  func.func @transform_0(%arg0: i32) -> (i32, i32) {
    %c0_i32 = arith.constant 0 : i32
    %c0_i32_0 = arith.constant 0 : i32
    return %arg0, %c0_i32 : i32, i32
  }
  func.func @transform_1(%arg0: i32) -> (i32, i32, i32, i32) {
    %c0_i32 = arith.constant 0 : i32
    %c0_i32_0 = arith.constant 0 : i32
    %c0_i32_1 = arith.constant 0 : i32
    %c0_i32_2 = arith.constant 0 : i32
    return %c0_i32, %arg0, %c0_i32_0, %c0_i32_1 : i32, i32, i32, i32
  }
  func.func @transform_2(%arg0: i32) -> (i32, i32) {
    %c0_i32 = arith.constant 0 : i32
    %c0_i32_0 = arith.constant 0 : i32
    %c0_i32_1 = arith.constant 0 : i32
    return %c0_i32, %c0_i32_0 : i32, i32
  }
  func.func @transform_3(%arg0: i32) -> (i32, i32) {
    %c0_i32 = arith.constant 0 : i32
    %c0_i32_0 = arith.constant 0 : i32
    %c0_i32_1 = arith.constant 0 : i32
    return %c0_i32, %c0_i32_0 : i32, i32
  }
  func.func @transform_4(%arg0: i32) -> (i32, i32) {
    %c0_i32 = arith.constant 0 : i32
    %c0_i32_0 = arith.constant 0 : i32
    return %arg0, %c0_i32 : i32, i32
  }
}

</mosaic_0001>

<llo_original>
// kernel: tpu_custom_call.1
$region0: #{tpu_custom_call.1}
  #allocation0 [shape = 'u32[]', space=smem, size = 0x4, offset = 0x4, fixed_abs, tag = 'smem constant byte address 0x4 - core index']
  #allocation1 [shape = 'u32[144,128]{1,0:T(1,128)}', space=vmem, size = 0x12000, scoped, tag = 'internal scratch']
  #allocation6 [shape = 's32[]', space=sflag, size = 0x4, offset = 0, fixed_abs, tag = 'sflag constant byte address 0x0 - dummy sync flag']
  %s0 = inlined_call_operand.vmem [shape: f32[512,16], index: 0, kind: input, shape index: {}]
  %s1 = inlined_call_operand.hbm [shape: f32[2,16,32,32], index: 1, kind: input, shape index: {}]
  %s2 = inlined_call_operand.vmem [shape: f32[64,32], index: 2, kind: input, shape index: {}]
  %s3 = inlined_call_operand.vmem [shape: f32[40,128], index: 3, kind: input, shape index: {}]
  %s4 = inlined_call_operand.hbm [shape: f32[384,128], index: 4, kind: output, shape index: {}]
  %s5 = sld [smem:[#allocation0]]
  $region53: #{tpu_custom_call.1} parent=0
    _
  %s7 = ssub.s32 1, %s5
  %s8 = scalar_select 0, %s7, %s5
  $region1: #{tpu_custom_call.1} parent=0
    #allocation2 [shape = 'u8[524288]{0}', space=vmem, size = 0x80000, scoped, tag = 'input window, operand 1']
    #allocation3 [shape = 's32[2]{0}', space=sflag, size = 0x8, scoped, tag = 'scoped memory for tpu_custom_call.1']
    #allocation4 [shape = 's32[2]{0}', space=sflag, size = 0x8, scoped, tag = 'scoped memory for tpu_custom_call.1']
    #allocation5 [shape = 'u8[196608]{0}', space=vmem, size = 0x30000, scoped, tag = 'output window, operand 0']
    %9 = vsyncpa [#allocation3], 0
    %s10 = scalar_lea.sflag [#allocation3], 1
    %11 = vsyncpa %s10, 0
    %12 = vsyncpa [#allocation4], 0
    %s13 = scalar_lea.sflag [#allocation4], 1
    %14 = vsyncpa %s13, 0
    loop: start=0, step=1, limit=4
    $region2: #{tpu_custom_call.1} parent=1 // loop_pre_header
      _
    $region3: #{tpu_custom_call.1} parent=1 // loop_header
      %s16 = sphi 0, %s20
      %p17 = scmp.ge.s32.totalorder %s16, 4
      %s26 = sphi 0, %s28
      %s29 = sphi 0, %s26
      %s30 = sphi 0, %s29
      %s46 = sphi 0, %s30
      %s52 = sphi 0, %s54
      %s55 = sphi 0, %s52
      %s56 = sphi 0, %s55
      %s72 = sphi 0, %s56
      %s76 = sphi 0, %s76
      %s78 = sphi 0, %s76
      %s79 = sphi 0, %s78
      %s93 = sphi 0, %s79
      %s97 = sphi 0, %s97
      %s99 = sphi 0, %s97
      %s100 = sphi 0, %s99
      %s114 = sphi 0, %s100
      %s120 = sphi 0, %s122
      %s123 = sphi 0, %s120
      %s124 = sphi 0, %s123
      %s140 = sphi 0, %s124
    $region4: #{tpu_custom_call.1} parent=1 // loop_header_branch
      %19 = sbr.rel (%p17) target = $region8
    $region5: #{tpu_custom_call.1} parent=1 // loop_body
      %s21 = ssub.s32 %s16, 1
      %s22 = ssub.s32 %s16, 2
      %s23 = sadd.s32 %s16, 1
      %s24 = ssub.s32 %s16, %s23
      %p25 = scmp.eq.s32.totalorder %s24, 0
      %s27 = sadd.s32 %s26, 1
      %s28 = scalar_select %p25, %s26, %s27
      %p31 = pneg %p25
      %p32 = scmp.eq.s32.totalorder %s16, 1
      %p33 = por %p31, %p32
      %p34 = scmp.ne.s32.totalorder %s26, %s29
      %p35 = scmp.eq.s32.totalorder %s16, 0
      %p36 = por %p34, %p35
      %p37 = scmp.ne.s32.totalorder %s26, %s29
      %p38 = scmp.eq.s32.totalorder %s21, 1
      %p39 = por %p37, %p38
      %p40 = scmp.ne.s32.totalorder %s29, %s30
      %p41 = scmp.eq.s32.totalorder %s21, 0
      %p42 = por %p40, %p41
      %p43 = scmp.ne.s32.totalorder %s29, %s30
      %p44 = scmp.eq.s32.totalorder %s22, 1
      %p45 = por %p43, %p44
      %p47 = scmp.ne.s32.totalorder %s30, %s46
      %p48 = scmp.eq.s32.totalorder %s22, 0
      %p49 = por %p47, %p48
      %s50 = ssub.s32 %s16, %s23
      %p51 = scmp.eq.s32.totalorder %s50, 0
      %s53 = sadd.s32 %s52, 1
      %s54 = scalar_select %p51, %s52, %s53
      %p57 = pneg %p51
      %p58 = scmp.eq.s32.totalorder %s16, 1
      %p59 = por %p57, %p58
      %p60 = scmp.ne.s32.totalorder %s52, %s55
      %p61 = scmp.eq.s32.totalorder %s16, 0
      %p62 = por %p60, %p61
      %p63 = scmp.ne.s32.totalorder %s52, %s55
      %p64 = scmp.eq.s32.totalorder %s21, 1
      %p65 = por %p63, %p64
      %p66 = scmp.ne.s32.totalorder %s55, %s56
      %p67 = scmp.eq.s32.totalorder %s21, 0
      %p68 = por %p66, %p67
      %p69 = scmp.ne.s32.totalorder %s55, %s56
      %p70 = scmp.eq.s32.totalorder %s22, 1
      %p71 = por %p69, %p70
      %p73 = scmp.ne.s32.totalorder %s56, %s72
      %p74 = scmp.eq.s32.totalorder %s22, 0
      %p75 = por %p73, %p74
      %s77 = sadd.s32 %s76, 1
      %p80 = scmp.eq.s32.totalorder %s16, 1
      %p81 = scmp.ne.s32.totalorder %s76, %s78
      %p82 = scmp.eq.s32.totalorder %s16, 0
      %p83 = por %p81, %p82
      %p84 = scmp.ne.s32.totalorder %s76, %s78
      %p85 = scmp.eq.s32.totalorder %s21, 1
      %p86 = por %p84, %p85
      %p87 = scmp.ne.s32.totalorder %s78, %s79
      %p88 = scmp.eq.s32.totalorder %s21, 0
      %p89 = por %p87, %p88
      %p90 = scmp.ne.s32.totalorder %s78, %s79
      %p91 = scmp.eq.s32.totalorder %s22, 1
      %p92 = por %p90, %p91
      %p94 = scmp.ne.s32.totalorder %s79, %s93
      %p95 = scmp.eq.s32.totalorder %s22, 0
      %p96 = por %p94, %p95
      %s98 = sadd.s32 %s97, 1
      %p101 = scmp.eq.s32.totalorder %s16, 1
      %p102 = scmp.ne.s32.totalorder %s97, %s99
      %p103 = scmp.eq.s32.totalorder %s16, 0
      %p104 = por %p102, %p103
      %p105 = scmp.ne.s32.totalorder %s97, %s99
      %p106 = scmp.eq.s32.totalorder %s21, 1
      %p107 = por %p105, %p106
      %p108 = scmp.ne.s32.totalorder %s99, %s100
      %p109 = scmp.eq.s32.totalorder %s21, 0
      %p110 = por %p108, %p109
      %p111 = scmp.ne.s32.totalorder %s99, %s100
      %p112 = scmp.eq.s32.totalorder %s22, 1
      %p113 = por %p111, %p112
      %p115 = scmp.ne.s32.totalorder %s100, %s114
      %p116 = scmp.eq.s32.totalorder %s22, 0
      %p117 = por %p115, %p116
      %s118 = ssub.s32 %s16, %s23
      %p119 = scmp.eq.s32.totalorder %s118, 0
      %s121 = sadd.s32 %s120, 1
      %s122 = scalar_select %p119, %s120, %s121
      %p125 = pneg %p119
      %p126 = scmp.eq.s32.totalorder %s16, 1
      %p127 = por %p125, %p126
      %p128 = scmp.ne.s32.totalorder %s120, %s123
      %p129 = scmp.eq.s32.totalorder %s16, 0
      %p130 = por %p128, %p129
      %p131 = scmp.ne.s32.totalorder %s120, %s123
      %p132 = scmp.eq.s32.totalorder %s21, 1
      %p133 = por %p131, %p132
      %p134 = scmp.ne.s32.totalorder %s123, %s124
      %p135 = scmp.eq.s32.totalorder %s21, 0
      %p136 = por %p134, %p135
      %p137 = scmp.ne.s32.totalorder %s123, %s124
      %p138 = scmp.eq.s32.totalorder %s22, 1
      %p139 = por %p137, %p138
      %p141 = scmp.ne.s32.totalorder %s124, %s140
      %p142 = scmp.eq.s32.totalorder %s22, 0
      %p143 = por %p141, %p142
      %p144 = scmp.le.s32.totalorder 1, %s16
      %p145 = scmp.lt.s32.totalorder %s16, 3
      %p146 = pnand %p144, %p145
      %p147 = pneg %p146
      // Predicated region
      $region9: #{tpu_custom_call.1} parent=5 // pred_check
        _
      $region10: #{tpu_custom_call.1} parent=5 // pred_check_branch
        %149 = sbr.rel (%p146) target = $region12
      $region11: #{tpu_custom_call.1} parent=5 // pred_region
        %s150 = ssub.s32 %s16, 1
        // Predicated region
        $region13: #{tpu_custom_call.1} parent=11 // pred_check
          %p151 = pneg %p89
        $region14: #{tpu_custom_call.1} parent=11 // pred_check_branch
          %153 = sbr.rel (%p151) target = $region16
        $region15: #{tpu_custom_call.1} parent=11 // pred_region
          _
        $region16: #{tpu_custom_call.1} parent=11 // pred_fallthru
          _
        // Predicated region
        $region17: #{tpu_custom_call.1} parent=11 // pred_check
          %p154 = pneg %p110
        $region18: #{tpu_custom_call.1} parent=11 // pred_check_branch
          %156 = sbr.rel (%p154) target = $region20
        $region19: #{tpu_custom_call.1} parent=11 // pred_region
          _
        $region20: #{tpu_custom_call.1} parent=11 // pred_fallthru
          _
      $region12: #{tpu_custom_call.1} parent=5 // pred_fallthru
        _
      %p157 = scmp.lt.s32.totalorder %s16, 2
      // Predicated region
      $region21: #{tpu_custom_call.1} parent=5 // pred_check
        %p158 = pneg %p157
      $region22: #{tpu_custom_call.1} parent=5 // pred_check_branch
        %160 = sbr.rel (%p158) target = $region24
      $region23: #{tpu_custom_call.1} parent=5 // pred_region
        // Predicated region
        $region25: #{tpu_custom_call.1} parent=23 // pred_check
          %p161 = pneg %p36
        $region26: #{tpu_custom_call.1} parent=23 // pred_check_branch
          %163 = sbr.rel (%p161) target = $region28
        $region27: #{tpu_custom_call.1} parent=23 // pred_region
          %s164 = smul.u32 32, %s16
          %p165 = scmp.lt.s32.totalorder %s164, 63
          %s166 = scalar_select %p165, %s164, 63
          %s167 = smul.addr %s166, 8
          %s168 = scalar_lea.vmem %s0, %s167
          %s169 = smul.u32 32, %s16
        $region28: #{tpu_custom_call.1} parent=23 // pred_fallthru
          _
        // Predicated region
        $region29: #{tpu_custom_call.1} parent=23 // pred_check
          %p170 = pneg %p62
        $region30: #{tpu_custom_call.1} parent=23 // pred_check_branch
          %172 = sbr.rel (%p170) target = $region32
        $region31: #{tpu_custom_call.1} parent=23 // pred_region
          #allocation7 [shape = 'u32[6]{0}', space=smem, size = 0x18, scoped, tag = 'DMA stride descriptor']
          %s173 = sand.u32 %s52, 1
          %s174 = scalar_lea.sflag [#allocation3], %s173
          %s175 = sand.u32 %s52, 1
          %s176 = smul.addr %s175, 512
          %s177 = scalar_lea.vmem [#allocation2], %s176
          %s178 = smul.u32 8, %s16
          %s180 = ssub.s32 8192, 8192
          %181 = vsyncadd %s174, %s180
          %s182 = smul.addr %s178, 4
          %s183 = smul.addr %s182, 128
          %s184 = scalar_lea.hbm %s1, %s183
          %s186 = sshll.u32 1, 14
          %s187 = sxor.u32 4294967295, %s186
          %s189 = sld [smem:[#allocation0]]
          %s190 = sadd.s32 2, %s189
          %s192 = sshll.u32 7, 26
          %s193 = sxor.u32 4294967295, %s192
          %s194 = sand.u32 0, %s193
          %s195 = sshll.u32 %s190, 26
          %s196 = sor.u32 %s194, %s195
          %s197 = sshll.u32 %s177, 4
          %s198 = int_to_ptr.vmem [resolvable:$true] %s197
          %204 = sst [smem:[#allocation7]] 8192
          %s205 = scalar_lea.smem [#allocation7], 1
          %206 = sst [smem:[%s205]] 4096
          %s207 = scalar_lea.smem [#allocation7], 2
          %208 = sst [smem:[%s207]] 32
          %s209 = scalar_lea.smem [#allocation7], 3
          %210 = sst [smem:[%s209]] 128
          %s211 = scalar_lea.smem [#allocation7], 4
          %212 = sst [smem:[%s211]] 128
          %s213 = scalar_lea.smem [#allocation7], 5
          %214 = sst [smem:[%s213]] 8
          %216 = dma.general %s184, 8192, %s198, %s174, [#allocation6], [#allocation7], %s196, 0
        $region32: #{tpu_custom_call.1} parent=23 // pred_fallthru
          _
      $region24: #{tpu_custom_call.1} parent=5 // pred_fallthru
        _
      %p217 = scmp.le.s32.totalorder 1, %s16
      %p218 = scmp.lt.s32.totalorder %s16, 3
      %p219 = pnand %p217, %p218
      %p220 = pneg %p219
      // Predicated region
      $region33: #{tpu_custom_call.1} parent=5 // pred_check
        _
      $region34: #{tpu_custom_call.1} parent=5 // pred_check_branch
        %222 = sbr.rel (%p219) target = $region36
      $region35: #{tpu_custom_call.1} parent=5 // pred_region
        %s223 = ssub.s32 %s16, 1
        %s224 = sand.u32 %s55, 1
        %s225 = scalar_lea.sflag [#allocation3], %s224
        %s226 = sand.u32 %s55, 1
        %s227 = smul.addr %s226, 512
        %s228 = scalar_lea.vmem [#allocation2], %s227
        // Predicated region
        $region37: #{tpu_custom_call.1} parent=35 // pred_check
          %p229 = pneg %p68
        $region38: #{tpu_custom_call.1} parent=35 // pred_check_branch
          %231 = sbr.rel (%p229) target = $region40
        $region39: #{tpu_custom_call.1} parent=35 // pred_region
          %232 = dma.done %s225, 8192
        $region40: #{tpu_custom_call.1} parent=35 // pred_fallthru
          _
        %s233 = smul.u32 32, %s21
        %p234 = scmp.lt.s32.totalorder %s233, 63
        %s235 = scalar_select %p234, %s233, 63
        %s236 = smul.addr %s235, 8
        %s237 = scalar_lea.vmem %s0, %s236
        %p238 = pneg %p42
        %p239 = pneg %p39
        %s240 = sand.u32 %s55, 1
        %s241 = scalar_lea.sflag [#allocation3], %s240
        %s242 = sand.u32 %s55, 1
        %s243 = smul.addr %s242, 512
        %s244 = scalar_lea.vmem [#allocation2], %s243
        %p245 = pneg %p68
        %p246 = pneg %p65
        %p247 = pneg %p89
        %p248 = pneg %p86
        %p249 = pneg %p110
        %p250 = pneg %p107
        %p251 = pneg %p136
        %p252 = pneg %p133
        %s253 = sand.u32 %s123, 1
        %s254 = scalar_lea.sflag [#allocation4], %s253
        %s255 = sand.u32 %s123, 1
        %s256 = smul.addr %s255, 192
        %s257 = scalar_lea.vmem [#allocation5], %s256
        %s258 = smul.u32 32, %s21
        %p259 = scmp.lt.s32.totalorder %s258, 63
        %s260 = scalar_select %p259, %s258, 63
        %s261 = smul.addr %s260, 8
        %s262 = scalar_lea.vmem %s0, %s261
        %s263 = smul.u32 32, %s21
        %s264 = smul.u32 8, %s21
        %s265 = smul.u32 24, %s21
        %v266 = vld [vmem:[%s2] sm:$0xff]
        %v267 = vld [vmem:[%s2 + $0x8] sm:$0xff]
        %v268 = vld [vmem:[%s2 + $0x10] sm:$0x1]
        %v269 = vld [vmem:[%s2 + $0x18] sm:$0xff]
        %v270 = vld [vmem:[%s2 + $0x20] sm:$0xff]
        %v271 = vld [vmem:[%s2 + $0x28] sm:$0xff]
        %v272 = vld [vmem:[%s2 + $0x30] sm:$0xff]
        %v273 = vld [vmem:[%s2 + $0x38] sm:$0x1]
        %v274 = vld [vmem:[%s3] sm:$0xff]
        %v275 = vld [vmem:[%s3 + $0x8] sm:$0xff]
        %v276 = vld [vmem:[%s3 + $0x10] sm:$0xff]
        %v277 = vld [vmem:[%s3 + $0x18] sm:$0xff]
        %v278 = vld [vmem:[%s3 + $0x20] sm:$0x1]
        %v279 = vld [vmem:[%s228] sm:$0xff]
        %v280 = vld [vmem:[%s228 + $0x8] sm:$0xff]
        %v281 = vld [vmem:[%s228 + $0x10] sm:$0xff]
        %v282 = vld [vmem:[%s228 + $0x18] sm:$0xff]
        %v283 = vld [vmem:[%s228 + $0x20] sm:$0xff]
        %v284 = vld [vmem:[%s228 + $0x28] sm:$0xff]
        %v285 = vld [vmem:[%s228 + $0x30] sm:$0xff]
        %v286 = vld [vmem:[%s228 + $0x38] sm:$0xff]
        %v287 = vld [vmem:[%s228 + $0x40] sm:$0xff]
        %v288 = vld [vmem:[%s228 + $0x48] sm:$0xff]
        %v289 = vld [vmem:[%s228 + $0x50] sm:$0xff]
        %v290 = vld [vmem:[%s228 + $0x58] sm:$0xff]
        %v291 = vld [vmem:[%s228 + $0x60] sm:$0xff]
        %v292 = vld [vmem:[%s228 + $0x68] sm:$0xff]
        %v293 = vld [vmem:[%s228 + $0x70] sm:$0xff]
        %v294 = vld [vmem:[%s228 + $0x78] sm:$0xff]
        %v295 = vld [vmem:[%s228 + $0x80] sm:$0xff]
        %v296 = vld [vmem:[%s228 + $0x88] sm:$0xff]
        %v297 = vld [vmem:[%s228 + $0x90] sm:$0xff]
        %v298 = vld [vmem:[%s228 + $0x98] sm:$0xff]
        %v299 = vld [vmem:[%s228 + $0xa0] sm:$0xff]
        %v300 = vld [vmem:[%s228 + $0xa8] sm:$0xff]
        %v301 = vld [vmem:[%s228 + $0xb0] sm:$0xff]
        %v302 = vld [vmem:[%s228 + $0xb8] sm:$0xff]
        %v303 = vld [vmem:[%s228 + $0xc0] sm:$0xff]
        %v304 = vld [vmem:[%s228 + $0xc8] sm:$0xff]
        %v305 = vld [vmem:[%s228 + $0xd0] sm:$0xff]
        %v306 = vld [vmem:[%s228 + $0xd8] sm:$0xff]
        %v307 = vld [vmem:[%s228 + $0xe0] sm:$0xff]
        %v308 = vld [vmem:[%s228 + $0xe8] sm:$0xff]
        %v309 = vld [vmem:[%s228 + $0xf0] sm:$0xff]
        %v310 = vld [vmem:[%s228 + $0xf8] sm:$0xff]
        %s311 = scalar_lea.vmem %s228, 256 [#allocation2]
        %v312 = vld [vmem:[%s311] sm:$0xff]
        %v313 = vld [vmem:[%s311 + $0x8] sm:$0xff]
        %v314 = vld [vmem:[%s311 + $0x10] sm:$0xff]
        %v315 = vld [vmem:[%s311 + $0x18] sm:$0xff]
        %v316 = vld [vmem:[%s311 + $0x20] sm:$0xff]
        %v317 = vld [vmem:[%s311 + $0x28] sm:$0xff]
        %v318 = vld [vmem:[%s311 + $0x30] sm:$0xff]
        %v319 = vld [vmem:[%s311 + $0x38] sm:$0xff]
        %v320 = vld [vmem:[%s311 + $0x40] sm:$0xff]
        %v321 = vld [vmem:[%s311 + $0x48] sm:$0xff]
        %v322 = vld [vmem:[%s311 + $0x50] sm:$0xff]
        %v323 = vld [vmem:[%s311 + $0x58] sm:$0xff]
        %v324 = vld [vmem:[%s311 + $0x60] sm:$0xff]
        %v325 = vld [vmem:[%s311 + $0x68] sm:$0xff]
        %v326 = vld [vmem:[%s311 + $0x70] sm:$0xff]
        %v327 = vld [vmem:[%s311 + $0x78] sm:$0xff]
        %v328 = vld [vmem:[%s311 + $0x80] sm:$0xff]
        %v329 = vld [vmem:[%s311 + $0x88] sm:$0xff]
        %v330 = vld [vmem:[%s311 + $0x90] sm:$0xff]
        %v331 = vld [vmem:[%s311 + $0x98] sm:$0xff]
        %v332 = vld [vmem:[%s311 + $0xa0] sm:$0xff]
        %v333 = vld [vmem:[%s311 + $0xa8] sm:$0xff]
        %v334 = vld [vmem:[%s311 + $0xb0] sm:$0xff]
        %v335 = vld [vmem:[%s311 + $0xb8] sm:$0xff]
        %v336 = vld [vmem:[%s311 + $0xc0] sm:$0xff]
        %v337 = vld [vmem:[%s311 + $0xc8] sm:$0xff]
        %v338 = vld [vmem:[%s311 + $0xd0] sm:$0xff]
        %v339 = vld [vmem:[%s311 + $0xd8] sm:$0xff]
        %v340 = vld [vmem:[%s311 + $0xe0] sm:$0xff]
        %v341 = vld [vmem:[%s311 + $0xe8] sm:$0xff]
        %v342 = vld [vmem:[%s311 + $0xf0] sm:$0xff]
        %v343 = vld [vmem:[%s311 + $0xf8] sm:$0xff]
        %v344 = vld [vmem:[%s262] sm:$0xff]
        %v345 = vld [vmem:[%s262 + $0x8] sm:$0xff]
        %v346 = vld [vmem:[%s262 + $0x10] sm:$0xff]
        %v347 = vld [vmem:[%s262 + $0x18] sm:$0xff]
        %v348 = vld [vmem:[%s262 + $0x20] sm:$0xff]
        %v349 = vld [vmem:[%s262 + $0x28] sm:$0xff]
        %v350 = vld [vmem:[%s262 + $0x30] sm:$0xff]
        %v351 = vld [vmem:[%s262 + $0x38] sm:$0xff]
        %v352 = vld [vmem:[%s262 + $0x40] sm:$0xff]
        %v353 = vld [vmem:[%s262 + $0x48] sm:$0xff]
        %v354 = vld [vmem:[%s262 + $0x50] sm:$0xff]
        %v355 = vld [vmem:[%s262 + $0x58] sm:$0xff]
        %v356 = vld [vmem:[%s262 + $0x60] sm:$0xff]
        %v357 = vld [vmem:[%s262 + $0x68] sm:$0xff]
        %v358 = vld [vmem:[%s262 + $0x70] sm:$0xff]
        %v359 = vld [vmem:[%s262 + $0x78] sm:$0xff]
        %v360 = vld [vmem:[%s262 + $0x80] sm:$0xff]
        %v361 = vld [vmem:[%s262 + $0x88] sm:$0xff]
        %v362 = vld [vmem:[%s262 + $0x90] sm:$0xff]
        %v363 = vld [vmem:[%s262 + $0x98] sm:$0xff]
        %v364 = vld [vmem:[%s262 + $0xa0] sm:$0xff]
        %v365 = vld [vmem:[%s262 + $0xa8] sm:$0xff]
        %v366 = vld [vmem:[%s262 + $0xb0] sm:$0xff]
        %v367 = vld [vmem:[%s262 + $0xb8] sm:$0xff]
        %v368 = vld [vmem:[%s262 + $0xc0] sm:$0xff]
        %v369 = vld [vmem:[%s262 + $0xc8] sm:$0xff]
        %v370 = vld [vmem:[%s262 + $0xd0] sm:$0xff]
        %v371 = vld [vmem:[%s262 + $0xd8] sm:$0xff]
        %v372 = vld [vmem:[%s262 + $0xe0] sm:$0xff]
        %v373 = vld [vmem:[%s262 + $0xe8] sm:$0xff]
        %v374 = vld [vmem:[%s262 + $0xf0] sm:$0xff]
        %v375 = vld [vmem:[%s262 + $0xf8] sm:$0xff]
        %vm376 = vcmask 130048
        %v378 = vsel %vm376, %v344, 0
        %v381 = vsel %vm376, %v345, 0
        %v384 = vsel %vm376, %v346, 0
        %v387 = vsel %vm376, %v347, 0
        %v390 = vsel %vm376, %v348, 0
        %v393 = vsel %vm376, %v349, 0
        %v396 = vsel %vm376, %v350, 0
        %v399 = vsel %vm376, %v351, 0
        %v402 = vsel %vm376, %v352, 0
        %v405 = vsel %vm376, %v353, 0
        %v408 = vsel %vm376, %v354, 0
        %v411 = vsel %vm376, %v355, 0
        %v414 = vsel %vm376, %v356, 0
        %v417 = vsel %vm376, %v357, 0
        %v420 = vsel %vm376, %v358, 0
        %v423 = vsel %vm376, %v359, 0
        %v426 = vsel %vm376, %v360, 0
        %v429 = vsel %vm376, %v361, 0
        %v432 = vsel %vm376, %v362, 0
        %v435 = vsel %vm376, %v363, 0
        %v438 = vsel %vm376, %v364, 0
        %v441 = vsel %vm376, %v365, 0
        %v444 = vsel %vm376, %v366, 0
        %v447 = vsel %vm376, %v367, 0
        %v450 = vsel %vm376, %v368, 0
        %v453 = vsel %vm376, %v369, 0
        %v456 = vsel %vm376, %v370, 0
        %v459 = vsel %vm376, %v371, 0
        %v462 = vsel %vm376, %v372, 0
        %v465 = vsel %vm376, %v373, 0
        %v468 = vsel %vm376, %v374, 0
        %v471 = vsel %vm376, %v375, 0
        %473 = vmatprep.subr.mxu0 0.0
        %474 = vmatpush1.msra.mxu0 %v266
        %475 = vmatprep.subr.mxu0 0.0
        %476 = vmatpush1.msra.mxu0 %v267
        %477 = vmatprep.subr.mxu0 0.0
        %478 = vmatpush1.msra.mxu0 0.0
        %479 = vmatprep.subr.mxu0 0.0
        %480 = vmatpush1.msra.mxu0 0.0
        %481 = vmatprep.subr.mxu0 0.0
        %482 = vmatpush1.msra.mxu0 0.0
        %483 = vmatprep.subr.mxu0 0.0
        %484 = vmatpush1.msra.mxu0 0.0
        %485 = vmatprep.subr.mxu0 0.0
        %486 = vmatpush1.msra.mxu0 0.0
        %487 = vmatprep.subr.mxu0 0.0
        %488 = vmatpush1.msra.mxu0 0.0
        %489 = vmatprep.subr.mxu0 0.0
        %490 = vmatpush1.msra.mxu0 0.0
        %491 = vmatprep.subr.mxu0 0.0
        %492 = vmatpush1.msra.mxu0 0.0
        %493 = vmatprep.subr.mxu0 0.0
        %494 = vmatpush1.msra.mxu0 0.0
        %495 = vmatprep.subr.mxu0 0.0
        %496 = vmatpush1.msra.mxu0 0.0
        %497 = vmatprep.subr.mxu0 0.0
        %498 = vmatpush1.msra.mxu0 0.0
        %499 = vmatprep.subr.mxu0 0.0
        %500 = vmatpush1.msra.mxu0 0.0
        %501 = vmatprep.subr.mxu0 0.0
        %502 = vmatpush1.msra.mxu0 0.0
        %503 = vmatprep.subr.mxu0 0.0
        %504 = vmatpush1.msra.mxu0 0.0
        %505 = vmatprep.subr.mxu0 0.0
        %506 = vmatpush1.msra.mxu0 0.0
        %507 = vmatprep.subr.mxu0 0.0
        %508 = vmatpush1.msra.mxu0 0.0
        %509 = vmatprep.subr.mxu0 0.0
        %510 = vmatpush1.msra.mxu0 0.0
        %511 = vmatprep.subr.mxu0 0.0
        %512 = vmatpush1.msra.mxu0 0.0
        %513 = vmatprep.subr.mxu0 0.0
        %514 = vmatpush1.msra.mxu0 0.0
        %515 = vmatprep.subr.mxu0 0.0
        %516 = vmatpush1.msra.mxu0 0.0
        %517 = vmatprep.subr.mxu0 0.0
        %518 = vmatpush1.msra.mxu0 0.0
        %519 = vmatprep.subr.mxu0 0.0
        %520 = vmatpush1.msra.mxu0 0.0
        %521 = vmatprep.subr.mxu0 0.0
        %522 = vmatpush1.msra.mxu0 0.0
        %523 = vmatprep.subr.mxu0 0.0
        %524 = vmatpush1.msra.mxu0 0.0
        %525 = vmatprep.subr.mxu0 0.0
        %526 = vmatpush1.msra.mxu0 0.0
        %527 = vmatprep.subr.mxu0 0.0
        %528 = vmatpush1.msra.mxu0 0.0
        %529 = vmatprep.subr.mxu0 0.0
        %530 = vmatpush1.msra.mxu0 0.0
        %531 = vmatprep.subr.mxu0 0.0
        %532 = vmatpush1.msra.mxu0 0.0
        %533 = vmatprep.subr.mxu0 0.0
        %534 = vmatpush1.msra.mxu0 0.0
        %535 = vmatprep.subr.mxu0 0.0
        %536 = vmatpush1.msra.mxu0 0.0
        %537 = vmatprep.mubr.f32.mxu0 0.0
        %538 = vmatmul.mubr.f32.gmra.mrb[0].mxu0 %v378
        %v539 = vpop.f32.mrb[0].mxu0
        %v540 = vadd.f32 0.0, %v539
        %v541 = vpop.f32.mrb[0].mxu0
        %542 = vmatprep.mubr.f32.mxu0 0.0
        %543 = vmatmul.mubr.f32.gmra.mrb[0].mxu0 %v381
        %v544 = vpop.f32.mrb[0].mxu0
        %v545 = vadd.f32 0.0, %v544
        %v546 = vpop.f32.mrb[0].mxu0
        %547 = vmatprep.mubr.f32.mxu0 0.0
        %548 = vmatmul.mubr.f32.gmra.mrb[0].mxu0 %v384
        %v549 = vpop.f32.mrb[0].mxu0
        %v550 = vadd.f32 0.0, %v549
        %v551 = vpop.f32.mrb[0].mxu0
        %552 = vmatprep.mubr.f32.mxu0 0.0
        %553 = vmatmul.mubr.f32.gmra.mrb[0].mxu0 %v387
        %v554 = vpop.f32.mrb[0].mxu0
        %v555 = vadd.f32 0.0, %v554
        %v556 = vpop.f32.mrb[0].mxu0
        %557 = vmatprep.mubr.f32.mxu0 0.0
        %558 = vmatmul.mubr.f32.gmra.mrb[0].mxu0 %v390
        %v559 = vpop.f32.mrb[0].mxu0
        %v560 = vadd.f32 0.0, %v559
        %v561 = vpop.f32.mrb[0].mxu0
        %562 = vmatprep.mubr.f32.mxu0 0.0
        %563 = vmatmul.mubr.f32.gmra.mrb[0].mxu0 %v393
        %v564 = vpop.f32.mrb[0].mxu0
        %v565 = vadd.f32 0.0, %v564
        %v566 = vpop.f32.mrb[0].mxu0
        %567 = vmatprep.mubr.f32.mxu0 0.0
        %568 = vmatmul.mubr.f32.gmra.mrb[0].mxu0 %v396
        %v569 = vpop.f32.mrb[0].mxu0
        %v570 = vadd.f32 0.0, %v569
        %v571 = vpop.f32.mrb[0].mxu0
        %572 = vmatprep.mubr.f32.mxu0 0.0
        %573 = vmatmul.mubr.f32.gmra.mrb[0].mxu0 %v399
        %v574 = vpop.f32.mrb[0].mxu0
        %v575 = vadd.f32 0.0, %v574
        %v576 = vpop.f32.mrb[0].mxu0
        %577 = vmatprep.mubr.f32.mxu0 0.0
        %578 = vmatmul.mubr.f32.gmra.mrb[0].mxu0 %v402
        %v579 = vpop.f32.mrb[0].mxu0
        %v580 = vadd.f32 0.0, %v579
        %v581 = vpop.f32.mrb[0].mxu0
        %582 = vmatprep.mubr.f32.mxu0 0.0
        %583 = vmatmul.mubr.f32.gmra.mrb[0].mxu0 %v405
        %v584 = vpop.f32.mrb[0].mxu0
        %v585 = vadd.f32 0.0, %v584
        %v586 = vpop.f32.mrb[0].mxu0
        %587 = vmatprep.mubr.f32.mxu0 0.0
        %588 = vmatmul.mubr.f32.gmra.mrb[0].mxu0 %v408
        %v589 = vpop.f32.mrb[0].mxu0
        %v590 = vadd.f32 0.0, %v589
        %v591 = vpop.f32.mrb[0].mxu0
        %592 = vmatprep.mubr.f32.mxu0 0.0
        %593 = vmatmul.mubr.f32.gmra.mrb[0].mxu0 %v411
        %v594 = vpop.f32.mrb[0].mxu0
        %v595 = vadd.f32 0.0, %v594
        %v596 = vpop.f32.mrb[0].mxu0
        %597 = vmatprep.mubr.f32.mxu0 0.0
        %598 = vmatmul.mubr.f32.gmra.mrb[0].mxu0 %v414
        %v599 = vpop.f32.mrb[0].mxu0
        %v600 = vadd.f32 0.0, %v599
        %v601 = vpop.f32.mrb[0].mxu0
        %602 = vmatprep.mubr.f32.mxu0 0.0
        %603 = vmatmul.mubr.f32.gmra.mrb[0].mxu0 %v417
        %v604 = vpop.f32.mrb[0].mxu0
        %v605 = vadd.f32 0.0, %v604
        %v606 = vpop.f32.mrb[0].mxu0
        %607 = vmatprep.mubr.f32.mxu0 0.0
        %608 = vmatmul.mubr.f32.gmra.mrb[0].mxu0 %v420
        %v609 = vpop.f32.mrb[0].mxu0
        %v610 = vadd.f32 0.0, %v609
        %v611 = vpop.f32.mrb[0].mxu0
        %612 = vmatprep.mubr.f32.mxu0 0.0
        %613 = vmatmul.mubr.f32.gmra.mrb[0].mxu0 %v423
        %v614 = vpop.f32.mrb[0].mxu0
        %v615 = vadd.f32 0.0, %v614
        %v616 = vpop.f32.mrb[0].mxu0
        %617 = vmatprep.mubr.f32.mxu0 0.0
        %618 = vmatmul.mubr.f32.gmra.mrb[0].mxu0 %v426
        %v619 = vpop.f32.mrb[0].mxu0
        %v620 = vadd.f32 0.0, %v619
        %v621 = vpop.f32.mrb[0].mxu0
        %622 = vmatprep.mubr.f32.mxu0 0.0
        %623 = vmatmul.mubr.f32.gmra.mrb[0].mxu0 %v429
        %v624 = vpop.f32.mrb[0].mxu0
        %v625 = vadd.f32 0.0, %v624
        %v626 = vpop.f32.mrb[0].mxu0
        %627 = vmatprep.mubr.f32.mxu0 0.0
        %628 = vmatmul.mubr.f32.gmra.mrb[0].mxu0 %v432
        %v629 = vpop.f32.mrb[0].mxu0
        %v630 = vadd.f32 0.0, %v629
        %v631 = vpop.f32.mrb[0].mxu0
        %632 = vmatprep.mubr.f32.mxu0 0.0
        %633 = vmatmul.mubr.f32.gmra.mrb[0].mxu0 %v435
        %v634 = vpop.f32.mrb[0].mxu0
        %v635 = vadd.f32 0.0, %v634
        %v636 = vpop.f32.mrb[0].mxu0
        %637 = vmatprep.mubr.f32.mxu0 0.0
        %638 = vmatmul.mubr.f32.gmra.mrb[0].mxu0 %v438
        %v639 = vpop.f32.mrb[0].mxu0
        %v640 = vadd.f32 0.0, %v639
        %v641 = vpop.f32.mrb[0].mxu0
        %642 = vmatprep.mubr.f32.mxu0 0.0
        %643 = vmatmul.mubr.f32.gmra.mrb[0].mxu0 %v441
        %v644 = vpop.f32.mrb[0].mxu0
        %v645 = vadd.f32 0.0, %v644
        %v646 = vpop.f32.mrb[0].mxu0
        %647 = vmatprep.mubr.f32.mxu0 0.0
        %648 = vmatmul.mubr.f32.gmra.mrb[0].mxu0 %v444
        %v649 = vpop.f32.mrb[0].mxu0
        %v650 = vadd.f32 0.0, %v649
        %v651 = vpop.f32.mrb[0].mxu0
        %652 = vmatprep.mubr.f32.mxu0 0.0
        %653 = vmatmul.mubr.f32.gmra.mrb[0].mxu0 %v447
        %v654 = vpop.f32.mrb[0].mxu0
        %v655 = vadd.f32 0.0, %v654
        %v656 = vpop.f32.mrb[0].mxu0
        %657 = vmatprep.mubr.f32.mxu0 0.0
        %658 = vmatmul.mubr.f32.gmra.mrb[0].mxu0 %v450
        %v659 = vpop.f32.mrb[0].mxu0
        %v660 = vadd.f32 0.0, %v659
        %v661 = vpop.f32.mrb[0].mxu0
        %662 = vmatprep.mubr.f32.mxu0 0.0
        %663 = vmatmul.mubr.f32.gmra.mrb[0].mxu0 %v453
        %v664 = vpop.f32.mrb[0].mxu0
        %v665 = vadd.f32 0.0, %v664
        %v666 = vpop.f32.mrb[0].mxu0
        %667 = vmatprep.mubr.f32.mxu0 0.0
        %668 = vmatmul.mubr.f32.gmra.mrb[0].mxu0 %v456
        %v669 = vpop.f32.mrb[0].mxu0
        %v670 = vadd.f32 0.0, %v669
        %v671 = vpop.f32.mrb[0].mxu0
        %672 = vmatprep.mubr.f32.mxu0 0.0
        %673 = vmatmul.mubr.f32.gmra.mrb[0].mxu0 %v459
        %v674 = vpop.f32.mrb[0].mxu0
        %v675 = vadd.f32 0.0, %v674
        %v676 = vpop.f32.mrb[0].mxu0
        %677 = vmatprep.mubr.f32.mxu0 0.0
        %678 = vmatmul.mubr.f32.gmra.mrb[0].mxu0 %v462
        %v679 = vpop.f32.mrb[0].mxu0
        %v680 = vadd.f32 0.0, %v679
        %v681 = vpop.f32.mrb[0].mxu0
        %682 = vmatprep.mubr.f32.mxu0 0.0
        %683 = vmatmul.mubr.f32.gmra.mrb[0].mxu0 %v465
        %v684 = vpop.f32.mrb[0].mxu0
        %v685 = vadd.f32 0.0, %v684
        %v686 = vpop.f32.mrb[0].mxu0
        %687 = vmatprep.mubr.f32.mxu0 0.0
        %688 = vmatmul.mubr.f32.gmra.mrb[0].mxu0 %v468
        %v689 = vpop.f32.mrb[0].mxu0
        %v690 = vadd.f32 0.0, %v689
        %v691 = vpop.f32.mrb[0].mxu0
        %692 = vmatprep.mubr.f32.mxu0 0.0
        %693 = vmatmul.mubr.f32.gmra.mrb[0].mxu0 %v471
        %v694 = vpop.f32.mrb[0].mxu0
        %v695 = vadd.f32 0.0, %v694
        %v696 = vpop.f32.mrb[0].mxu0
        %697 = vdwg.mxu0
        %vm698 = vcmask 261120
        %v700 = vsel %vm698, %v279, 0
        %v703 = vsel %vm698, %v280, 0
        %v706 = vsel %vm698, %v281, 0
        %v709 = vsel %vm698, %v282, 0
        %711 = vmatprep.subr.mxu0 0.0
        %712 = vmatpush1.msra.mxu0 %v540
        %713 = vmatprep.subr.mxu0 0.0
        %714 = vmatpush1.msra.mxu0 %v545
        %715 = vmatprep.subr.mxu0 0.0
        %716 = vmatpush1.msra.mxu0 %v550
        %717 = vmatprep.subr.mxu0 0.0
        %718 = vmatpush1.msra.mxu0 %v555
        %719 = vmatprep.subr.mxu0 0.0
        %720 = vmatpush1.msra.mxu0 0.0
        %721 = vmatprep.subr.mxu0 0.0
        %722 = vmatpush1.msra.mxu0 0.0
        %723 = vmatprep.subr.mxu0 0.0
        %724 = vmatpush1.msra.mxu0 0.0
        %725 = vmatprep.subr.mxu0 0.0
        %726 = vmatpush1.msra.mxu0 0.0
        %727 = vmatprep.subr.mxu0 0.0
        %728 = vmatpush1.msra.mxu0 0.0
        %729 = vmatprep.subr.mxu0 0.0
        %730 = vmatpush1.msra.mxu0 0.0
        %731 = vmatprep.subr.mxu0 0.0
        %732 = vmatpush1.msra.mxu0 0.0
        %733 = vmatprep.subr.mxu0 0.0
        %734 = vmatpush1.msra.mxu0 0.0
        %735 = vmatprep.subr.mxu0 0.0
        %736 = vmatpush1.msra.mxu0 0.0
        %737 = vmatprep.subr.mxu0 0.0
        %738 = vmatpush1.msra.mxu0 0.0
        %739 = vmatprep.subr.mxu0 0.0
        %740 = vmatpush1.msra.mxu0 0.0
        %741 = vmatprep.subr.mxu0 0.0
        %742 = vmatpush1.msra.mxu0 0.0
        %743 = vmatprep.subr.mxu0 0.0
        %744 = vmatpush1.msra.mxu0 0.0
        %745 = vmatprep.subr.mxu0 0.0
        %746 = vmatpush1.msra.mxu0 0.0
        %747 = vmatprep.subr.mxu0 0.0
        %748 = vmatpush1.msra.mxu0 0.0
        %749 = vmatprep.subr.mxu0 0.0
        %750 = vmatpush1.msra.mxu0 0.0
        %751 = vmatprep.subr.mxu0 0.0
        %752 = vmatpush1.msra.mxu0 0.0
        %753 = vmatprep.subr.mxu0 0.0
        %754 = vmatpush1.msra.mxu0 0.0
        %755 = vmatprep.subr.mxu0 0.0
        %756 = vmatpush1.msra.mxu0 0.0
        %757 = vmatprep.subr.mxu0 0.0
        %758 = vmatpush1.msra.mxu0 0.0
        %759 = vmatprep.subr.mxu0 0.0
        %760 = vmatpush1.msra.mxu0 0.0
        %761 = vmatprep.subr.mxu0 0.0
        %762 = vmatpush1.msra.mxu0 0.0
        %763 = vmatprep.subr.mxu0 0.0
        %764 = vmatpush1.msra.mxu0 0.0
        %765 = vmatprep.subr.mxu0 0.0
        %766 = vmatpush1.msra.mxu0 0.0
        %767 = vmatprep.subr.mxu0 0.0
        %768 = vmatpush1.msra.mxu0 0.0
        %769 = vmatprep.subr.mxu0 0.0
        %770 = vmatpush1.msra.mxu0 0.0
        %771 = vmatprep.subr.mxu0 0.0
        %772 = vmatpush1.msra.mxu0 0.0
        %773 = vmatprep.subr.mxu0 0.0
        %774 = vmatpush1.msra.mxu0 0.0
        %775 = vmatprep.mubr.f32.mxu0 0.0
        %776 = vmatmul.mubr.f32.gmra.mrb[0].mxu0 %v700
        %v777 = vpop.f32.mrb[0].mxu0
        %v778 = vadd.f32 0.0, %v777
        %v779 = vpop.f32.mrb[0].mxu0
        %780 = vmatprep.mubr.f32.mxu0 0.0
        %781 = vmatmul.mubr.f32.gmra.mrb[0].mxu0 %v703
        %v782 = vpop.f32.mrb[0].mxu0
        %v783 = vadd.f32 0.0, %v782
        %v784 = vpop.f32.mrb[0].mxu0
        %785 = vmatprep.mubr.f32.mxu0 0.0
        %786 = vmatmul.mubr.f32.gmra.mrb[0].mxu0 %v706
        %v787 = vpop.f32.mrb[0].mxu0
        %v788 = vadd.f32 0.0, %v787
        %v789 = vpop.f32.mrb[0].mxu0
        %790 = vmatprep.mubr.f32.mxu0 0.0
        %791 = vmatmul.mubr.f32.gmra.mrb[0].mxu0 %v709
        %v792 = vpop.f32.mrb[0].mxu0
        %v793 = vadd.f32 0.0, %v792
        %v794 = vpop.f32.mrb[0].mxu0
        %795 = vdwg.mxu0
        %v797 = vsel %vm698, %v283, 0
        %v800 = vsel %vm698, %v284, 0
        %v803 = vsel %vm698, %v285, 0
        %v806 = vsel %vm698, %v286, 0
        %808 = vmatprep.subr.mxu0 0.0
        %809 = vmatpush1.msra.mxu0 %v560
        %810 = vmatprep.subr.mxu0 0.0
        %811 = vmatpush1.msra.mxu0 %v565
        %812 = vmatprep.subr.mxu0 0.0
        %813 = vmatpush1.msra.mxu0 %v570
        %814 = vmatprep.subr.mxu0 0.0
        %815 = vmatpush1.msra.mxu0 %v575
        %816 = vmatprep.subr.mxu0 0.0
        %817 = vmatpush1.msra.mxu0 0.0
        %818 = vmatprep.subr.mxu0 0.0
        %819 = vmatpush1.msra.mxu0 0.0
        %820 = vmatprep.subr.mxu0 0.0
        %821 = vmatpush1.msra.mxu0 0.0
        %822 = vmatprep.subr.mxu0 0.0
        %823 = vmatpush1.msra.mxu0 0.0
        %824 = vmatprep.subr.mxu0 0.0
        %825 = vmatpush1.msra.mxu0 0.0
        %826 = vmatprep.subr.mxu0 0.0
        %827 = vmatpush1.msra.mxu0 0.0
        %828 = vmatprep.subr.mxu0 0.0
        %829 = vmatpush1.msra.mxu0 0.0
        %830 = vmatprep.subr.mxu0 0.0
        %831 = vmatpush1.msra.mxu0 0.0
        %832 = vmatprep.subr.mxu0 0.0
        %833 = vmatpush1.msra.mxu0 0.0
        %834 = vmatprep.subr.mxu0 0.0
        %835 = vmatpush1.msra.mxu0 0.0
        %836 = vmatprep.subr.mxu0 0.0
        %837 = vmatpush1.msra.mxu0 0.0
        %838 = vmatprep.subr.mxu0 0.0
        %839 = vmatpush1.msra.mxu0 0.0
        %840 = vmatprep.subr.mxu0 0.0
        %841 = vmatpush1.msra.mxu0 0.0
        %842 = vmatprep.subr.mxu0 0.0
        %843 = vmatpush1.msra.mxu0 0.0
        %844 = vmatprep.subr.mxu0 0.0
        %845 = vmatpush1.msra.mxu0 0.0
        %846 = vmatprep.subr.mxu0 0.0
        %847 = vmatpush1.msra.mxu0 0.0
        %848 = vmatprep.subr.mxu0 0.0
        %849 = vmatpush1.msra.mxu0 0.0
        %850 = vmatprep.subr.mxu0 0.0
        %851 = vmatpush1.msra.mxu0 0.0
        %852 = vmatprep.subr.mxu0 0.0
        %853 = vmatpush1.msra.mxu0 0.0
        %854 = vmatprep.subr.mxu0 0.0
        %855 = vmatpush1.msra.mxu0 0.0
        %856 = vmatprep.subr.mxu0 0.0
        %857 = vmatpush1.msra.mxu0 0.0
        %858 = vmatprep.subr.mxu0 0.0
        %859 = vmatpush1.msra.mxu0 0.0
        %860 = vmatprep.subr.mxu0 0.0
        %861 = vmatpush1.msra.mxu0 0.0
        %862 = vmatprep.subr.mxu0 0.0
        %863 = vmatpush1.msra.mxu0 0.0
        %864 = vmatprep.subr.mxu0 0.0
        %865 = vmatpush1.msra.mxu0 0.0
        %866 = vmatprep.subr.mxu0 0.0
        %867 = vmatpush1.msra.mxu0 0.0
        %868 = vmatprep.subr.mxu0 0.0
        %869 = vmatpush1.msra.mxu0 0.0
        %870 = vmatprep.subr.mxu0 0.0
        %871 = vmatpush1.msra.mxu0 0.0
        %872 = vmatprep.mubr.f32.mxu0 0.0
        %873 = vmatmul.mubr.f32.gmra.mrb[0].mxu0 %v797
        %v874 = vpop.f32.mrb[0].mxu0
        %v875 = vadd.f32 0.0, %v874
        %v876 = vpop.f32.mrb[0].mxu0
        %877 = vmatprep.mubr.f32.mxu0 0.0
        %878 = vmatmul.mubr.f32.gmra.mrb[0].mxu0 %v800
        %v879 = vpop.f32.mrb[0].mxu0
        %v880 = vadd.f32 0.0, %v879
        %v881 = vpop.f32.mrb[0].mxu0
        %882 = vmatprep.mubr.f32.mxu0 0.0
        %883 = vmatmul.mubr.f32.gmra.mrb[0].mxu0 %v803
        %v884 = vpop.f32.mrb[0].mxu0
        %v885 = vadd.f32 0.0, %v884
        %v886 = vpop.f32.mrb[0].mxu0
        %887 = vmatprep.mubr.f32.mxu0 0.0
        %888 = vmatmul.mubr.f32.gmra.mrb[0].mxu0 %v806
        %v889 = vpop.f32.mrb[0].mxu0
        %v890 = vadd.f32 0.0, %v889
        %v891 = vpop.f32.mrb[0].mxu0
        %892 = vdwg.mxu0
        %v894 = vsel %vm698, %v287, 0
        %v897 = vsel %vm698, %v288, 0
        %v900 = vsel %vm698, %v289, 0
        %v903 = vsel %vm698, %v290, 0
        %905 = vmatprep.subr.mxu0 0.0
        %906 = vmatpush1.msra.mxu0 %v580
        %907 = vmatprep.subr.mxu0 0.0
        %908 = vmatpush1.msra.mxu0 %v585
        %909 = vmatprep.subr.mxu0 0.0
        %910 = vmatpush1.msra.mxu0 %v590
        %911 = vmatprep.subr.mxu0 0.0
        %912 = vmatpush1.msra.mxu0 %v595
        %913 = vmatprep.subr.mxu0 0.0
        %914 = vmatpush1.msra.mxu0 0.0
        %915 = vmatprep.subr.mxu0 0.0
        %916 = vmatpush1.msra.mxu0 0.0
        %917 = vmatprep.subr.mxu0 0.0
        %918 = vmatpush1.msra.mxu0 0.0
        %919 = vmatprep.subr.mxu0 0.0
        %920 = vmatpush1.msra.mxu0 0.0
        %921 = vmatprep.subr.mxu0 0.0
        %922 = vmatpush1.msra.mxu0 0.0
        %923 = vmatprep.subr.mxu0 0.0
        %924 = vmatpush1.msra.mxu0 0.0
        %925 = vmatprep.subr.mxu0 0.0
        %926 = vmatpush1.msra.mxu0 0.0
        %927 = vmatprep.subr.mxu0 0.0
        %928 = vmatpush1.msra.mxu0 0.0
        %929 = vmatprep.subr.mxu0 0.0
        %930 = vmatpush1.msra.mxu0 0.0
        %931 = vmatprep.subr.mxu0 0.0
        %932 = vmatpush1.msra.mxu0 0.0
        %933 = vmatprep.subr.mxu0 0.0
        %934 = vmatpush1.msra.mxu0 0.0
        %935 = vmatprep.subr.mxu0 0.0
        %936 = vmatpush1.msra.mxu0 0.0
        %937 = vmatprep.subr.mxu0 0.0
        %938 = vmatpush1.msra.mxu0 0.0
        %939 = vmatprep.subr.mxu0 0.0
        %940 = vmatpush1.msra.mxu0 0.0
        %941 = vmatprep.subr.mxu0 0.0
        %942 = vmatpush1.msra.mxu0 0.0
        %943 = vmatprep.subr.mxu0 0.0
        %944 = vmatpush1.msra.mxu0 0.0
        %945 = vmatprep.subr.mxu0 0.0
        %946 = vmatpush1.msra.mxu0 0.0
        %947 = vmatprep.subr.mxu0 0.0
        %948 = vmatpush1.msra.mxu0 0.0
        %949 = vmatprep.subr.mxu0 0.0
        %950 = vmatpush1.msra.mxu0 0.0
        %951 = vmatprep.subr.mxu0 0.0
        %952 = vmatpush1.msra.mxu0 0.0
        %953 = vmatprep.subr.mxu0 0.0
        %954 = vmatpush1.msra.mxu0 0.0
        %955 = vmatprep.subr.mxu0 0.0
        %956 = vmatpush1.msra.mxu0 0.0
        %957 = vmatprep.subr.mxu0 0.0
        %958 = vmatpush1.msra.mxu0 0.0
        %959 = vmatprep.subr.mxu0 0.0
        %960 = vmatpush1.msra.mxu0 0.0
        %961 = vmatprep.subr.mxu0 0.0
        %962 = vmatpush1.msra.mxu0 0.0
        %963 = vmatprep.subr.mxu0 0.0
        %964 = vmatpush1.msra.mxu0 0.0
        %965 = vmatprep.subr.mxu0 0.0
        %966 = vmatpush1.msra.mxu0 0.0
        %967 = vmatprep.subr.mxu0 0.0
        %968 = vmatpush1.msra.mxu0 0.0
        %969 = vmatprep.mubr.f32.mxu0 0.0
        %970 = vmatmul.mubr.f32.gmra.mrb[0].mxu0 %v894
        %v971 = vpop.f32.mrb[0].mxu0
        %v972 = vadd.f32 0.0, %v971
        %v973 = vpop.f32.mrb[0].mxu0
        %974 = vmatprep.mubr.f32.mxu0 0.0
        %975 = vmatmul.mubr.f32.gmra.mrb[0].mxu0 %v897
        %v976 = vpop.f32.mrb[0].mxu0
        %v977 = vadd.f32 0.0, %v976
        %v978 = vpop.f32.mrb[0].mxu0
        %979 = vmatprep.mubr.f32.mxu0 0.0
        %980 = vmatmul.mubr.f32.gmra.mrb[0].mxu0 %v900
        %v981 = vpop.f32.mrb[0].mxu0
        %v982 = vadd.f32 0.0, %v981
        %v983 = vpop.f32.mrb[0].mxu0
        %984 = vmatprep.mubr.f32.mxu0 0.0
        %985 = vmatmul.mubr.f32.gmra.mrb[0].mxu0 %v903
        %v986 = vpop.f32.mrb[0].mxu0
        %v987 = vadd.f32 0.0, %v986
        %v988 = vpop.f32.mrb[0].mxu0
        %989 = vdwg.mxu0
        %v991 = vsel %vm698, %v291, 0
        %v994 = vsel %vm698, %v292, 0
        %v997 = vsel %vm698, %v293, 0
        %v1000 = vsel %vm698, %v294, 0
        %1002 = vmatprep.subr.mxu0 0.0
        %1003 = vmatpush1.msra.mxu0 %v600
        %1004 = vmatprep.subr.mxu0 0.0
        %1005 = vmatpush1.msra.mxu0 %v605
        %1006 = vmatprep.subr.mxu0 0.0
        %1007 = vmatpush1.msra.mxu0 %v610
        %1008 = vmatprep.subr.mxu0 0.0
        %1009 = vmatpush1.msra.mxu0 %v615
        %1010 = vmatprep.subr.mxu0 0.0
        %1011 = vmatpush1.msra.mxu0 0.0
        %1012 = vmatprep.subr.mxu0 0.0
        %1013 = vmatpush1.msra.mxu0 0.0
        %1014 = vmatprep.subr.mxu0 0.0
        %1015 = vmatpush1.msra.mxu0 0.0
        %1016 = vmatprep.subr.mxu0 0.0
        %1017 = vmatpush1.msra.mxu0 0.0
        %1018 = vmatprep.subr.mxu0 0.0
        %1019 = vmatpush1.msra.mxu0 0.0
        %1020 = vmatprep.subr.mxu0 0.0
        %1021 = vmatpush1.msra.mxu0 0.0
        %1022 = vmatprep.subr.mxu0 0.0
        %1023 = vmatpush1.msra.mxu0 0.0
        %1024 = vmatprep.subr.mxu0 0.0
        %1025 = vmatpush1.msra.mxu0 0.0
        %1026 = vmatprep.subr.mxu0 0.0
        %1027 = vmatpush1.msra.mxu0 0.0
        %1028 = vmatprep.subr.mxu0 0.0
        %1029 = vmatpush1.msra.mxu0 0.0
        %1030 = vmatprep.subr.mxu0 0.0
        %1031 = vmatpush1.msra.mxu0 0.0
        %1032 = vmatprep.subr.mxu0 0.0
        %1033 = vmatpush1.msra.mxu0 0.0
        %1034 = vmatprep.subr.mxu0 0.0
        %1035 = vmatpush1.msra.mxu0 0.0
        %1036 = vmatprep.subr.mxu0 0.0
        %1037 = vmatpush1.msra.mxu0 0.0
        %1038 = vmatprep.subr.mxu0 0.0
        %1039 = vmatpush1.msra.mxu0 0.0
        %1040 = vmatprep.subr.mxu0 0.0
        %1041 = vmatpush1.msra.mxu0 0.0
        %1042 = vmatprep.subr.mxu0 0.0
        %1043 = vmatpush1.msra.mxu0 0.0
        %1044 = vmatprep.subr.mxu0 0.0
        %1045 = vmatpush1.msra.mxu0 0.0
        %1046 = vmatprep.subr.mxu0 0.0
        %1047 = vmatpush1.msra.mxu0 0.0
        %1048 = vmatprep.subr.mxu0 0.0
        %1049 = vmatpush1.msra.mxu0 0.0
        %1050 = vmatprep.subr.mxu0 0.0
        %1051 = vmatpush1.msra.mxu0 0.0
        %1052 = vmatprep.subr.mxu0 0.0
        %1053 = vmatpush1.msra.mxu0 0.0
        %1054 = vmatprep.subr.mxu0 0.0
        %1055 = vmatpush1.msra.mxu0 0.0
        %1056 = vmatprep.subr.mxu0 0.0
        %1057 = vmatpush1.msra.mxu0 0.0
        %1058 = vmatprep.subr.mxu0 0.0
        %1059 = vmatpush1.msra.mxu0 0.0
        %1060 = vmatprep.subr.mxu0 0.0
        %1061 = vmatpush1.msra.mxu0 0.0
        %1062 = vmatprep.subr.mxu0 0.0
        %1063 = vmatpush1.msra.mxu0 0.0
        %1064 = vmatprep.subr.mxu0 0.0
        %1065 = vmatpush1.msra.mxu0 0.0
        %1066 = vmatprep.mubr.f32.mxu0 0.0
        %1067 = vmatmul.mubr.f32.gmra.mrb[0].mxu0 %v991
        %v1068 = vpop.f32.mrb[0].mxu0
        %v1069 = vadd.f32 0.0, %v1068
        %v1070 = vpop.f32.mrb[0].mxu0
        %1071 = vmatprep.mubr.f32.mxu0 0.0
        %1072 = vmatmul.mubr.f32.gmra.mrb[0].mxu0 %v994
        %v1073 = vpop.f32.mrb[0].mxu0
        %v1074 = vadd.f32 0.0, %v1073
        %v1075 = vpop.f32.mrb[0].mxu0
        %1076 = vmatprep.mubr.f32.mxu0 0.0
        %1077 = vmatmul.mubr.f32.gmra.mrb[0].mxu0 %v997
        %v1078 = vpop.f32.mrb[0].mxu0
        %v1079 = vadd.f32 0.0, %v1078
        %v1080 = vpop.f32.mrb[0].mxu0
        %1081 = vmatprep.mubr.f32.mxu0 0.0
        %1082 = vmatmul.mubr.f32.gmra.mrb[0].mxu0 %v1000
        %v1083 = vpop.f32.mrb[0].mxu0
        %v1084 = vadd.f32 0.0, %v1083
        %v1085 = vpop.f32.mrb[0].mxu0
        %1086 = vdwg.mxu0
        %v1088 = vsel %vm698, %v295, 0
        %v1091 = vsel %vm698, %v296, 0
        %v1094 = vsel %vm698, %v297, 0
        %v1097 = vsel %vm698, %v298, 0
        %1099 = vmatprep.subr.mxu0 0.0
        %1100 = vmatpush1.msra.mxu0 %v620
        %1101 = vmatprep.subr.mxu0 0.0
        %1102 = vmatpush1.msra.mxu0 %v625
        %1103 = vmatprep.subr.mxu0 0.0
        %1104 = vmatpush1.msra.mxu0 %v630
        %1105 = vmatprep.subr.mxu0 0.0
        %1106 = vmatpush1.msra.mxu0 %v635
        %1107 = vmatprep.subr.mxu0 0.0
        %1108 = vmatpush1.msra.mxu0 0.0
        %1109 = vmatprep.subr.mxu0 0.0
        %1110 = vmatpush1.msra.mxu0 0.0
        %1111 = vmatprep.subr.mxu0 0.0
        %1112 = vmatpush1.msra.mxu0 0.0
        %1113 = vmatprep.subr.mxu0 0.0
        %1114 = vmatpush1.msra.mxu0 0.0
        %1115 = vmatprep.subr.mxu0 0.0
        %1116 = vmatpush1.msra.mxu0 0.0
        %1117 = vmatprep.subr.mxu0 0.0
        %1118 = vmatpush1.msra.mxu0 0.0
        %1119 = vmatprep.subr.mxu0 0.0
        %1120 = vmatpush1.msra.mxu0 0.0
        %1121 = vmatprep.subr.mxu0 0.0
        %1122 = vmatpush1.msra.mxu0 0.0
        %1123 = vmatprep.subr.mxu0 0.0
        %1124 = vmatpush1.msra.mxu0 0.0
        %1125 = vmatprep.subr.mxu0 0.0
        %1126 = vmatpush1.msra.mxu0 0.0
        %1127 = vmatprep.subr.mxu0 0.0
        %1128 = vmatpush1.msra.mxu0 0.0
        %1129 = vmatprep.subr.mxu0 0.0
        %1130 = vmatpush1.msra.mxu0 0.0
        %1131 = vmatprep.subr.mxu0 0.0
        %1132 = vmatpush1.msra.mxu0 0.0
        %1133 = vmatprep.subr.mxu0 0.0
        %1134 = vmatpush1.msra.mxu0 0.0
        %1135 = vmatprep.subr.mxu0 0.0
        %1136 = vmatpush1.msra.mxu0 0.0
        %1137 = vmatprep.subr.mxu0 0.0
        %1138 = vmatpush1.msra.mxu0 0.0
        %1139 = vmatprep.subr.mxu0 0.0
        %1140 = vmatpush1.msra.mxu0 0.0
        %1141 = vmatprep.subr.mxu0 0.0
        %1142 = vmatpush1.msra.mxu0 0.0
        %1143 = vmatprep.subr.mxu0 0.0
        %1144 = vmatpush1.msra.mxu0 0.0
        %1145 = vmatprep.subr.mxu0 0.0
        %1146 = vmatpush1.msra.mxu0 0.0
        %1147 = vmatprep.subr.mxu0 0.0
        %1148 = vmatpush1.msra.mxu0 0.0
        %1149 = vmatprep.subr.mxu0 0.0
        %1150 = vmatpush1.msra.mxu0 0.0
        %1151 = vmatprep.subr.mxu0 0.0
        %1152 = vmatpush1.msra.mxu0 0.0
        %1153 = vmatprep.subr.mxu0 0.0
        %1154 = vmatpush1.msra.mxu0 0.0
        %1155 = vmatprep.subr.mxu0 0.0
        %1156 = vmatpush1.msra.mxu0 0.0
        %1157 = vmatprep.subr.mxu0 0.0
        %1158 = vmatpush1.msra.mxu0 0.0
        %1159 = vmatprep.subr.mxu0 0.0
        %1160 = vmatpush1.msra.mxu0 0.0
        %1161 = vmatprep.subr.mxu0 0.0
        %1162 = vmatpush1.msra.mxu0 0.0
        %1163 = vmatprep.mubr.f32.mxu0 0.0
        %1164 = vmatmul.mubr.f32.gmra.mrb[0].mxu0 %v1088
        %v1165 = vpop.f32.mrb[0].mxu0
        %v1166 = vadd.f32 0.0, %v1165
        %v1167 = vpop.f32.mrb[0].mxu0
        %1168 = vmatprep.mubr.f32.mxu0 0.0
        %1169 = vmatmul.mubr.f32.gmra.mrb[0].mxu0 %v1091
        %v1170 = vpop.f32.mrb[0].mxu0
        %v1171 = vadd.f32 0.0, %v1170
        %v1172 = vpop.f32.mrb[0].mxu0
        %1173 = vmatprep.mubr.f32.mxu0 0.0
        %1174 = vmatmul.mubr.f32.gmra.mrb[0].mxu0 %v1094
        %v1175 = vpop.f32.mrb[0].mxu0
        %v1176 = vadd.f32 0.0, %v1175
        %v1177 = vpop.f32.mrb[0].mxu0
        %1178 = vmatprep.mubr.f32.mxu0 0.0
        %1179 = vmatmul.mubr.f32.gmra.mrb[0].mxu0 %v1097
        %v1180 = vpop.f32.mrb[0].mxu0
        %v1181 = vadd.f32 0.0, %v1180
        %v1182 = vpop.f32.mrb[0].mxu0
        %1183 = vdwg.mxu0
        %v1185 = vsel %vm698, %v299, 0
        %v1188 = vsel %vm698, %v300, 0
        %v1191 = vsel %vm698, %v301, 0
        %v1194 = vsel %vm698, %v302, 0
        %1196 = vmatprep.subr.mxu0 0.0
        %1197 = vmatpush1.msra.mxu0 %v640
        %1198 = vmatprep.subr.mxu0 0.0
        %1199 = vmatpush1.msra.mxu0 %v645
        %1200 = vmatprep.subr.mxu0 0.0
        %1201 = vmatpush1.msra.mxu0 %v650
        %1202 = vmatprep.subr.mxu0 0.0
        %1203 = vmatpush1.msra.mxu0 %v655
        %1204 = vmatprep.subr.mxu0 0.0
        %1205 = vmatpush1.msra.mxu0 0.0
        %1206 = vmatprep.subr.mxu0 0.0
        %1207 = vmatpush1.msra.mxu0 0.0
        %1208 = vmatprep.subr.mxu0 0.0
        %1209 = vmatpush1.msra.mxu0 0.0
        %1210 = vmatprep.subr.mxu0 0.0
        %1211 = vmatpush1.msra.mxu0 0.0
        %1212 = vmatprep.subr.mxu0 0.0
        %1213 = vmatpush1.msra.mxu0 0.0
        %1214 = vmatprep.subr.mxu0 0.0
        %1215 = vmatpush1.msra.mxu0 0.0
        %1216 = vmatprep.subr.mxu0 0.0
        %1217 = vmatpush1.msra.mxu0 0.0
        %1218 = vmatprep.subr.mxu0 0.0
        %1219 = vmatpush1.msra.mxu0 0.0
        %1220 = vmatprep.subr.mxu0 0.0
        %1221 = vmatpush1.msra.mxu0 0.0
        %1222 = vmatprep.subr.mxu0 0.0
        %1223 = vmatpush1.msra.mxu0 0.0
        %1224 = vmatprep.subr.mxu0 0.0
        %1225 = vmatpush1.msra.mxu0 0.0
        %1226 = vmatprep.subr.mxu0 0.0
        %1227 = vmatpush1.msra.mxu0 0.0
        %1228 = vmatprep.subr.mxu0 0.0
        %1229 = vmatpush1.msra.mxu0 0.0
        %1230 = vmatprep.subr.mxu0 0.0
        %1231 = vmatpush1.msra.mxu0 0.0
        %1232 = vmatprep.subr.mxu0 0.0
        %1233 = vmatpush1.msra.mxu0 0.0
        %1234 = vmatprep.subr.mxu0 0.0
        %1235 = vmatpush1.msra.mxu0 0.0
        %1236 = vmatprep.subr.mxu0 0.0
        %1237 = vmatpush1.msra.mxu0 0.0
        %1238 = vmatprep.subr.mxu0 0.0
        %1239 = vmatpush1.msra.mxu0 0.0
        %1240 = vmatprep.subr.mxu0 0.0
        %1241 = vmatpush1.msra.mxu0 0.0
        %1242 = vmatprep.subr.mxu0 0.0
        %1243 = vmatpush1.msra.mxu0 0.0
        %1244 = vmatprep.subr.mxu0 0.0
        %1245 = vmatpush1.msra.mxu0 0.0
        %1246 = vmatprep.subr.mxu0 0.0
        %1247 = vmatpush1.msra.mxu0 0.0
        %1248 = vmatprep.subr.mxu0 0.0
        %1249 = vmatpush1.msra.mxu0 0.0
        %1250 = vmatprep.subr.mxu0 0.0
        %1251 = vmatpush1.msra.mxu0 0.0
        %1252 = vmatprep.subr.mxu0 0.0
        %1253 = vmatpush1.msra.mxu0 0.0
        %1254 = vmatprep.subr.mxu0 0.0
        %1255 = vmatpush1.msra.mxu0 0.0
        %1256 = vmatprep.subr.mxu0 0.0
        %1257 = vmatpush1.msra.mxu0 0.0
        %1258 = vmatprep.subr.mxu0 0.0
        %1259 = vmatpush1.msra.mxu0 0.0
        %1260 = vmatprep.mubr.f32.mxu0 0.0
        %1261 = vmatmul.mubr.f32.gmra.mrb[0].mxu0 %v1185
        %v1262 = vpop.f32.mrb[0].mxu0
        %v1263 = vadd.f32 0.0, %v1262
        %v1264 = vpop.f32.mrb[0].mxu0
        %1265 = vmatprep.mubr.f32.mxu0 0.0
        %1266 = vmatmul.mubr.f32.gmra.mrb[0].mxu0 %v1188
        %v1267 = vpop.f32.mrb[0].mxu0
        %v1268 = vadd.f32 0.0, %v1267
        %v1269 = vpop.f32.mrb[0].mxu0
        %1270 = vmatprep.mubr.f32.mxu0 0.0
        %1271 = vmatmul.mubr.f32.gmra.mrb[0].mxu0 %v1191
        %v1272 = vpop.f32.mrb[0].mxu0
        %v1273 = vadd.f32 0.0, %v1272
        %v1274 = vpop.f32.mrb[0].mxu0
        %1275 = vmatprep.mubr.f32.mxu0 0.0
        %1276 = vmatmul.mubr.f32.gmra.mrb[0].mxu0 %v1194
        %v1277 = vpop.f32.mrb[0].mxu0
        %v1278 = vadd.f32 0.0, %v1277
        %v1279 = vpop.f32.mrb[0].mxu0
        %1280 = vdwg.mxu0
        %v1282 = vsel %vm698, %v303, 0
        %v1285 = vsel %vm698, %v304, 0
        %v1288 = vsel %vm698, %v305, 0
        %v1291 = vsel %vm698, %v306, 0
        %1293 = vmatprep.subr.mxu0 0.0
        %1294 = vmatpush1.msra.mxu0 %v660
        %1295 = vmatprep.subr.mxu0 0.0
        %1296 = vmatpush1.msra.mxu0 %v665
        %1297 = vmatprep.subr.mxu0 0.0
        %1298 = vmatpush1.msra.mxu0 %v670
        %1299 = vmatprep.subr.mxu0 0.0
        %1300 = vmatpush1.msra.mxu0 %v675
        %1301 = vmatprep.subr.mxu0 0.0
        %1302 = vmatpush1.msra.mxu0 0.0
        %1303 = vmatprep.subr.mxu0 0.0
        %1304 = vmatpush1.msra.mxu0 0.0
        %1305 = vmatprep.subr.mxu0 0.0
        %1306 = vmatpush1.msra.mxu0 0.0
        %1307 = vmatprep.subr.mxu0 0.0
        %1308 = vmatpush1.msra.mxu0 0.0
        %1309 = vmatprep.subr.mxu0 0.0
        %1310 = vmatpush1.msra.mxu0 0.0
        %1311 = vmatprep.subr.mxu0 0.0
        %1312 = vmatpush1.msra.mxu0 0.0
        %1313 = vmatprep.subr.mxu0 0.0
        %1314 = vmatpush1.msra.mxu0 0.0
        %1315 = vmatprep.subr.mxu0 0.0
        %1316 = vmatpush1.msra.mxu0 0.0
        %1317 = vmatprep.subr.mxu0 0.0
        %1318 = vmatpush1.msra.mxu0 0.0
        %1319 = vmatprep.subr.mxu0 0.0
        %1320 = vmatpush1.msra.mxu0 0.0
        %1321 = vmatprep.subr.mxu0 0.0
        %1322 = vmatpush1.msra.mxu0 0.0
        %1323 = vmatprep.subr.mxu0 0.0
        %1324 = vmatpush1.msra.mxu0 0.0
        %1325 = vmatprep.subr.mxu0 0.0
        %1326 = vmatpush1.msra.mxu0 0.0
        %1327 = vmatprep.subr.mxu0 0.0
        %1328 = vmatpush1.msra.mxu0 0.0
        %1329 = vmatprep.subr.mxu0 0.0
        %1330 = vmatpush1.msra.mxu0 0.0
        %1331 = vmatprep.subr.mxu0 0.0
        %1332 = vmatpush1.msra.mxu0 0.0
        %1333 = vmatprep.subr.mxu0 0.0
        %1334 = vmatpush1.msra.mxu0 0.0
        %1335 = vmatprep.subr.mxu0 0.0
        %1336 = vmatpush1.msra.mxu0 0.0
        %1337 = vmatprep.subr.mxu0 0.0
        %1338 = vmatpush1.msra.mxu0 0.0
        %1339 = vmatprep.subr.mxu0 0.0
        %1340 = vmatpush1.msra.mxu0 0.0
        %1341 = vmatprep.subr.mxu0 0.0
        %1342 = vmatpush1.msra.mxu0 0.0
        %1343 = vmatprep.subr.mxu0 0.0
        %1344 = vmatpush1.msra.mxu0 0.0
        %1345 = vmatprep.subr.mxu0 0.0
        %1346 = vmatpush1.msra.mxu0 0.0
        %1347 = vmatprep.subr.mxu0 0.0
        %1348 = vmatpush1.msra.mxu0 0.0
        %1349 = vmatprep.subr.mxu0 0.0
        %1350 = vmatpush1.msra.mxu0 0.0
        %1351 = vmatprep.subr.mxu0 0.0
        %1352 = vmatpush1.msra.mxu0 0.0
        %1353 = vmatprep.subr.mxu0 0.0
        %1354 = vmatpush1.msra.mxu0 0.0
        %1355 = vmatprep.subr.mxu0 0.0
        %1356 = vmatpush1.msra.mxu0 0.0
        %1357 = vmatprep.mubr.f32.mxu0 0.0
        %1358 = vmatmul.mubr.f32.gmra.mrb[0].mxu0 %v1282
        %v1359 = vpop.f32.mrb[0].mxu0
        %v1360 = vadd.f32 0.0, %v1359
        %v1361 = vpop.f32.mrb[0].mxu0
        %1362 = vmatprep.mubr.f32.mxu0 0.0
        %1363 = vmatmul.mubr.f32.gmra.mrb[0].mxu0 %v1285
        %v1364 = vpop.f32.mrb[0].mxu0
        %v1365 = vadd.f32 0.0, %v1364
        %v1366 = vpop.f32.mrb[0].mxu0
        %1367 = vmatprep.mubr.f32.mxu0 0.0
        %1368 = vmatmul.mubr.f32.gmra.mrb[0].mxu0 %v1288
        %v1369 = vpop.f32.mrb[0].mxu0
        %v1370 = vadd.f32 0.0, %v1369
        %v1371 = vpop.f32.mrb[0].mxu0
        %1372 = vmatprep.mubr.f32.mxu0 0.0
        %1373 = vmatmul.mubr.f32.gmra.mrb[0].mxu0 %v1291
        %v1374 = vpop.f32.mrb[0].mxu0
        %v1375 = vadd.f32 0.0, %v1374
        %v1376 = vpop.f32.mrb[0].mxu0
        %1377 = vdwg.mxu0
        %v1379 = vsel %vm698, %v307, 0
        %v1382 = vsel %vm698, %v308, 0
        %v1385 = vsel %vm698, %v309, 0
        %v1388 = vsel %vm698, %v310, 0
        %1390 = vmatprep.subr.mxu0 0.0
        %1391 = vmatpush1.msra.mxu0 %v680
        %1392 = vmatprep.subr.mxu0 0.0
        %1393 = vmatpush1.msra.mxu0 %v685
        %1394 = vmatprep.subr.mxu0 0.0
        %1395 = vmatpush1.msra.mxu0 %v690
        %1396 = vmatprep.subr.mxu0 0.0
        %1397 = vmatpush1.msra.mxu0 %v695
        %1398 = vmatprep.subr.mxu0 0.0
        %1399 = vmatpush1.msra.mxu0 0.0
        %1400 = vmatprep.subr.mxu0 0.0
        %1401 = vmatpush1.msra.mxu0 0.0
        %1402 = vmatprep.subr.mxu0 0.0
        %1403 = vmatpush1.msra.mxu0 0.0
        %1404 = vmatprep.subr.mxu0 0.0
        %1405 = vmatpush1.msra.mxu0 0.0
        %1406 = vmatprep.subr.mxu0 0.0
        %1407 = vmatpush1.msra.mxu0 0.0
        %1408 = vmatprep.subr.mxu0 0.0
        %1409 = vmatpush1.msra.mxu0 0.0
        %1410 = vmatprep.subr.mxu0 0.0
        %1411 = vmatpush1.msra.mxu0 0.0
        %1412 = vmatprep.subr.mxu0 0.0
        %1413 = vmatpush1.msra.mxu0 0.0
        %1414 = vmatprep.subr.mxu0 0.0
        %1415 = vmatpush1.msra.mxu0 0.0
        %1416 = vmatprep.subr.mxu0 0.0
        %1417 = vmatpush1.msra.mxu0 0.0
        %1418 = vmatprep.subr.mxu0 0.0
        %1419 = vmatpush1.msra.mxu0 0.0
        %1420 = vmatprep.subr.mxu0 0.0
        %1421 = vmatpush1.msra.mxu0 0.0
        %1422 = vmatprep.subr.mxu0 0.0
        %1423 = vmatpush1.msra.mxu0 0.0
        %1424 = vmatprep.subr.mxu0 0.0
        %1425 = vmatpush1.msra.mxu0 0.0
        %1426 = vmatprep.subr.mxu0 0.0
        %1427 = vmatpush1.msra.mxu0 0.0
        %1428 = vmatprep.subr.mxu0 0.0
        %1429 = vmatpush1.msra.mxu0 0.0
        %1430 = vmatprep.subr.mxu0 0.0
        %1431 = vmatpush1.msra.mxu0 0.0
        %1432 = vmatprep.subr.mxu0 0.0
        %1433 = vmatpush1.msra.mxu0 0.0
        %1434 = vmatprep.subr.mxu0 0.0
        %1435 = vmatpush1.msra.mxu0 0.0
        %1436 = vmatprep.subr.mxu0 0.0
        %1437 = vmatpush1.msra.mxu0 0.0
        %1438 = vmatprep.subr.mxu0 0.0
        %1439 = vmatpush1.msra.mxu0 0.0
        %1440 = vmatprep.subr.mxu0 0.0
        %1441 = vmatpush1.msra.mxu0 0.0
        %1442 = vmatprep.subr.mxu0 0.0
        %1443 = vmatpush1.msra.mxu0 0.0
        %1444 = vmatprep.subr.mxu0 0.0
        %1445 = vmatpush1.msra.mxu0 0.0
        %1446 = vmatprep.subr.mxu0 0.0
        %1447 = vmatpush1.msra.mxu0 0.0
        %1448 = vmatprep.subr.mxu0 0.0
        %1449 = vmatpush1.msra.mxu0 0.0
        %1450 = vmatprep.subr.mxu0 0.0
        %1451 = vmatpush1.msra.mxu0 0.0
        %1452 = vmatprep.subr.mxu0 0.0
        %1453 = vmatpush1.msra.mxu0 0.0
        %1454 = vmatprep.mubr.f32.mxu0 0.0
        %1455 = vmatmul.mubr.f32.gmra.mrb[0].mxu0 %v1379
        %v1456 = vpop.f32.mrb[0].mxu0
        %v1457 = vadd.f32 0.0, %v1456
        %v1458 = vpop.f32.mrb[0].mxu0
        %1459 = vmatprep.mubr.f32.mxu0 0.0
        %1460 = vmatmul.mubr.f32.gmra.mrb[0].mxu0 %v1382
        %v1461 = vpop.f32.mrb[0].mxu0
        %v1462 = vadd.f32 0.0, %v1461
        %v1463 = vpop.f32.mrb[0].mxu0
        %1464 = vmatprep.mubr.f32.mxu0 0.0
        %1465 = vmatmul.mubr.f32.gmra.mrb[0].mxu0 %v1385
        %v1466 = vpop.f32.mrb[0].mxu0
        %v1467 = vadd.f32 0.0, %v1466
        %v1468 = vpop.f32.mrb[0].mxu0
        %1469 = vmatprep.mubr.f32.mxu0 0.0
        %1470 = vmatmul.mubr.f32.gmra.mrb[0].mxu0 %v1388
        %v1471 = vpop.f32.mrb[0].mxu0
        %v1472 = vadd.f32 0.0, %v1471
        %v1473 = vpop.f32.mrb[0].mxu0
        %1474 = vdwg.mxu0
        %v1475 = vlaneseq
        %v1476 = vshrl.u32 %v1475, 7
        %v1477 = vsub.s32 0, %v1476
        %v1478 = vrot.slane %v268, %v1477
        %v1479 = vadd.f32 %v778, %v1478
        %v1480 = vadd.f32 %v783, %v1478
        %v1481 = vadd.f32 %v788, %v1478
        %v1482 = vadd.f32 %v793, %v1478
        %v1483 = vadd.f32 %v875, %v1478
        %v1484 = vadd.f32 %v880, %v1478
        %v1485 = vadd.f32 %v885, %v1478
        %v1486 = vadd.f32 %v890, %v1478
        %v1487 = vadd.f32 %v972, %v1478
        %v1488 = vadd.f32 %v977, %v1478
        %v1489 = vadd.f32 %v982, %v1478
        %v1490 = vadd.f32 %v987, %v1478
        %v1491 = vadd.f32 %v1069, %v1478
        %v1492 = vadd.f32 %v1074, %v1478
        %v1493 = vadd.f32 %v1079, %v1478
        %v1494 = vadd.f32 %v1084, %v1478
        %v1495 = vadd.f32 %v1166, %v1478
        %v1496 = vadd.f32 %v1171, %v1478
        %v1497 = vadd.f32 %v1176, %v1478
        %v1498 = vadd.f32 %v1181, %v1478
        %v1499 = vadd.f32 %v1263, %v1478
        %v1500 = vadd.f32 %v1268, %v1478
        %v1501 = vadd.f32 %v1273, %v1478
        %v1502 = vadd.f32 %v1278, %v1478
        %v1503 = vadd.f32 %v1360, %v1478
        %v1504 = vadd.f32 %v1365, %v1478
        %v1505 = vadd.f32 %v1370, %v1478
        %v1506 = vadd.f32 %v1375, %v1478
        %v1507 = vadd.f32 %v1457, %v1478
        %v1508 = vadd.f32 %v1462, %v1478
        %v1509 = vadd.f32 %v1467, %v1478
        %v1510 = vadd.f32 %v1472, %v1478
        %v1511 = vmax.f32 %v1479, 0.0
        %v1512 = vmax.f32 %v1480, 0.0
        %v1513 = vmax.f32 %v1481, 0.0
        %v1514 = vmax.f32 %v1482, 0.0
        %v1515 = vmax.f32 %v1483, 0.0
        %v1516 = vmax.f32 %v1484, 0.0
        %v1517 = vmax.f32 %v1485, 0.0
        %v1518 = vmax.f32 %v1486, 0.0
        %v1519 = vmax.f32 %v1487, 0.0
        %v1520 = vmax.f32 %v1488, 0.0
        %v1521 = vmax.f32 %v1489, 0.0
        %v1522 = vmax.f32 %v1490, 0.0
        %v1523 = vmax.f32 %v1491, 0.0
        %v1524 = vmax.f32 %v1492, 0.0
        %v1525 = vmax.f32 %v1493, 0.0
        %v1526 = vmax.f32 %v1494, 0.0
        %v1527 = vmax.f32 %v1495, 0.0
        %v1528 = vmax.f32 %v1496, 0.0
        %v1529 = vmax.f32 %v1497, 0.0
        %v1530 = vmax.f32 %v1498, 0.0
        %v1531 = vmax.f32 %v1499, 0.0
        %v1532 = vmax.f32 %v1500, 0.0
        %v1533 = vmax.f32 %v1501, 0.0
        %v1534 = vmax.f32 %v1502, 0.0
        %v1535 = vmax.f32 %v1503, 0.0
        %v1536 = vmax.f32 %v1504, 0.0
        %v1537 = vmax.f32 %v1505, 0.0
        %v1538 = vmax.f32 %v1506, 0.0
        %v1539 = vmax.f32 %v1507, 0.0
        %v1540 = vmax.f32 %v1508, 0.0
        %v1541 = vmax.f32 %v1509, 0.0
        %v1542 = vmax.f32 %v1510, 0.0
        %v1544 = vsel %vm698, %v1511, 0
        %v1547 = vsel %vm698, %v1512, 0
        %v1550 = vsel %vm698, %v1513, 0
        %v1553 = vsel %vm698, %v1514, 0
        %v1556 = vsel %vm698, %v1515, 0
        %v1559 = vsel %vm698, %v1516, 0
        %v1562 = vsel %vm698, %v1517, 0
        %v1565 = vsel %vm698, %v1518, 0
        %v1568 = vsel %vm698, %v1519, 0
        %v1571 = vsel %vm698, %v1520, 0
        %v1574 = vsel %vm698, %v1521, 0
        %v1577 = vsel %vm698, %v1522, 0
        %v1580 = vsel %vm698, %v1523, 0
        %v1583 = vsel %vm698, %v1524, 0
        %v1586 = vsel %vm698, %v1525, 0
        %v1589 = vsel %vm698, %v1526, 0
        %v1592 = vsel %vm698, %v1527, 0
        %v1595 = vsel %vm698, %v1528, 0
        %v1598 = vsel %vm698, %v1529, 0
        %v1601 = vsel %vm698, %v1530, 0
        %v1604 = vsel %vm698, %v1531, 0
        %v1607 = vsel %vm698, %v1532, 0
        %v1610 = vsel %vm698, %v1533, 0
        %v1613 = vsel %vm698, %v1534, 0
        %v1616 = vsel %vm698, %v1535, 0
        %v1619 = vsel %vm698, %v1536, 0
        %v1622 = vsel %vm698, %v1537, 0
        %v1625 = vsel %vm698, %v1538, 0
        %v1628 = vsel %vm698, %v1539, 0
        %v1631 = vsel %vm698, %v1540, 0
        %v1634 = vsel %vm698, %v1541, 0
        %v1637 = vsel %vm698, %v1542, 0
        %1639 = vmatprep.subr.mxu0 0.0
        %1640 = vmatpush1.msra.mxu0 %v269
        %1641 = vmatprep.subr.mxu0 0.0
        %1642 = vmatpush1.msra.mxu0 %v270
        %1643 = vmatprep.subr.mxu0 0.0
        %1644 = vmatpush1.msra.mxu0 %v271
        %1645 = vmatprep.subr.mxu0 0.0
        %1646 = vmatpush1.msra.mxu0 %v272
        %1647 = vmatprep.subr.mxu0 0.0
        %1648 = vmatpush1.msra.mxu0 0.0
        %1649 = vmatprep.subr.mxu0 0.0
        %1650 = vmatpush1.msra.mxu0 0.0
        %1651 = vmatprep.subr.mxu0 0.0
        %1652 = vmatpush1.msra.mxu0 0.0
        %1653 = vmatprep.subr.mxu0 0.0
        %1654 = vmatpush1.msra.mxu0 0.0
        %1655 = vmatprep.subr.mxu0 0.0
        %1656 = vmatpush1.msra.mxu0 0.0
        %1657 = vmatprep.subr.mxu0 0.0
        %1658 = vmatpush1.msra.mxu0 0.0
        %1659 = vmatprep.subr.mxu0 0.0
        %1660 = vmatpush1.msra.mxu0 0.0
        %1661 = vmatprep.subr.mxu0 0.0
        %1662 = vmatpush1.msra.mxu0 0.0
        %1663 = vmatprep.subr.mxu0 0.0
        %1664 = vmatpush1.msra.mxu0 0.0
        %1665 = vmatprep.subr.mxu0 0.0
        %1666 = vmatpush1.msra.mxu0 0.0
        %1667 = vmatprep.subr.mxu0 0.0
        %1668 = vmatpush1.msra.mxu0 0.0
        %1669 = vmatprep.subr.mxu0 0.0
        %1670 = vmatpush1.msra.mxu0 0.0
        %1671 = vmatprep.subr.mxu0 0.0
        %1672 = vmatpush1.msra.mxu0 0.0
        %1673 = vmatprep.subr.mxu0 0.0
        %1674 = vmatpush1.msra.mxu0 0.0
        %1675 = vmatprep.subr.mxu0 0.0
        %1676 = vmatpush1.msra.mxu0 0.0
        %1677 = vmatprep.subr.mxu0 0.0
        %1678 = vmatpush1.msra.mxu0 0.0
        %1679 = vmatprep.subr.mxu0 0.0
        %1680 = vmatpush1.msra.mxu0 0.0
        %1681 = vmatprep.subr.mxu0 0.0
        %1682 = vmatpush1.msra.mxu0 0.0
        %1683 = vmatprep.subr.mxu0 0.0
        %1684 = vmatpush1.msra.mxu0 0.0
        %1685 = vmatprep.subr.mxu0 0.0
        %1686 = vmatpush1.msra.mxu0 0.0
        %1687 = vmatprep.subr.mxu0 0.0
        %1688 = vmatpush1.msra.mxu0 0.0
        %1689 = vmatprep.subr.mxu0 0.0
        %1690 = vmatpush1.msra.mxu0 0.0
        %1691 = vmatprep.subr.mxu0 0.0
        %1692 = vmatpush1.msra.mxu0 0.0
        %1693 = vmatprep.subr.mxu0 0.0
        %1694 = vmatpush1.msra.mxu0 0.0
        %1695 = vmatprep.subr.mxu0 0.0
        %1696 = vmatpush1.msra.mxu0 0.0
        %1697 = vmatprep.subr.mxu0 0.0
        %1698 = vmatpush1.msra.mxu0 0.0
        %1699 = vmatprep.subr.mxu0 0.0
        %1700 = vmatpush1.msra.mxu0 0.0
        %1701 = vmatprep.subr.mxu0 0.0
        %1702 = vmatpush1.msra.mxu0 0.0
        %1703 = vmatprep.mubr.f32.mxu0 0.0
        %1704 = vmatmul.mubr.f32.gmra.mrb[0].mxu0 %v1544
        %v1705 = vpop.f32.mrb[0].mxu0
        %v1706 = vadd.f32 0.0, %v1705
        %v1707 = vpop.f32.mrb[0].mxu0
        %1708 = vmatprep.mubr.f32.mxu0 0.0
        %1709 = vmatmul.mubr.f32.gmra.mrb[0].mxu0 %v1547
        %v1710 = vpop.f32.mrb[0].mxu0
        %v1711 = vadd.f32 0.0, %v1710
        %v1712 = vpop.f32.mrb[0].mxu0
        %1713 = vmatprep.mubr.f32.mxu0 0.0
        %1714 = vmatmul.mubr.f32.gmra.mrb[0].mxu0 %v1550
        %v1715 = vpop.f32.mrb[0].mxu0
        %v1716 = vadd.f32 0.0, %v1715
        %v1717 = vpop.f32.mrb[0].mxu0
        %1718 = vmatprep.mubr.f32.mxu0 0.0
        %1719 = vmatmul.mubr.f32.gmra.mrb[0].mxu0 %v1553
        %v1720 = vpop.f32.mrb[0].mxu0
        %v1721 = vadd.f32 0.0, %v1720
        %v1722 = vpop.f32.mrb[0].mxu0
        %1723 = vmatprep.mubr.f32.mxu0 0.0
        %1724 = vmatmul.mubr.f32.gmra.mrb[0].mxu0 %v1556
        %v1725 = vpop.f32.mrb[0].mxu0
        %v1726 = vadd.f32 0.0, %v1725
        %v1727 = vpop.f32.mrb[0].mxu0
        %1728 = vmatprep.mubr.f32.mxu0 0.0
        %1729 = vmatmul.mubr.f32.gmra.mrb[0].mxu0 %v1559
        %v1730 = vpop.f32.mrb[0].mxu0
        %v1731 = vadd.f32 0.0, %v1730
        %v1732 = vpop.f32.mrb[0].mxu0
        %1733 = vmatprep.mubr.f32.mxu0 0.0
        %1734 = vmatmul.mubr.f32.gmra.mrb[0].mxu0 %v1562
        %v1735 = vpop.f32.mrb[0].mxu0
        %v1736 = vadd.f32 0.0, %v1735
        %v1737 = vpop.f32.mrb[0].mxu0
        %1738 = vmatprep.mubr.f32.mxu0 0.0
        %1739 = vmatmul.mubr.f32.gmra.mrb[0].mxu0 %v1565
        %v1740 = vpop.f32.mrb[0].mxu0
        %v1741 = vadd.f32 0.0, %v1740
        %v1742 = vpop.f32.mrb[0].mxu0
        %1743 = vmatprep.mubr.f32.mxu0 0.0
        %1744 = vmatmul.mubr.f32.gmra.mrb[0].mxu0 %v1568
        %v1745 = vpop.f32.mrb[0].mxu0
        %v1746 = vadd.f32 0.0, %v1745
        %v1747 = vpop.f32.mrb[0].mxu0
        %1748 = vmatprep.mubr.f32.mxu0 0.0
        %1749 = vmatmul.mubr.f32.gmra.mrb[0].mxu0 %v1571
        %v1750 = vpop.f32.mrb[0].mxu0
        %v1751 = vadd.f32 0.0, %v1750
        %v1752 = vpop.f32.mrb[0].mxu0
        %1753 = vmatprep.mubr.f32.mxu0 0.0
        %1754 = vmatmul.mubr.f32.gmra.mrb[0].mxu0 %v1574
        %v1755 = vpop.f32.mrb[0].mxu0
        %v1756 = vadd.f32 0.0, %v1755
        %v1757 = vpop.f32.mrb[0].mxu0
        %1758 = vmatprep.mubr.f32.mxu0 0.0
        %1759 = vmatmul.mubr.f32.gmra.mrb[0].mxu0 %v1577
        %v1760 = vpop.f32.mrb[0].mxu0
        %v1761 = vadd.f32 0.0, %v1760
        %v1762 = vpop.f32.mrb[0].mxu0
        %1763 = vmatprep.mubr.f32.mxu0 0.0
        %1764 = vmatmul.mubr.f32.gmra.mrb[0].mxu0 %v1580
        %v1765 = vpop.f32.mrb[0].mxu0
        %v1766 = vadd.f32 0.0, %v1765
        %v1767 = vpop.f32.mrb[0].mxu0
        %1768 = vmatprep.mubr.f32.mxu0 0.0
        %1769 = vmatmul.mubr.f32.gmra.mrb[0].mxu0 %v1583
        %v1770 = vpop.f32.mrb[0].mxu0
        %v1771 = vadd.f32 0.0, %v1770
        %v1772 = vpop.f32.mrb[0].mxu0
        %1773 = vmatprep.mubr.f32.mxu0 0.0
        %1774 = vmatmul.mubr.f32.gmra.mrb[0].mxu0 %v1586
        %v1775 = vpop.f32.mrb[0].mxu0
        %v1776 = vadd.f32 0.0, %v1775
        %v1777 = vpop.f32.mrb[0].mxu0
        %1778 = vmatprep.mubr.f32.mxu0 0.0
        %1779 = vmatmul.mubr.f32.gmra.mrb[0].mxu0 %v1589
        %v1780 = vpop.f32.mrb[0].mxu0
        %v1781 = vadd.f32 0.0, %v1780
        %v1782 = vpop.f32.mrb[0].mxu0
        %1783 = vmatprep.mubr.f32.mxu0 0.0
        %1784 = vmatmul.mubr.f32.gmra.mrb[0].mxu0 %v1592
        %v1785 = vpop.f32.mrb[0].mxu0
        %v1786 = vadd.f32 0.0, %v1785
        %v1787 = vpop.f32.mrb[0].mxu0
        %1788 = vmatprep.mubr.f32.mxu0 0.0
        %1789 = vmatmul.mubr.f32.gmra.mrb[0].mxu0 %v1595
        %v1790 = vpop.f32.mrb[0].mxu0
        %v1791 = vadd.f32 0.0, %v1790
        %v1792 = vpop.f32.mrb[0].mxu0
        %1793 = vmatprep.mubr.f32.mxu0 0.0
        %1794 = vmatmul.mubr.f32.gmra.mrb[0].mxu0 %v1598
        %v1795 = vpop.f32.mrb[0].mxu0
        %v1796 = vadd.f32 0.0, %v1795
        %v1797 = vpop.f32.mrb[0].mxu0
        %1798 = vmatprep.mubr.f32.mxu0 0.0
        %1799 = vmatmul.mubr.f32.gmra.mrb[0].mxu0 %v1601
        %v1800 = vpop.f32.mrb[0].mxu0
        %v1801 = vadd.f32 0.0, %v1800
        %v1802 = vpop.f32.mrb[0].mxu0
        %1803 = vmatprep.mubr.f32.mxu0 0.0
        %1804 = vmatmul.mubr.f32.gmra.mrb[0].mxu0 %v1604
        %v1805 = vpop.f32.mrb[0].mxu0
        %v1806 = vadd.f32 0.0, %v1805
        %v1807 = vpop.f32.mrb[0].mxu0
        %1808 = vmatprep.mubr.f32.mxu0 0.0
        %1809 = vmatmul.mubr.f32.gmra.mrb[0].mxu0 %v1607
        %v1810 = vpop.f32.mrb[0].mxu0
        %v1811 = vadd.f32 0.0, %v1810
        %v1812 = vpop.f32.mrb[0].mxu0
        %1813 = vmatprep.mubr.f32.mxu0 0.0
        %1814 = vmatmul.mubr.f32.gmra.mrb[0].mxu0 %v1610
        %v1815 = vpop.f32.mrb[0].mxu0
        %v1816 = vadd.f32 0.0, %v1815
        %v1817 = vpop.f32.mrb[0].mxu0
        %1818 = vmatprep.mubr.f32.mxu0 0.0
        %1819 = vmatmul.mubr.f32.gmra.mrb[0].mxu0 %v1613
        %v1820 = vpop.f32.mrb[0].mxu0
        %v1821 = vadd.f32 0.0, %v1820
        %v1822 = vpop.f32.mrb[0].mxu0
        %1823 = vmatprep.mubr.f32.mxu0 0.0
        %1824 = vmatmul.mubr.f32.gmra.mrb[0].mxu0 %v1616
        %v1825 = vpop.f32.mrb[0].mxu0
        %v1826 = vadd.f32 0.0, %v1825
        %v1827 = vpop.f32.mrb[0].mxu0
        %1828 = vmatprep.mubr.f32.mxu0 0.0
        %1829 = vmatmul.mubr.f32.gmra.mrb[0].mxu0 %v1619
        %v1830 = vpop.f32.mrb[0].mxu0
        %v1831 = vadd.f32 0.0, %v1830
        %v1832 = vpop.f32.mrb[0].mxu0
        %1833 = vmatprep.mubr.f32.mxu0 0.0
        %1834 = vmatmul.mubr.f32.gmra.mrb[0].mxu0 %v1622
        %v1835 = vpop.f32.mrb[0].mxu0
        %v1836 = vadd.f32 0.0, %v1835
        %v1837 = vpop.f32.mrb[0].mxu0
        %1838 = vmatprep.mubr.f32.mxu0 0.0
        %1839 = vmatmul.mubr.f32.gmra.mrb[0].mxu0 %v1625
        %v1840 = vpop.f32.mrb[0].mxu0
        %v1841 = vadd.f32 0.0, %v1840
        %v1842 = vpop.f32.mrb[0].mxu0
        %1843 = vmatprep.mubr.f32.mxu0 0.0
        %1844 = vmatmul.mubr.f32.gmra.mrb[0].mxu0 %v1628
        %v1845 = vpop.f32.mrb[0].mxu0
        %v1846 = vadd.f32 0.0, %v1845
        %v1847 = vpop.f32.mrb[0].mxu0
        %1848 = vmatprep.mubr.f32.mxu0 0.0
        %1849 = vmatmul.mubr.f32.gmra.mrb[0].mxu0 %v1631
        %v1850 = vpop.f32.mrb[0].mxu0
        %v1851 = vadd.f32 0.0, %v1850
        %v1852 = vpop.f32.mrb[0].mxu0
        %1853 = vmatprep.mubr.f32.mxu0 0.0
        %1854 = vmatmul.mubr.f32.gmra.mrb[0].mxu0 %v1634
        %v1855 = vpop.f32.mrb[0].mxu0
        %v1856 = vadd.f32 0.0, %v1855
        %v1857 = vpop.f32.mrb[0].mxu0
        %1858 = vmatprep.mubr.f32.mxu0 0.0
        %1859 = vmatmul.mubr.f32.gmra.mrb[0].mxu0 %v1637
        %v1860 = vpop.f32.mrb[0].mxu0
        %v1861 = vadd.f32 0.0, %v1860
        %v1862 = vpop.f32.mrb[0].mxu0
        %1863 = vdwg.mxu0
        %v1865 = vsel %vm698, %v312, 0
        %v1868 = vsel %vm698, %v313, 0
        %v1871 = vsel %vm698, %v314, 0
        %v1874 = vsel %vm698, %v315, 0
        %1876 = vmatprep.subr.mxu0 0.0
        %1877 = vmatpush1.msra.mxu0 %v1706
        %1878 = vmatprep.subr.mxu0 0.0
        %1879 = vmatpush1.msra.mxu0 %v1711
        %1880 = vmatprep.subr.mxu0 0.0
        %1881 = vmatpush1.msra.mxu0 %v1716
        %1882 = vmatprep.subr.mxu0 0.0
        %1883 = vmatpush1.msra.mxu0 %v1721
        %1884 = vmatprep.subr.mxu0 0.0
        %1885 = vmatpush1.msra.mxu0 0.0
        %1886 = vmatprep.subr.mxu0 0.0
        %1887 = vmatpush1.msra.mxu0 0.0
        %1888 = vmatprep.subr.mxu0 0.0
        %1889 = vmatpush1.msra.mxu0 0.0
        %1890 = vmatprep.subr.mxu0 0.0
        %1891 = vmatpush1.msra.mxu0 0.0
        %1892 = vmatprep.subr.mxu0 0.0
        %1893 = vmatpush1.msra.mxu0 0.0
        %1894 = vmatprep.subr.mxu0 0.0
        %1895 = vmatpush1.msra.mxu0 0.0
        %1896 = vmatprep.subr.mxu0 0.0
        %1897 = vmatpush1.msra.mxu0 0.0
        %1898 = vmatprep.subr.mxu0 0.0
        %1899 = vmatpush1.msra.mxu0 0.0
        %1900 = vmatprep.subr.mxu0 0.0
        %1901 = vmatpush1.msra.mxu0 0.0
        %1902 = vmatprep.subr.mxu0 0.0
        %1903 = vmatpush1.msra.mxu0 0.0
        %1904 = vmatprep.subr.mxu0 0.0
        %1905 = vmatpush1.msra.mxu0 0.0
        %1906 = vmatprep.subr.mxu0 0.0
        %1907 = vmatpush1.msra.mxu0 0.0
        %1908 = vmatprep.subr.mxu0 0.0
        %1909 = vmatpush1.msra.mxu0 0.0
        %1910 = vmatprep.subr.mxu0 0.0
        %1911 = vmatpush1.msra.mxu0 0.0
        %1912 = vmatprep.subr.mxu0 0.0
        %1913 = vmatpush1.msra.mxu0 0.0
        %1914 = vmatprep.subr.mxu0 0.0
        %1915 = vmatpush1.msra.mxu0 0.0
        %1916 = vmatprep.subr.mxu0 0.0
        %1917 = vmatpush1.msra.mxu0 0.0
        %1918 = vmatprep.subr.mxu0 0.0
        %1919 = vmatpush1.msra.mxu0 0.0
        %1920 = vmatprep.subr.mxu0 0.0
        %1921 = vmatpush1.msra.mxu0 0.0
        %1922 = vmatprep.subr.mxu0 0.0
        %1923 = vmatpush1.msra.mxu0 0.0
        %1924 = vmatprep.subr.mxu0 0.0
        %1925 = vmatpush1.msra.mxu0 0.0
        %1926 = vmatprep.subr.mxu0 0.0
        %1927 = vmatpush1.msra.mxu0 0.0
        %1928 = vmatprep.subr.mxu0 0.0
        %1929 = vmatpush1.msra.mxu0 0.0
        %1930 = vmatprep.subr.mxu0 0.0
        %1931 = vmatpush1.msra.mxu0 0.0
        %1932 = vmatprep.subr.mxu0 0.0
        %1933 = vmatpush1.msra.mxu0 0.0
        %1934 = vmatprep.subr.mxu0 0.0
        %1935 = vmatpush1.msra.mxu0 0.0
        %1936 = vmatprep.subr.mxu0 0.0
        %1937 = vmatpush1.msra.mxu0 0.0
        %1938 = vmatprep.subr.mxu0 0.0
        %1939 = vmatpush1.msra.mxu0 0.0
        %1940 = vmatprep.mubr.f32.mxu0 0.0
        %1941 = vmatmul.mubr.f32.gmra.mrb[0].mxu0 %v1865
        %v1942 = vpop.f32.mrb[0].mxu0
        %v1943 = vadd.f32 0.0, %v1942
        %v1944 = vpop.f32.mrb[0].mxu0
        %1945 = vmatprep.mubr.f32.mxu0 0.0
        %1946 = vmatmul.mubr.f32.gmra.mrb[0].mxu0 %v1868
        %v1947 = vpop.f32.mrb[0].mxu0
        %v1948 = vadd.f32 0.0, %v1947
        %v1949 = vpop.f32.mrb[0].mxu0
        %1950 = vmatprep.mubr.f32.mxu0 0.0
        %1951 = vmatmul.mubr.f32.gmra.mrb[0].mxu0 %v1871
        %v1952 = vpop.f32.mrb[0].mxu0
        %v1953 = vadd.f32 0.0, %v1952
        %v1954 = vpop.f32.mrb[0].mxu0
        %1955 = vmatprep.mubr.f32.mxu0 0.0
        %1956 = vmatmul.mubr.f32.gmra.mrb[0].mxu0 %v1874
        %v1957 = vpop.f32.mrb[0].mxu0
        %v1958 = vadd.f32 0.0, %v1957
        %v1959 = vpop.f32.mrb[0].mxu0
        %1960 = vdwg.mxu0
        %v1962 = vsel %vm698, %v316, 0
        %v1965 = vsel %vm698, %v317, 0
        %v1968 = vsel %vm698, %v318, 0
        %v1971 = vsel %vm698, %v319, 0
        %1973 = vmatprep.subr.mxu0 0.0
        %1974 = vmatpush1.msra.mxu0 %v1726
        %1975 = vmatprep.subr.mxu0 0.0
        %1976 = vmatpush1.msra.mxu0 %v1731
        %1977 = vmatprep.subr.mxu0 0.0
        %1978 = vmatpush1.msra.mxu0 %v1736
        %1979 = vmatprep.subr.mxu0 0.0
        %1980 = vmatpush1.msra.mxu0 %v1741
        %1981 = vmatprep.subr.mxu0 0.0
        %1982 = vmatpush1.msra.mxu0 0.0
        %1983 = vmatprep.subr.mxu0 0.0
        %1984 = vmatpush1.msra.mxu0 0.0
        %1985 = vmatprep.subr.mxu0 0.0
        %1986 = vmatpush1.msra.mxu0 0.0
        %1987 = vmatprep.subr.mxu0 0.0
        %1988 = vmatpush1.msra.mxu0 0.0
        %1989 = vmatprep.subr.mxu0 0.0
        %1990 = vmatpush1.msra.mxu0 0.0
        %1991 = vmatprep.subr.mxu0 0.0
        %1992 = vmatpush1.msra.mxu0 0.0
        %1993 = vmatprep.subr.mxu0 0.0
        %1994 = vmatpush1.msra.mxu0 0.0
        %1995 = vmatprep.subr.mxu0 0.0
        %1996 = vmatpush1.msra.mxu0 0.0
        %1997 = vmatprep.subr.mxu0 0.0
        %1998 = vmatpush1.msra.mxu0 0.0
        %1999 = vmatprep.subr.mxu0 0.0
        %2000 = vmatpush1.msra.mxu0 0.0
        %2001 = vmatprep.subr.mxu0 0.0
        %2002 = vmatpush1.msra.mxu0 0.0
        %2003 = vmatprep.subr.mxu0 0.0
        %2004 = vmatpush1.msra.mxu0 0.0
        %2005 = vmatprep.subr.mxu0 0.0
        %2006 = vmatpush1.msra.mxu0 0.0
        %2007 = vmatprep.subr.mxu0 0.0
        %2008 = vmatpush1.msra.mxu0 0.0
        %2009 = vmatprep.subr.mxu0 0.0
        %2010 = vmatpush1.msra.mxu0 0.0
        %2011 = vmatprep.subr.mxu0 0.0
        %2012 = vmatpush1.msra.mxu0 0.0
        %2013 = vmatprep.subr.mxu0 0.0
        %2014 = vmatpush1.msra.mxu0 0.0
        %2015 = vmatprep.subr.mxu0 0.0
        %2016 = vmatpush1.msra.mxu0 0.0
        %2017 = vmatprep.subr.mxu0 0.0
        %2018 = vmatpush1.msra.mxu0 0.0
        %2019 = vmatprep.subr.mxu0 0.0
        %2020 = vmatpush1.msra.mxu0 0.0
        %2021 = vmatprep.subr.mxu0 0.0
        %2022 = vmatpush1.msra.mxu0 0.0
        %2023 = vmatprep.subr.mxu0 0.0
        %2024 = vmatpush1.msra.mxu0 0.0
        %2025 = vmatprep.subr.mxu0 0.0
        %2026 = vmatpush1.msra.mxu0 0.0
        %2027 = vmatprep.subr.mxu0 0.0
        %2028 = vmatpush1.msra.mxu0 0.0
        %2029 = vmatprep.subr.mxu0 0.0
        %2030 = vmatpush1.msra.mxu0 0.0
        %2031 = vmatprep.subr.mxu0 0.0
        %2032 = vmatpush1.msra.mxu0 0.0
        %2033 = vmatprep.subr.mxu0 0.0
        %2034 = vmatpush1.msra.mxu0 0.0
        %2035 = vmatprep.subr.mxu0 0.0
        %2036 = vmatpush1.msra.mxu0 0.0
        %2037 = vmatprep.mubr.f32.mxu0 0.0
        %2038 = vmatmul.mubr.f32.gmra.mrb[0].mxu0 %v1962
        %v2039 = vpop.f32.mrb[0].mxu0
        %v2040 = vadd.f32 0.0, %v2039
        %v2041 = vpop.f32.mrb[0].mxu0
        %2042 = vmatprep.mubr.f32.mxu0 0.0
        %2043 = vmatmul.mubr.f32.gmra.mrb[0].mxu0 %v1965
        %v2044 = vpop.f32.mrb[0].mxu0
        %v2045 = vadd.f32 0.0, %v2044
        %v2046 = vpop.f32.mrb[0].mxu0
        %2047 = vmatprep.mubr.f32.mxu0 0.0
        %2048 = vmatmul.mubr.f32.gmra.mrb[0].mxu0 %v1968
        %v2049 = vpop.f32.mrb[0].mxu0
        %v2050 = vadd.f32 0.0, %v2049
        %v2051 = vpop.f32.mrb[0].mxu0
        %2052 = vmatprep.mubr.f32.mxu0 0.0
        %2053 = vmatmul.mubr.f32.gmra.mrb[0].mxu0 %v1971
        %v2054 = vpop.f32.mrb[0].mxu0
        %v2055 = vadd.f32 0.0, %v2054
        %v2056 = vpop.f32.mrb[0].mxu0
        %2057 = vdwg.mxu0
        %v2059 = vsel %vm698, %v320, 0
        %v2062 = vsel %vm698, %v321, 0
        %v2065 = vsel %vm698, %v322, 0
        %v2068 = vsel %vm698, %v323, 0
        %2070 = vmatprep.subr.mxu0 0.0
        %2071 = vmatpush1.msra.mxu0 %v1746
        %2072 = vmatprep.subr.mxu0 0.0
        %2073 = vmatpush1.msra.mxu0 %v1751
        %2074 = vmatprep.subr.mxu0 0.0
        %2075 = vmatpush1.msra.mxu0 %v1756
        %2076 = vmatprep.subr.mxu0 0.0
        %2077 = vmatpush1.msra.mxu0 %v1761
        %2078 = vmatprep.subr.mxu0 0.0
        %2079 = vmatpush1.msra.mxu0 0.0
        %2080 = vmatprep.subr.mxu0 0.0
        %2081 = vmatpush1.msra.mxu0 0.0
        %2082 = vmatprep.subr.mxu0 0.0
        %2083 = vmatpush1.msra.mxu0 0.0
        %2084 = vmatprep.subr.mxu0 0.0
        %2085 = vmatpush1.msra.mxu0 0.0
        %2086 = vmatprep.subr.mxu0 0.0
        %2087 = vmatpush1.msra.mxu0 0.0
        %2088 = vmatprep.subr.mxu0 0.0
        %2089 = vmatpush1.msra.mxu0 0.0
        %2090 = vmatprep.subr.mxu0 0.0
        %2091 = vmatpush1.msra.mxu0 0.0
        %2092 = vmatprep.subr.mxu0 0.0
        %2093 = vmatpush1.msra.mxu0 0.0
        %2094 = vmatprep.subr.mxu0 0.0
        %2095 = vmatpush1.msra.mxu0 0.0
        %2096 = vmatprep.subr.mxu0 0.0
        %2097 = vmatpush1.msra.mxu0 0.0
        %2098 = vmatprep.subr.mxu0 0.0
        %2099 = vmatpush1.msra.mxu0 0.0
        %2100 = vmatprep.subr.mxu0 0.0
        %2101 = vmatpush1.msra.mxu0 0.0
        %2102 = vmatprep.subr.mxu0 0.0
        %2103 = vmatpush1.msra.mxu0 0.0
        %2104 = vmatprep.subr.mxu0 0.0
        %2105 = vmatpush1.msra.mxu0 0.0
        %2106 = vmatprep.subr.mxu0 0.0
        %2107 = vmatpush1.msra.mxu0 0.0
        %2108 = vmatprep.subr.mxu0 0.0
        %2109 = vmatpush1.msra.mxu0 0.0
        %2110 = vmatprep.subr.mxu0 0.0
        %2111 = vmatpush1.msra.mxu0 0.0
        %2112 = vmatprep.subr.mxu0 0.0
        %2113 = vmatpush1.msra.mxu0 0.0
        %2114 = vmatprep.subr.mxu0 0.0
        %2115 = vmatpush1.msra.mxu0 0.0
        %2116 = vmatprep.subr.mxu0 0.0
        %2117 = vmatpush1.msra.mxu0 0.0
        %2118 = vmatprep.subr.mxu0 0.0
        %2119 = vmatpush1.msra.mxu0 0.0
        %2120 = vmatprep.subr.mxu0 0.0
        %2121 = vmatpush1.msra.mxu0 0.0
        %2122 = vmatprep.subr.mxu0 0.0
        %2123 = vmatpush1.msra.mxu0 0.0
        %2124 = vmatprep.subr.mxu0 0.0
        %2125 = vmatpush1.msra.mxu0 0.0
        %2126 = vmatprep.subr.mxu0 0.0
        %2127 = vmatpush1.msra.mxu0 0.0
        %2128 = vmatprep.subr.mxu0 0.0
        %2129 = vmatpush1.msra.mxu0 0.0
        %2130 = vmatprep.subr.mxu0 0.0
        %2131 = vmatpush1.msra.mxu0 0.0
        %2132 = vmatprep.subr.mxu0 0.0
        %2133 = vmatpush1.msra.mxu0 0.0
        %2134 = vmatprep.mubr.f32.mxu0 0.0
        %2135 = vmatmul.mubr.f32.gmra.mrb[0].mxu0 %v2059
        %v2136 = vpop.f32.mrb[0].mxu0
        %v2137 = vadd.f32 0.0, %v2136
        %v2138 = vpop.f32.mrb[0].mxu0
        %2139 = vmatprep.mubr.f32.mxu0 0.0
        %2140 = vmatmul.mubr.f32.gmra.mrb[0].mxu0 %v2062
        %v2141 = vpop.f32.mrb[0].mxu0
        %v2142 = vadd.f32 0.0, %v2141
        %v2143 = vpop.f32.mrb[0].mxu0
        %2144 = vmatprep.mubr.f32.mxu0 0.0
        %2145 = vmatmul.mubr.f32.gmra.mrb[0].mxu0 %v2065
        %v2146 = vpop.f32.mrb[0].mxu0
        %v2147 = vadd.f32 0.0, %v2146
        %v2148 = vpop.f32.mrb[0].mxu0
        %2149 = vmatprep.mubr.f32.mxu0 0.0
        %2150 = vmatmul.mubr.f32.gmra.mrb[0].mxu0 %v2068
        %v2151 = vpop.f32.mrb[0].mxu0
        %v2152 = vadd.f32 0.0, %v2151
        %v2153 = vpop.f32.mrb[0].mxu0
        %2154 = vdwg.mxu0
        %v2156 = vsel %vm698, %v324, 0
        %v2159 = vsel %vm698, %v325, 0
        %v2162 = vsel %vm698, %v326, 0
        %v2165 = vsel %vm698, %v327, 0
        %2167 = vmatprep.subr.mxu0 0.0
        %2168 = vmatpush1.msra.mxu0 %v1766
        %2169 = vmatprep.subr.mxu0 0.0
        %2170 = vmatpush1.msra.mxu0 %v1771
        %2171 = vmatprep.subr.mxu0 0.0
        %2172 = vmatpush1.msra.mxu0 %v1776
        %2173 = vmatprep.subr.mxu0 0.0
        %2174 = vmatpush1.msra.mxu0 %v1781
        %2175 = vmatprep.subr.mxu0 0.0
        %2176 = vmatpush1.msra.mxu0 0.0
        %2177 = vmatprep.subr.mxu0 0.0
        %2178 = vmatpush1.msra.mxu0 0.0
        %2179 = vmatprep.subr.mxu0 0.0
        %2180 = vmatpush1.msra.mxu0 0.0
        %2181 = vmatprep.subr.mxu0 0.0
        %2182 = vmatpush1.msra.mxu0 0.0
        %2183 = vmatprep.subr.mxu0 0.0
        %2184 = vmatpush1.msra.mxu0 0.0
        %2185 = vmatprep.subr.mxu0 0.0
        %2186 = vmatpush1.msra.mxu0 0.0
        %2187 = vmatprep.subr.mxu0 0.0
        %2188 = vmatpush1.msra.mxu0 0.0
        %2189 = vmatprep.subr.mxu0 0.0
        %2190 = vmatpush1.msra.mxu0 0.0
        %2191 = vmatprep.subr.mxu0 0.0
        %2192 = vmatpush1.msra.mxu0 0.0
        %2193 = vmatprep.subr.mxu0 0.0
        %2194 = vmatpush1.msra.mxu0 0.0
        %2195 = vmatprep.subr.mxu0 0.0
        %2196 = vmatpush1.msra.mxu0 0.0
        %2197 = vmatprep.subr.mxu0 0.0
        %2198 = vmatpush1.msra.mxu0 0.0
        %2199 = vmatprep.subr.mxu0 0.0
        %2200 = vmatpush1.msra.mxu0 0.0
        %2201 = vmatprep.subr.mxu0 0.0
        %2202 = vmatpush1.msra.mxu0 0.0
        %2203 = vmatprep.subr.mxu0 0.0
        %2204 = vmatpush1.msra.mxu0 0.0
        %2205 = vmatprep.subr.mxu0 0.0
        %2206 = vmatpush1.msra.mxu0 0.0
        %2207 = vmatprep.subr.mxu0 0.0
        %2208 = vmatpush1.msra.mxu0 0.0
        %2209 = vmatprep.subr.mxu0 0.0
        %2210 = vmatpush1.msra.mxu0 0.0
        %2211 = vmatprep.subr.mxu0 0.0
        %2212 = vmatpush1.msra.mxu0 0.0
        %2213 = vmatprep.subr.mxu0 0.0
        %2214 = vmatpush1.msra.mxu0 0.0
        %2215 = vmatprep.subr.mxu0 0.0
        %2216 = vmatpush1.msra.mxu0 0.0
        %2217 = vmatprep.subr.mxu0 0.0
        %2218 = vmatpush1.msra.mxu0 0.0
        %2219 = vmatprep.subr.mxu0 0.0
        %2220 = vmatpush1.msra.mxu0 0.0
        %2221 = vmatprep.subr.mxu0 0.0
        %2222 = vmatpush1.msra.mxu0 0.0
        %2223 = vmatprep.subr.mxu0 0.0
        %2224 = vmatpush1.msra.mxu0 0.0
        %2225 = vmatprep.subr.mxu0 0.0
        %2226 = vmatpush1.msra.mxu0 0.0
        %2227 = vmatprep.subr.mxu0 0.0
        %2228 = vmatpush1.msra.mxu0 0.0
        %2229 = vmatprep.subr.mxu0 0.0
        %2230 = vmatpush1.msra.mxu0 0.0
        %2231 = vmatprep.mubr.f32.mxu0 0.0
        %2232 = vmatmul.mubr.f32.gmra.mrb[0].mxu0 %v2156
        %v2233 = vpop.f32.mrb[0].mxu0
        %v2234 = vadd.f32 0.0, %v2233
        %v2235 = vpop.f32.mrb[0].mxu0
        %2236 = vmatprep.mubr.f32.mxu0 0.0
        %2237 = vmatmul.mubr.f32.gmra.mrb[0].mxu0 %v2159
        %v2238 = vpop.f32.mrb[0].mxu0
        %v2239 = vadd.f32 0.0, %v2238
        %v2240 = vpop.f32.mrb[0].mxu0
        %2241 = vmatprep.mubr.f32.mxu0 0.0
        %2242 = vmatmul.mubr.f32.gmra.mrb[0].mxu0 %v2162
        %v2243 = vpop.f32.mrb[0].mxu0
        %v2244 = vadd.f32 0.0, %v2243
        %v2245 = vpop.f32.mrb[0].mxu0
        %2246 = vmatprep.mubr.f32.mxu0 0.0
        %2247 = vmatmul.mubr.f32.gmra.mrb[0].mxu0 %v2165
        %v2248 = vpop.f32.mrb[0].mxu0
        %v2249 = vadd.f32 0.0, %v2248
        %v2250 = vpop.f32.mrb[0].mxu0
        %2251 = vdwg.mxu0
        %v2253 = vsel %vm698, %v328, 0
        %v2256 = vsel %vm698, %v329, 0
        %v2259 = vsel %vm698, %v330, 0
        %v2262 = vsel %vm698, %v331, 0
        %2264 = vmatprep.subr.mxu0 0.0
        %2265 = vmatpush1.msra.mxu0 %v1786
        %2266 = vmatprep.subr.mxu0 0.0
        %2267 = vmatpush1.msra.mxu0 %v1791
        %2268 = vmatprep.subr.mxu0 0.0
        %2269 = vmatpush1.msra.mxu0 %v1796
        %2270 = vmatprep.subr.mxu0 0.0
        %2271 = vmatpush1.msra.mxu0 %v1801
        %2272 = vmatprep.subr.mxu0 0.0
        %2273 = vmatpush1.msra.mxu0 0.0
        %2274 = vmatprep.subr.mxu0 0.0
        %2275 = vmatpush1.msra.mxu0 0.0
        %2276 = vmatprep.subr.mxu0 0.0
        %2277 = vmatpush1.msra.mxu0 0.0
        %2278 = vmatprep.subr.mxu0 0.0
        %2279 = vmatpush1.msra.mxu0 0.0
        %2280 = vmatprep.subr.mxu0 0.0
        %2281 = vmatpush1.msra.mxu0 0.0
        %2282 = vmatprep.subr.mxu0 0.0
        %2283 = vmatpush1.msra.mxu0 0.0
        %2284 = vmatprep.subr.mxu0 0.0
        %2285 = vmatpush1.msra.mxu0 0.0
        %2286 = vmatprep.subr.mxu0 0.0
        %2287 = vmatpush1.msra.mxu0 0.0
        %2288 = vmatprep.subr.mxu0 0.0
        %2289 = vmatpush1.msra.mxu0 0.0
        %2290 = vmatprep.subr.mxu0 0.0
        %2291 = vmatpush1.msra.mxu0 0.0
        %2292 = vmatprep.subr.mxu0 0.0
        %2293 = vmatpush1.msra.mxu0 0.0
        %2294 = vmatprep.subr.mxu0 0.0
        %2295 = vmatpush1.msra.mxu0 0.0
        %2296 = vmatprep.subr.mxu0 0.0
        %2297 = vmatpush1.msra.mxu0 0.0
        %2298 = vmatprep.subr.mxu0 0.0
        %2299 = vmatpush1.msra.mxu0 0.0
        %2300 = vmatprep.subr.mxu0 0.0
        %2301 = vmatpush1.msra.mxu0 0.0
        %2302 = vmatprep.subr.mxu0 0.0
        %2303 = vmatpush1.msra.mxu0 0.0
        %2304 = vmatprep.subr.mxu0 0.0
        %2305 = vmatpush1.msra.mxu0 0.0
        %2306 = vmatprep.subr.mxu0 0.0
        %2307 = vmatpush1.msra.mxu0 0.0
        %2308 = vmatprep.subr.mxu0 0.0
        %2309 = vmatpush1.msra.mxu0 0.0
        %2310 = vmatprep.subr.mxu0 0.0
        %2311 = vmatpush1.msra.mxu0 0.0
        %2312 = vmatprep.subr.mxu0 0.0
        %2313 = vmatpush1.msra.mxu0 0.0
        %2314 = vmatprep.subr.mxu0 0.0
        %2315 = vmatpush1.msra.mxu0 0.0
        %2316 = vmatprep.subr.mxu0 0.0
        %2317 = vmatpush1.msra.mxu0 0.0
        %2318 = vmatprep.subr.mxu0 0.0
        %2319 = vmatpush1.msra.mxu0 0.0
        %2320 = vmatprep.subr.mxu0 0.0
        %2321 = vmatpush1.msra.mxu0 0.0
        %2322 = vmatprep.subr.mxu0 0.0
        %2323 = vmatpush1.msra.mxu0 0.0
        %2324 = vmatprep.subr.mxu0 0.0
        %2325 = vmatpush1.msra.mxu0 0.0
        %2326 = vmatprep.subr.mxu0 0.0
        %2327 = vmatpush1.msra.mxu0 0.0
        %2328 = vmatprep.mubr.f32.mxu0 0.0
        %2329 = vmatmul.mubr.f32.gmra.mrb[0].mxu0 %v2253
        %v2330 = vpop.f32.mrb[0].mxu0
        %v2331 = vadd.f32 0.0, %v2330
        %v2332 = vpop.f32.mrb[0].mxu0
        %2333 = vmatprep.mubr.f32.mxu0 0.0
        %2334 = vmatmul.mubr.f32.gmra.mrb[0].mxu0 %v2256
        %v2335 = vpop.f32.mrb[0].mxu0
        %v2336 = vadd.f32 0.0, %v2335
        %v2337 = vpop.f32.mrb[0].mxu0
        %2338 = vmatprep.mubr.f32.mxu0 0.0
        %2339 = vmatmul.mubr.f32.gmra.mrb[0].mxu0 %v2259
        %v2340 = vpop.f32.mrb[0].mxu0
        %v2341 = vadd.f32 0.0, %v2340
        %v2342 = vpop.f32.mrb[0].mxu0
        %2343 = vmatprep.mubr.f32.mxu0 0.0
        %2344 = vmatmul.mubr.f32.gmra.mrb[0].mxu0 %v2262
        %v2345 = vpop.f32.mrb[0].mxu0
        %v2346 = vadd.f32 0.0, %v2345
        %v2347 = vpop.f32.mrb[0].mxu0
        %2348 = vdwg.mxu0
        %v2350 = vsel %vm698, %v332, 0
        %v2353 = vsel %vm698, %v333, 0
        %v2356 = vsel %vm698, %v334, 0
        %v2359 = vsel %vm698, %v335, 0
        %2361 = vmatprep.subr.mxu0 0.0
        %2362 = vmatpush1.msra.mxu0 %v1806
        %2363 = vmatprep.subr.mxu0 0.0
        %2364 = vmatpush1.msra.mxu0 %v1811
        %2365 = vmatprep.subr.mxu0 0.0
        %2366 = vmatpush1.msra.mxu0 %v1816
        %2367 = vmatprep.subr.mxu0 0.0
        %2368 = vmatpush1.msra.mxu0 %v1821
        %2369 = vmatprep.subr.mxu0 0.0
        %2370 = vmatpush1.msra.mxu0 0.0
        %2371 = vmatprep.subr.mxu0 0.0
        %2372 = vmatpush1.msra.mxu0 0.0
        %2373 = vmatprep.subr.mxu0 0.0
        %2374 = vmatpush1.msra.mxu0 0.0
        %2375 = vmatprep.subr.mxu0 0.0
        %2376 = vmatpush1.msra.mxu0 0.0
        %2377 = vmatprep.subr.mxu0 0.0
        %2378 = vmatpush1.msra.mxu0 0.0
        %2379 = vmatprep.subr.mxu0 0.0
        %2380 = vmatpush1.msra.mxu0 0.0
        %2381 = vmatprep.subr.mxu0 0.0
        %2382 = vmatpush1.msra.mxu0 0.0
        %2383 = vmatprep.subr.mxu0 0.0
        %2384 = vmatpush1.msra.mxu0 0.0
        %2385 = vmatprep.subr.mxu0 0.0
        %2386 = vmatpush1.msra.mxu0 0.0
        %2387 = vmatprep.subr.mxu0 0.0
        %2388 = vmatpush1.msra.mxu0 0.0
        %2389 = vmatprep.subr.mxu0 0.0
        %2390 = vmatpush1.msra.mxu0 0.0
        %2391 = vmatprep.subr.mxu0 0.0
        %2392 = vmatpush1.msra.mxu0 0.0
        %2393 = vmatprep.subr.mxu0 0.0
        %2394 = vmatpush1.msra.mxu0 0.0
        %2395 = vmatprep.subr.mxu0 0.0
        %2396 = vmatpush1.msra.mxu0 0.0
        %2397 = vmatprep.subr.mxu0 0.0
        %2398 = vmatpush1.msra.mxu0 0.0
        %2399 = vmatprep.subr.mxu0 0.0
        %2400 = vmatpush1.msra.mxu0 0.0
        %2401 = vmatprep.subr.mxu0 0.0
        %2402 = vmatpush1.msra.mxu0 0.0
        %2403 = vmatprep.subr.mxu0 0.0
        %2404 = vmatpush1.msra.mxu0 0.0
        %2405 = vmatprep.subr.mxu0 0.0
        %2406 = vmatpush1.msra.mxu0 0.0
        %2407 = vmatprep.subr.mxu0 0.0
        %2408 = vmatpush1.msra.mxu0 0.0
        %2409 = vmatprep.subr.mxu0 0.0
        %2410 = vmatpush1.msra.mxu0 0.0
        %2411 = vmatprep.subr.mxu0 0.0
        %2412 = vmatpush1.msra.mxu0 0.0
        %2413 = vmatprep.subr.mxu0 0.0
        %2414 = vmatpush1.msra.mxu0 0.0
        %2415 = vmatprep.subr.mxu0 0.0
        %2416 = vmatpush1.msra.mxu0 0.0
        %2417 = vmatprep.subr.mxu0 0.0
        %2418 = vmatpush1.msra.mxu0 0.0
        %2419 = vmatprep.subr.mxu0 0.0
        %2420 = vmatpush1.msra.mxu0 0.0
        %2421 = vmatprep.subr.mxu0 0.0
        %2422 = vmatpush1.msra.mxu0 0.0
        %2423 = vmatprep.subr.mxu0 0.0
        %2424 = vmatpush1.msra.mxu0 0.0
        %2425 = vmatprep.mubr.f32.mxu0 0.0
        %2426 = vmatmul.mubr.f32.gmra.mrb[0].mxu0 %v2350
        %v2427 = vpop.f32.mrb[0].mxu0
        %v2428 = vadd.f32 0.0, %v2427
        %v2429 = vpop.f32.mrb[0].mxu0
        %2430 = vmatprep.mubr.f32.mxu0 0.0
        %2431 = vmatmul.mubr.f32.gmra.mrb[0].mxu0 %v2353
        %v2432 = vpop.f32.mrb[0].mxu0
        %v2433 = vadd.f32 0.0, %v2432
        %v2434 = vpop.f32.mrb[0].mxu0
        %2435 = vmatprep.mubr.f32.mxu0 0.0
        %2436 = vmatmul.mubr.f32.gmra.mrb[0].mxu0 %v2356
        %v2437 = vpop.f32.mrb[0].mxu0
        %v2438 = vadd.f32 0.0, %v2437
        %v2439 = vpop.f32.mrb[0].mxu0
        %2440 = vmatprep.mubr.f32.mxu0 0.0
        %2441 = vmatmul.mubr.f32.gmra.mrb[0].mxu0 %v2359
        %v2442 = vpop.f32.mrb[0].mxu0
        %v2443 = vadd.f32 0.0, %v2442
        %v2444 = vpop.f32.mrb[0].mxu0
        %2445 = vdwg.mxu0
        %v2447 = vsel %vm698, %v336, 0
        %v2450 = vsel %vm698, %v337, 0
        %v2453 = vsel %vm698, %v338, 0
        %v2456 = vsel %vm698, %v339, 0
        %2458 = vmatprep.subr.mxu0 0.0
        %2459 = vmatpush1.msra.mxu0 %v1826
        %2460 = vmatprep.subr.mxu0 0.0
        %2461 = vmatpush1.msra.mxu0 %v1831
        %2462 = vmatprep.subr.mxu0 0.0
        %2463 = vmatpush1.msra.mxu0 %v1836
        %2464 = vmatprep.subr.mxu0 0.0
        %2465 = vmatpush1.msra.mxu0 %v1841
        %2466 = vmatprep.subr.mxu0 0.0
        %2467 = vmatpush1.msra.mxu0 0.0
        %2468 = vmatprep.subr.mxu0 0.0
        %2469 = vmatpush1.msra.mxu0 0.0
        %2470 = vmatprep.subr.mxu0 0.0
        %2471 = vmatpush1.msra.mxu0 0.0
        %2472 = vmatprep.subr.mxu0 0.0
        %2473 = vmatpush1.msra.mxu0 0.0
        %2474 = vmatprep.subr.mxu0 0.0
        %2475 = vmatpush1.msra.mxu0 0.0
        %2476 = vmatprep.subr.mxu0 0.0
        %2477 = vmatpush1.msra.mxu0 0.0
        %2478 = vmatprep.subr.mxu0 0.0
        %2479 = vmatpush1.msra.mxu0 0.0
        %2480 = vmatprep.subr.mxu0 0.0
        %2481 = vmatpush1.msra.mxu0 0.0
        %2482 = vmatprep.subr.mxu0 0.0
        %2483 = vmatpush1.msra.mxu0 0.0
        %2484 = vmatprep.subr.mxu0 0.0
        %2485 = vmatpush1.msra.mxu0 0.0
        %2486 = vmatprep.subr.mxu0 0.0
        %2487 = vmatpush1.msra.mxu0 0.0
        %2488 = vmatprep.subr.mxu0 0.0
        %2489 = vmatpush1.msra.mxu0 0.0
        %2490 = vmatprep.subr.mxu0 0.0
        %2491 = vmatpush1.msra.mxu0 0.0
        %2492 = vmatprep.subr.mxu0 0.0
        %2493 = vmatpush1.msra.mxu0 0.0
        %2494 = vmatprep.subr.mxu0 0.0
        %2495 = vmatpush1.msra.mxu0 0.0
        %2496 = vmatprep.subr.mxu0 0.0
        %2497 = vmatpush1.msra.mxu0 0.0
        %2498 = vmatprep.subr.mxu0 0.0
        %2499 = vmatpush1.msra.mxu0 0.0
        %2500 = vmatprep.subr.mxu0 0.0
        %2501 = vmatpush1.msra.mxu0 0.0
        %2502 = vmatprep.subr.mxu0 0.0
        %2503 = vmatpush1.msra.mxu0 0.0
        %2504 = vmatprep.subr.mxu0 0.0
        %2505 = vmatpush1.msra.mxu0 0.0
        %2506 = vmatprep.subr.mxu0 0.0
        %2507 = vmatpush1.msra.mxu0 0.0
        %2508 = vmatprep.subr.mxu0 0.0
        %2509 = vmatpush1.msra.mxu0 0.0
        %2510 = vmatprep.subr.mxu0 0.0
        %2511 = vmatpush1.msra.mxu0 0.0
        %2512 = vmatprep.subr.mxu0 0.0
        %2513 = vmatpush1.msra.mxu0 0.0
        %2514 = vmatprep.subr.mxu0 0.0
        %2515 = vmatpush1.msra.mxu0 0.0
        %2516 = vmatprep.subr.mxu0 0.0
        %2517 = vmatpush1.msra.mxu0 0.0
        %2518 = vmatprep.subr.mxu0 0.0
        %2519 = vmatpush1.msra.mxu0 0.0
        %2520 = vmatprep.subr.mxu0 0.0
        %2521 = vmatpush1.msra.mxu0 0.0
        %2522 = vmatprep.mubr.f32.mxu0 0.0
        %2523 = vmatmul.mubr.f32.gmra.mrb[0].mxu0 %v2447
        %v2524 = vpop.f32.mrb[0].mxu0
        %v2525 = vadd.f32 0.0, %v2524
        %v2526 = vpop.f32.mrb[0].mxu0
        %2527 = vmatprep.mubr.f32.mxu0 0.0
        %2528 = vmatmul.mubr.f32.gmra.mrb[0].mxu0 %v2450
        %v2529 = vpop.f32.mrb[0].mxu0
        %v2530 = vadd.f32 0.0, %v2529
        %v2531 = vpop.f32.mrb[0].mxu0
        %2532 = vmatprep.mubr.f32.mxu0 0.0
        %2533 = vmatmul.mubr.f32.gmra.mrb[0].mxu0 %v2453
        %v2534 = vpop.f32.mrb[0].mxu0
        %v2535 = vadd.f32 0.0, %v2534
        %v2536 = vpop.f32.mrb[0].mxu0
        %2537 = vmatprep.mubr.f32.mxu0 0.0
        %2538 = vmatmul.mubr.f32.gmra.mrb[0].mxu0 %v2456
        %v2539 = vpop.f32.mrb[0].mxu0
        %v2540 = vadd.f32 0.0, %v2539
        %v2541 = vpop.f32.mrb[0].mxu0
        %2542 = vdwg.mxu0
        %v2544 = vsel %vm698, %v340, 0
        %v2547 = vsel %vm698, %v341, 0
        %v2550 = vsel %vm698, %v342, 0
        %v2553 = vsel %vm698, %v343, 0
        %2555 = vmatprep.subr.mxu0 0.0
        %2556 = vmatpush1.msra.mxu0 %v1846
        %2557 = vmatprep.subr.mxu0 0.0
        %2558 = vmatpush1.msra.mxu0 %v1851
        %2559 = vmatprep.subr.mxu0 0.0
        %2560 = vmatpush1.msra.mxu0 %v1856
        %2561 = vmatprep.subr.mxu0 0.0
        %2562 = vmatpush1.msra.mxu0 %v1861
        %2563 = vmatprep.subr.mxu0 0.0
        %2564 = vmatpush1.msra.mxu0 0.0
        %2565 = vmatprep.subr.mxu0 0.0
        %2566 = vmatpush1.msra.mxu0 0.0
        %2567 = vmatprep.subr.mxu0 0.0
        %2568 = vmatpush1.msra.mxu0 0.0
        %2569 = vmatprep.subr.mxu0 0.0
        %2570 = vmatpush1.msra.mxu0 0.0
        %2571 = vmatprep.subr.mxu0 0.0
        %2572 = vmatpush1.msra.mxu0 0.0
        %2573 = vmatprep.subr.mxu0 0.0
        %2574 = vmatpush1.msra.mxu0 0.0
        %2575 = vmatprep.subr.mxu0 0.0
        %2576 = vmatpush1.msra.mxu0 0.0
        %2577 = vmatprep.subr.mxu0 0.0
        %2578 = vmatpush1.msra.mxu0 0.0
        %2579 = vmatprep.subr.mxu0 0.0
        %2580 = vmatpush1.msra.mxu0 0.0
        %2581 = vmatprep.subr.mxu0 0.0
        %2582 = vmatpush1.msra.mxu0 0.0
        %2583 = vmatprep.subr.mxu0 0.0
        %2584 = vmatpush1.msra.mxu0 0.0
        %2585 = vmatprep.subr.mxu0 0.0
        %2586 = vmatpush1.msra.mxu0 0.0
        %2587 = vmatprep.subr.mxu0 0.0
        %2588 = vmatpush1.msra.mxu0 0.0
        %2589 = vmatprep.subr.mxu0 0.0
        %2590 = vmatpush1.msra.mxu0 0.0
        %2591 = vmatprep.subr.mxu0 0.0
        %2592 = vmatpush1.msra.mxu0 0.0
        %2593 = vmatprep.subr.mxu0 0.0
        %2594 = vmatpush1.msra.mxu0 0.0
        %2595 = vmatprep.subr.mxu0 0.0
        %2596 = vmatpush1.msra.mxu0 0.0
        %2597 = vmatprep.subr.mxu0 0.0
        %2598 = vmatpush1.msra.mxu0 0.0
        %2599 = vmatprep.subr.mxu0 0.0
        %2600 = vmatpush1.msra.mxu0 0.0
        %2601 = vmatprep.subr.mxu0 0.0
        %2602 = vmatpush1.msra.mxu0 0.0
        %2603 = vmatprep.subr.mxu0 0.0
        %2604 = vmatpush1.msra.mxu0 0.0
        %2605 = vmatprep.subr.mxu0 0.0
        %2606 = vmatpush1.msra.mxu0 0.0
        %2607 = vmatprep.subr.mxu0 0.0
        %2608 = vmatpush1.msra.mxu0 0.0
        %2609 = vmatprep.subr.mxu0 0.0
        %2610 = vmatpush1.msra.mxu0 0.0
        %2611 = vmatprep.subr.mxu0 0.0
        %2612 = vmatpush1.msra.mxu0 0.0
        %2613 = vmatprep.subr.mxu0 0.0
        %2614 = vmatpush1.msra.mxu0 0.0
        %2615 = vmatprep.subr.mxu0 0.0
        %2616 = vmatpush1.msra.mxu0 0.0
        %2617 = vmatprep.subr.mxu0 0.0
        %2618 = vmatpush1.msra.mxu0 0.0
        %2619 = vmatprep.mubr.f32.mxu0 0.0
        %2620 = vmatmul.mubr.f32.gmra.mrb[0].mxu0 %v2544
        %v2621 = vpop.f32.mrb[0].mxu0
        %v2622 = vadd.f32 0.0, %v2621
        %v2623 = vpop.f32.mrb[0].mxu0
        %2624 = vmatprep.mubr.f32.mxu0 0.0
        %2625 = vmatmul.mubr.f32.gmra.mrb[0].mxu0 %v2547
        %v2626 = vpop.f32.mrb[0].mxu0
        %v2627 = vadd.f32 0.0, %v2626
        %v2628 = vpop.f32.mrb[0].mxu0
        %2629 = vmatprep.mubr.f32.mxu0 0.0
        %2630 = vmatmul.mubr.f32.gmra.mrb[0].mxu0 %v2550
        %v2631 = vpop.f32.mrb[0].mxu0
        %v2632 = vadd.f32 0.0, %v2631
        %v2633 = vpop.f32.mrb[0].mxu0
        %2634 = vmatprep.mubr.f32.mxu0 0.0
        %2635 = vmatmul.mubr.f32.gmra.mrb[0].mxu0 %v2553
        %v2636 = vpop.f32.mrb[0].mxu0
        %v2637 = vadd.f32 0.0, %v2636
        %v2638 = vpop.f32.mrb[0].mxu0
        %2639 = vdwg.mxu0
        %v2640 = vlaneseq
        %v2641 = vshrl.u32 %v2640, 7
        %v2642 = vsub.s32 0, %v2641
        %v2643 = vrot.slane %v273, %v2642
        %v2644 = vadd.f32 %v1943, %v2643
        %v2645 = vadd.f32 %v1948, %v2643
        %v2646 = vadd.f32 %v1953, %v2643
        %v2647 = vadd.f32 %v1958, %v2643
        %v2648 = vadd.f32 %v2040, %v2643
        %v2649 = vadd.f32 %v2045, %v2643
        %v2650 = vadd.f32 %v2050, %v2643
        %v2651 = vadd.f32 %v2055, %v2643
        %v2652 = vadd.f32 %v2137, %v2643
        %v2653 = vadd.f32 %v2142, %v2643
        %v2654 = vadd.f32 %v2147, %v2643
        %v2655 = vadd.f32 %v2152, %v2643
        %v2656 = vadd.f32 %v2234, %v2643
        %v2657 = vadd.f32 %v2239, %v2643
        %v2658 = vadd.f32 %v2244, %v2643
        %v2659 = vadd.f32 %v2249, %v2643
        %v2660 = vadd.f32 %v2331, %v2643
        %v2661 = vadd.f32 %v2336, %v2643
        %v2662 = vadd.f32 %v2341, %v2643
        %v2663 = vadd.f32 %v2346, %v2643
        %v2664 = vadd.f32 %v2428, %v2643
        %v2665 = vadd.f32 %v2433, %v2643
        %v2666 = vadd.f32 %v2438, %v2643
        %v2667 = vadd.f32 %v2443, %v2643
        %v2668 = vadd.f32 %v2525, %v2643
        %v2669 = vadd.f32 %v2530, %v2643
        %v2670 = vadd.f32 %v2535, %v2643
        %v2671 = vadd.f32 %v2540, %v2643
        %v2672 = vadd.f32 %v2622, %v2643
        %v2673 = vadd.f32 %v2627, %v2643
        %v2674 = vadd.f32 %v2632, %v2643
        %v2675 = vadd.f32 %v2637, %v2643
        %v2676 = vmax.f32 %v2644, 0.0
        %v2677 = vmax.f32 %v2645, 0.0
        %v2678 = vmax.f32 %v2646, 0.0
        %v2679 = vmax.f32 %v2647, 0.0
        %v2680 = vmax.f32 %v2648, 0.0
        %v2681 = vmax.f32 %v2649, 0.0
        %v2682 = vmax.f32 %v2650, 0.0
        %v2683 = vmax.f32 %v2651, 0.0
        %v2684 = vmax.f32 %v2652, 0.0
        %v2685 = vmax.f32 %v2653, 0.0
        %v2686 = vmax.f32 %v2654, 0.0
        %v2687 = vmax.f32 %v2655, 0.0
        %v2688 = vmax.f32 %v2656, 0.0
        %v2689 = vmax.f32 %v2657, 0.0
        %v2690 = vmax.f32 %v2658, 0.0
        %v2691 = vmax.f32 %v2659, 0.0
        %v2692 = vmax.f32 %v2660, 0.0
        %v2693 = vmax.f32 %v2661, 0.0
        %v2694 = vmax.f32 %v2662, 0.0
        %v2695 = vmax.f32 %v2663, 0.0
        %v2696 = vmax.f32 %v2664, 0.0
        %v2697 = vmax.f32 %v2665, 0.0
        %v2698 = vmax.f32 %v2666, 0.0
        %v2699 = vmax.f32 %v2667, 0.0
        %v2700 = vmax.f32 %v2668, 0.0
        %v2701 = vmax.f32 %v2669, 0.0
        %v2702 = vmax.f32 %v2670, 0.0
        %v2703 = vmax.f32 %v2671, 0.0
        %v2704 = vmax.f32 %v2672, 0.0
        %v2705 = vmax.f32 %v2673, 0.0
        %v2706 = vmax.f32 %v2674, 0.0
        %v2707 = vmax.f32 %v2675, 0.0
        %v2709 = vsel %vm698, %v2676, 0
        %v2712 = vsel %vm698, %v2677, 0
        %v2715 = vsel %vm698, %v2678, 0
        %v2718 = vsel %vm698, %v2679, 0
        %v2721 = vsel %vm698, %v2680, 0
        %v2724 = vsel %vm698, %v2681, 0
        %v2727 = vsel %vm698, %v2682, 0
        %v2730 = vsel %vm698, %v2683, 0
        %v2733 = vsel %vm698, %v2684, 0
        %v2736 = vsel %vm698, %v2685, 0
        %v2739 = vsel %vm698, %v2686, 0
        %v2742 = vsel %vm698, %v2687, 0
        %v2745 = vsel %vm698, %v2688, 0
        %v2748 = vsel %vm698, %v2689, 0
        %v2751 = vsel %vm698, %v2690, 0
        %v2754 = vsel %vm698, %v2691, 0
        %v2757 = vsel %vm698, %v2692, 0
        %v2760 = vsel %vm698, %v2693, 0
        %v2763 = vsel %vm698, %v2694, 0
        %v2766 = vsel %vm698, %v2695, 0
        %v2769 = vsel %vm698, %v2696, 0
        %v2772 = vsel %vm698, %v2697, 0
        %v2775 = vsel %vm698, %v2698, 0
        %v2778 = vsel %vm698, %v2699, 0
        %v2781 = vsel %vm698, %v2700, 0
        %v2784 = vsel %vm698, %v2701, 0
        %v2787 = vsel %vm698, %v2702, 0
        %v2790 = vsel %vm698, %v2703, 0
        %v2793 = vsel %vm698, %v2704, 0
        %v2796 = vsel %vm698, %v2705, 0
        %v2799 = vsel %vm698, %v2706, 0
        %v2802 = vsel %vm698, %v2707, 0
        %2804 = vmatprep.subr.mxu0 0.0
        %2805 = vmatpush1.msra.mxu0 %v269
        %2806 = vmatprep.subr.mxu0 0.0
        %2807 = vmatpush1.msra.mxu0 %v270
        %2808 = vmatprep.subr.mxu0 0.0
        %2809 = vmatpush1.msra.mxu0 %v271
        %2810 = vmatprep.subr.mxu0 0.0
        %2811 = vmatpush1.msra.mxu0 %v272
        %2812 = vmatprep.subr.mxu0 0.0
        %2813 = vmatpush1.msra.mxu0 0.0
        %2814 = vmatprep.subr.mxu0 0.0
        %2815 = vmatpush1.msra.mxu0 0.0
        %2816 = vmatprep.subr.mxu0 0.0
        %2817 = vmatpush1.msra.mxu0 0.0
        %2818 = vmatprep.subr.mxu0 0.0
        %2819 = vmatpush1.msra.mxu0 0.0
        %2820 = vmatprep.subr.mxu0 0.0
        %2821 = vmatpush1.msra.mxu0 0.0
        %2822 = vmatprep.subr.mxu0 0.0
        %2823 = vmatpush1.msra.mxu0 0.0
        %2824 = vmatprep.subr.mxu0 0.0
        %2825 = vmatpush1.msra.mxu0 0.0
        %2826 = vmatprep.subr.mxu0 0.0
        %2827 = vmatpush1.msra.mxu0 0.0
        %2828 = vmatprep.subr.mxu0 0.0
        %2829 = vmatpush1.msra.mxu0 0.0
        %2830 = vmatprep.subr.mxu0 0.0
        %2831 = vmatpush1.msra.mxu0 0.0
        %2832 = vmatprep.subr.mxu0 0.0
        %2833 = vmatpush1.msra.mxu0 0.0
        %2834 = vmatprep.subr.mxu0 0.0
        %2835 = vmatpush1.msra.mxu0 0.0
        %2836 = vmatprep.subr.mxu0 0.0
        %2837 = vmatpush1.msra.mxu0 0.0
        %2838 = vmatprep.subr.mxu0 0.0
        %2839 = vmatpush1.msra.mxu0 0.0
        %2840 = vmatprep.subr.mxu0 0.0
        %2841 = vmatpush1.msra.mxu0 0.0
        %2842 = vmatprep.subr.mxu0 0.0
        %2843 = vmatpush1.msra.mxu0 0.0
        %2844 = vmatprep.subr.mxu0 0.0
        %2845 = vmatpush1.msra.mxu0 0.0
        %2846 = vmatprep.subr.mxu0 0.0
        %2847 = vmatpush1.msra.mxu0 0.0
        %2848 = vmatprep.subr.mxu0 0.0
        %2849 = vmatpush1.msra.mxu0 0.0
        %2850 = vmatprep.subr.mxu0 0.0
        %2851 = vmatpush1.msra.mxu0 0.0
        %2852 = vmatprep.subr.mxu0 0.0
        %2853 = vmatpush1.msra.mxu0 0.0
        %2854 = vmatprep.subr.mxu0 0.0
        %2855 = vmatpush1.msra.mxu0 0.0
        %2856 = vmatprep.subr.mxu0 0.0
        %2857 = vmatpush1.msra.mxu0 0.0
        %2858 = vmatprep.subr.mxu0 0.0
        %2859 = vmatpush1.msra.mxu0 0.0
        %2860 = vmatprep.subr.mxu0 0.0
        %2861 = vmatpush1.msra.mxu0 0.0
        %2862 = vmatprep.subr.mxu0 0.0
        %2863 = vmatpush1.msra.mxu0 0.0
        %2864 = vmatprep.subr.mxu0 0.0
        %2865 = vmatpush1.msra.mxu0 0.0
        %2866 = vmatprep.subr.mxu0 0.0
        %2867 = vmatpush1.msra.mxu0 0.0
        %2868 = vmatprep.mubr.f32.mxu0 0.0
        %2869 = vmatmul.mubr.f32.gmra.mrb[0].mxu0 %v2709
        %v2870 = vpop.f32.mrb[0].mxu0
        %v2871 = vadd.f32 0.0, %v2870
        %v2872 = vpop.f32.mrb[0].mxu0
        %2873 = vmatprep.mubr.f32.mxu0 0.0
        %2874 = vmatmul.mubr.f32.gmra.mrb[0].mxu0 %v2712
        %v2875 = vpop.f32.mrb[0].mxu0
        %v2876 = vadd.f32 0.0, %v2875
        %v2877 = vpop.f32.mrb[0].mxu0
        %2878 = vmatprep.mubr.f32.mxu0 0.0
        %2879 = vmatmul.mubr.f32.gmra.mrb[0].mxu0 %v2715
        %v2880 = vpop.f32.mrb[0].mxu0
        %v2881 = vadd.f32 0.0, %v2880
        %v2882 = vpop.f32.mrb[0].mxu0
        %2883 = vmatprep.mubr.f32.mxu0 0.0
        %2884 = vmatmul.mubr.f32.gmra.mrb[0].mxu0 %v2718
        %v2885 = vpop.f32.mrb[0].mxu0
        %v2886 = vadd.f32 0.0, %v2885
        %v2887 = vpop.f32.mrb[0].mxu0
        %2888 = vmatprep.mubr.f32.mxu0 0.0
        %2889 = vmatmul.mubr.f32.gmra.mrb[0].mxu0 %v2721
        %v2890 = vpop.f32.mrb[0].mxu0
        %v2891 = vadd.f32 0.0, %v2890
        %v2892 = vpop.f32.mrb[0].mxu0
        %2893 = vmatprep.mubr.f32.mxu0 0.0
        %2894 = vmatmul.mubr.f32.gmra.mrb[0].mxu0 %v2724
        %v2895 = vpop.f32.mrb[0].mxu0
        %v2896 = vadd.f32 0.0, %v2895
        %v2897 = vpop.f32.mrb[0].mxu0
        %2898 = vmatprep.mubr.f32.mxu0 0.0
        %2899 = vmatmul.mubr.f32.gmra.mrb[0].mxu0 %v2727
        %v2900 = vpop.f32.mrb[0].mxu0
        %v2901 = vadd.f32 0.0, %v2900
        %v2902 = vpop.f32.mrb[0].mxu0
        %2903 = vmatprep.mubr.f32.mxu0 0.0
        %2904 = vmatmul.mubr.f32.gmra.mrb[0].mxu0 %v2730
        %v2905 = vpop.f32.mrb[0].mxu0
        %v2906 = vadd.f32 0.0, %v2905
        %v2907 = vpop.f32.mrb[0].mxu0
        %2908 = vmatprep.mubr.f32.mxu0 0.0
        %2909 = vmatmul.mubr.f32.gmra.mrb[0].mxu0 %v2733
        %v2910 = vpop.f32.mrb[0].mxu0
        %v2911 = vadd.f32 0.0, %v2910
        %v2912 = vpop.f32.mrb[0].mxu0
        %2913 = vmatprep.mubr.f32.mxu0 0.0
        %2914 = vmatmul.mubr.f32.gmra.mrb[0].mxu0 %v2736
        %v2915 = vpop.f32.mrb[0].mxu0
        %v2916 = vadd.f32 0.0, %v2915
        %v2917 = vpop.f32.mrb[0].mxu0
        %2918 = vmatprep.mubr.f32.mxu0 0.0
        %2919 = vmatmul.mubr.f32.gmra.mrb[0].mxu0 %v2739
        %v2920 = vpop.f32.mrb[0].mxu0
        %v2921 = vadd.f32 0.0, %v2920
        %v2922 = vpop.f32.mrb[0].mxu0
        %2923 = vmatprep.mubr.f32.mxu0 0.0
        %2924 = vmatmul.mubr.f32.gmra.mrb[0].mxu0 %v2742
        %v2925 = vpop.f32.mrb[0].mxu0
        %v2926 = vadd.f32 0.0, %v2925
        %v2927 = vpop.f32.mrb[0].mxu0
        %2928 = vmatprep.mubr.f32.mxu0 0.0
        %2929 = vmatmul.mubr.f32.gmra.mrb[0].mxu0 %v2745
        %v2930 = vpop.f32.mrb[0].mxu0
        %v2931 = vadd.f32 0.0, %v2930
        %v2932 = vpop.f32.mrb[0].mxu0
        %2933 = vmatprep.mubr.f32.mxu0 0.0
        %2934 = vmatmul.mubr.f32.gmra.mrb[0].mxu0 %v2748
        %v2935 = vpop.f32.mrb[0].mxu0
        %v2936 = vadd.f32 0.0, %v2935
        %v2937 = vpop.f32.mrb[0].mxu0
        %2938 = vmatprep.mubr.f32.mxu0 0.0
        %2939 = vmatmul.mubr.f32.gmra.mrb[0].mxu0 %v2751
        %v2940 = vpop.f32.mrb[0].mxu0
        %v2941 = vadd.f32 0.0, %v2940
        %v2942 = vpop.f32.mrb[0].mxu0
        %2943 = vmatprep.mubr.f32.mxu0 0.0
        %2944 = vmatmul.mubr.f32.gmra.mrb[0].mxu0 %v2754
        %v2945 = vpop.f32.mrb[0].mxu0
        %v2946 = vadd.f32 0.0, %v2945
        %v2947 = vpop.f32.mrb[0].mxu0
        %2948 = vmatprep.mubr.f32.mxu0 0.0
        %2949 = vmatmul.mubr.f32.gmra.mrb[0].mxu0 %v2757
        %v2950 = vpop.f32.mrb[0].mxu0
        %v2951 = vadd.f32 0.0, %v2950
        %v2952 = vpop.f32.mrb[0].mxu0
        %2953 = vmatprep.mubr.f32.mxu0 0.0
        %2954 = vmatmul.mubr.f32.gmra.mrb[0].mxu0 %v2760
        %v2955 = vpop.f32.mrb[0].mxu0
        %v2956 = vadd.f32 0.0, %v2955
        %v2957 = vpop.f32.mrb[0].mxu0
        %2958 = vmatprep.mubr.f32.mxu0 0.0
        %2959 = vmatmul.mubr.f32.gmra.mrb[0].mxu0 %v2763
        %v2960 = vpop.f32.mrb[0].mxu0
        %v2961 = vadd.f32 0.0, %v2960
        %v2962 = vpop.f32.mrb[0].mxu0
        %2963 = vmatprep.mubr.f32.mxu0 0.0
        %2964 = vmatmul.mubr.f32.gmra.mrb[0].mxu0 %v2766
        %v2965 = vpop.f32.mrb[0].mxu0
        %v2966 = vadd.f32 0.0, %v2965
        %v2967 = vpop.f32.mrb[0].mxu0
        %2968 = vmatprep.mubr.f32.mxu0 0.0
        %2969 = vmatmul.mubr.f32.gmra.mrb[0].mxu0 %v2769
        %v2970 = vpop.f32.mrb[0].mxu0
        %v2971 = vadd.f32 0.0, %v2970
        %v2972 = vpop.f32.mrb[0].mxu0
        %2973 = vmatprep.mubr.f32.mxu0 0.0
        %2974 = vmatmul.mubr.f32.gmra.mrb[0].mxu0 %v2772
        %v2975 = vpop.f32.mrb[0].mxu0
        %v2976 = vadd.f32 0.0, %v2975
        %v2977 = vpop.f32.mrb[0].mxu0
        %2978 = vmatprep.mubr.f32.mxu0 0.0
        %2979 = vmatmul.mubr.f32.gmra.mrb[0].mxu0 %v2775
        %v2980 = vpop.f32.mrb[0].mxu0
        %v2981 = vadd.f32 0.0, %v2980
        %v2982 = vpop.f32.mrb[0].mxu0
        %2983 = vmatprep.mubr.f32.mxu0 0.0
        %2984 = vmatmul.mubr.f32.gmra.mrb[0].mxu0 %v2778
        %v2985 = vpop.f32.mrb[0].mxu0
        %v2986 = vadd.f32 0.0, %v2985
        %v2987 = vpop.f32.mrb[0].mxu0
        %2988 = vmatprep.mubr.f32.mxu0 0.0
        %2989 = vmatmul.mubr.f32.gmra.mrb[0].mxu0 %v2781
        %v2990 = vpop.f32.mrb[0].mxu0
        %v2991 = vadd.f32 0.0, %v2990
        %v2992 = vpop.f32.mrb[0].mxu0
        %2993 = vmatprep.mubr.f32.mxu0 0.0
        %2994 = vmatmul.mubr.f32.gmra.mrb[0].mxu0 %v2784
        %v2995 = vpop.f32.mrb[0].mxu0
        %v2996 = vadd.f32 0.0, %v2995
        %v2997 = vpop.f32.mrb[0].mxu0
        %2998 = vmatprep.mubr.f32.mxu0 0.0
        %2999 = vmatmul.mubr.f32.gmra.mrb[0].mxu0 %v2787
        %v3000 = vpop.f32.mrb[0].mxu0
        %v3001 = vadd.f32 0.0, %v3000
        %v3002 = vpop.f32.mrb[0].mxu0
        %3003 = vmatprep.mubr.f32.mxu0 0.0
        %3004 = vmatmul.mubr.f32.gmra.mrb[0].mxu0 %v2790
        %v3005 = vpop.f32.mrb[0].mxu0
        %v3006 = vadd.f32 0.0, %v3005
        %v3007 = vpop.f32.mrb[0].mxu0
        %3008 = vmatprep.mubr.f32.mxu0 0.0
        %3009 = vmatmul.mubr.f32.gmra.mrb[0].mxu0 %v2793
        %v3010 = vpop.f32.mrb[0].mxu0
        %v3011 = vadd.f32 0.0, %v3010
        %v3012 = vpop.f32.mrb[0].mxu0
        %3013 = vmatprep.mubr.f32.mxu0 0.0
        %3014 = vmatmul.mubr.f32.gmra.mrb[0].mxu0 %v2796
        %v3015 = vpop.f32.mrb[0].mxu0
        %v3016 = vadd.f32 0.0, %v3015
        %v3017 = vpop.f32.mrb[0].mxu0
        %3018 = vmatprep.mubr.f32.mxu0 0.0
        %3019 = vmatmul.mubr.f32.gmra.mrb[0].mxu0 %v2799
        %v3020 = vpop.f32.mrb[0].mxu0
        %v3021 = vadd.f32 0.0, %v3020
        %v3022 = vpop.f32.mrb[0].mxu0
        %3023 = vmatprep.mubr.f32.mxu0 0.0
        %3024 = vmatmul.mubr.f32.gmra.mrb[0].mxu0 %v2802
        %v3025 = vpop.f32.mrb[0].mxu0
        %v3026 = vadd.f32 0.0, %v3025
        %v3027 = vpop.f32.mrb[0].mxu0
        %3028 = vdwg.mxu0
        %3029 = vmatprep.subr.mxu0 0.0
        %3030 = vmatpush1.msra.mxu0 %v2871
        %3031 = vmatprep.subr.mxu0 0.0
        %3032 = vmatpush1.msra.mxu0 %v2876
        %3033 = vmatprep.subr.mxu0 0.0
        %3034 = vmatpush1.msra.mxu0 %v2881
        %3035 = vmatprep.subr.mxu0 0.0
        %3036 = vmatpush1.msra.mxu0 %v2886
        %3037 = vmatprep.subr.mxu0 0.0
        %3038 = vmatpush1.msra.mxu0 0.0
        %3039 = vmatprep.subr.mxu0 0.0
        %3040 = vmatpush1.msra.mxu0 0.0
        %3041 = vmatprep.subr.mxu0 0.0
        %3042 = vmatpush1.msra.mxu0 0.0
        %3043 = vmatprep.subr.mxu0 0.0
        %3044 = vmatpush1.msra.mxu0 0.0
        %3045 = vmatprep.subr.mxu0 0.0
        %3046 = vmatpush1.msra.mxu0 0.0
        %3047 = vmatprep.subr.mxu0 0.0
        %3048 = vmatpush1.msra.mxu0 0.0
        %3049 = vmatprep.subr.mxu0 0.0
        %3050 = vmatpush1.msra.mxu0 0.0
        %3051 = vmatprep.subr.mxu0 0.0
        %3052 = vmatpush1.msra.mxu0 0.0
        %3053 = vmatprep.subr.mxu0 0.0
        %3054 = vmatpush1.msra.mxu0 0.0
        %3055 = vmatprep.subr.mxu0 0.0
        %3056 = vmatpush1.msra.mxu0 0.0
        %3057 = vmatprep.subr.mxu0 0.0
        %3058 = vmatpush1.msra.mxu0 0.0
        %3059 = vmatprep.subr.mxu0 0.0
        %3060 = vmatpush1.msra.mxu0 0.0
        %3061 = vmatprep.subr.mxu0 0.0
        %3062 = vmatpush1.msra.mxu0 0.0
        %3063 = vmatprep.subr.mxu0 0.0
        %3064 = vmatpush1.msra.mxu0 0.0
        %3065 = vmatprep.subr.mxu0 0.0
        %3066 = vmatpush1.msra.mxu0 0.0
        %3067 = vmatprep.subr.mxu0 0.0
        %3068 = vmatpush1.msra.mxu0 0.0
        %3069 = vmatprep.subr.mxu0 0.0
        %3070 = vmatpush1.msra.mxu0 0.0
        %3071 = vmatprep.subr.mxu0 0.0
        %3072 = vmatpush1.msra.mxu0 0.0
        %3073 = vmatprep.subr.mxu0 0.0
        %3074 = vmatpush1.msra.mxu0 0.0
        %3075 = vmatprep.subr.mxu0 0.0
        %3076 = vmatpush1.msra.mxu0 0.0
        %3077 = vmatprep.subr.mxu0 0.0
        %3078 = vmatpush1.msra.mxu0 0.0
        %3079 = vmatprep.subr.mxu0 0.0
        %3080 = vmatpush1.msra.mxu0 0.0
        %3081 = vmatprep.subr.mxu0 0.0
        %3082 = vmatpush1.msra.mxu0 0.0
        %3083 = vmatprep.subr.mxu0 0.0
        %3084 = vmatpush1.msra.mxu0 0.0
        %3085 = vmatprep.subr.mxu0 0.0
        %3086 = vmatpush1.msra.mxu0 0.0
        %3087 = vmatprep.subr.mxu0 0.0
        %3088 = vmatpush1.msra.mxu0 0.0
        %3089 = vmatprep.subr.mxu0 0.0
        %3090 = vmatpush1.msra.mxu0 0.0
        %3091 = vmatprep.subr.mxu0 0.0
        %3092 = vmatpush1.msra.mxu0 0.0
        %3093 = vmatprep.mubr.f32.mxu0 0.0
        %3094 = vmatmul.mubr.f32.gmra.mrb[0].mxu0 %v1865
        %v3095 = vpop.f32.mrb[0].mxu0
        %v3096 = vpop.f32.mrb[0].mxu0
        %3097 = vmatprep.mubr.f32.mxu0 0.0
        %3098 = vmatmul.mubr.f32.gmra.mrb[0].mxu0 %v1868
        %v3099 = vpop.f32.mrb[0].mxu0
        %v3100 = vadd.f32 0.0, %v3099
        %v3101 = vpop.f32.mrb[0].mxu0
        %3102 = vmatprep.mubr.f32.mxu0 0.0
        %3103 = vmatmul.mubr.f32.gmra.mrb[0].mxu0 %v1871
        %v3104 = vpop.f32.mrb[0].mxu0
        %v3105 = vadd.f32 0.0, %v3104
        %v3106 = vpop.f32.mrb[0].mxu0
        %3107 = vmatprep.mubr.f32.mxu0 0.0
        %3108 = vmatmul.mubr.f32.gmra.mrb[0].mxu0 %v1874
        %v3109 = vpop.f32.mrb[0].mxu0
        %v3110 = vadd.f32 0.0, %v3109
        %v3111 = vpop.f32.mrb[0].mxu0
        %3112 = vdwg.mxu0
        %3113 = vmatprep.subr.mxu0 0.0
        %3114 = vmatpush1.msra.mxu0 %v2891
        %3115 = vmatprep.subr.mxu0 0.0
        %3116 = vmatpush1.msra.mxu0 %v2896
        %3117 = vmatprep.subr.mxu0 0.0
        %3118 = vmatpush1.msra.mxu0 %v2901
        %3119 = vmatprep.subr.mxu0 0.0
        %3120 = vmatpush1.msra.mxu0 %v2906
        %3121 = vmatprep.subr.mxu0 0.0
        %3122 = vmatpush1.msra.mxu0 0.0
        %3123 = vmatprep.subr.mxu0 0.0
        %3124 = vmatpush1.msra.mxu0 0.0
        %3125 = vmatprep.subr.mxu0 0.0
        %3126 = vmatpush1.msra.mxu0 0.0
        %3127 = vmatprep.subr.mxu0 0.0
        %3128 = vmatpush1.msra.mxu0 0.0
        %3129 = vmatprep.subr.mxu0 0.0
        %3130 = vmatpush1.msra.mxu0 0.0
        %3131 = vmatprep.subr.mxu0 0.0
        %3132 = vmatpush1.msra.mxu0 0.0
        %3133 = vmatprep.subr.mxu0 0.0
        %3134 = vmatpush1.msra.mxu0 0.0
        %3135 = vmatprep.subr.mxu0 0.0
        %3136 = vmatpush1.msra.mxu0 0.0
        %3137 = vmatprep.subr.mxu0 0.0
        %3138 = vmatpush1.msra.mxu0 0.0
        %3139 = vmatprep.subr.mxu0 0.0
        %3140 = vmatpush1.msra.mxu0 0.0
        %3141 = vmatprep.subr.mxu0 0.0
        %3142 = vmatpush1.msra.mxu0 0.0
        %3143 = vmatprep.subr.mxu0 0.0
        %3144 = vmatpush1.msra.mxu0 0.0
        %3145 = vmatprep.subr.mxu0 0.0
        %3146 = vmatpush1.msra.mxu0 0.0
        %3147 = vmatprep.subr.mxu0 0.0
        %3148 = vmatpush1.msra.mxu0 0.0
        %3149 = vmatprep.subr.mxu0 0.0
        %3150 = vmatpush1.msra.mxu0 0.0
        %3151 = vmatprep.subr.mxu0 0.0
        %3152 = vmatpush1.msra.mxu0 0.0
        %3153 = vmatprep.subr.mxu0 0.0
        %3154 = vmatpush1.msra.mxu0 0.0
        %3155 = vmatprep.subr.mxu0 0.0
        %3156 = vmatpush1.msra.mxu0 0.0
        %3157 = vmatprep.subr.mxu0 0.0
        %3158 = vmatpush1.msra.mxu0 0.0
        %3159 = vmatprep.subr.mxu0 0.0
        %3160 = vmatpush1.msra.mxu0 0.0
        %3161 = vmatprep.subr.mxu0 0.0
        %3162 = vmatpush1.msra.mxu0 0.0
        %3163 = vmatprep.subr.mxu0 0.0
        %3164 = vmatpush1.msra.mxu0 0.0
        %3165 = vmatprep.subr.mxu0 0.0
        %3166 = vmatpush1.msra.mxu0 0.0
        %3167 = vmatprep.subr.mxu0 0.0
        %3168 = vmatpush1.msra.mxu0 0.0
        %3169 = vmatprep.subr.mxu0 0.0
        %3170 = vmatpush1.msra.mxu0 0.0
        %3171 = vmatprep.subr.mxu0 0.0
        %3172 = vmatpush1.msra.mxu0 0.0
        %3173 = vmatprep.subr.mxu0 0.0
        %3174 = vmatpush1.msra.mxu0 0.0
        %3175 = vmatprep.subr.mxu0 0.0
        %3176 = vmatpush1.msra.mxu0 0.0
        %3177 = vmatprep.mubr.f32.mxu0 0.0
        %3178 = vmatmul.mubr.f32.gmra.mrb[0].mxu0 %v1962
        %v3179 = vpop.f32.mrb[0].mxu0
        %v3180 = vpop.f32.mrb[0].mxu0
        %3181 = vmatprep.mubr.f32.mxu0 0.0
        %3182 = vmatmul.mubr.f32.gmra.mrb[0].mxu0 %v1965
        %v3183 = vpop.f32.mrb[0].mxu0
        %v3184 = vadd.f32 0.0, %v3183
        %v3185 = vpop.f32.mrb[0].mxu0
        %3186 = vmatprep.mubr.f32.mxu0 0.0
        %3187 = vmatmul.mubr.f32.gmra.mrb[0].mxu0 %v1968
        %v3188 = vpop.f32.mrb[0].mxu0
        %v3189 = vadd.f32 0.0, %v3188
        %v3190 = vpop.f32.mrb[0].mxu0
        %3191 = vmatprep.mubr.f32.mxu0 0.0
        %3192 = vmatmul.mubr.f32.gmra.mrb[0].mxu0 %v1971
        %v3193 = vpop.f32.mrb[0].mxu0
        %v3194 = vadd.f32 0.0, %v3193
        %v3195 = vpop.f32.mrb[0].mxu0
        %3196 = vdwg.mxu0
        %3197 = vmatprep.subr.mxu0 0.0
        %3198 = vmatpush1.msra.mxu0 %v2911
        %3199 = vmatprep.subr.mxu0 0.0
        %3200 = vmatpush1.msra.mxu0 %v2916
        %3201 = vmatprep.subr.mxu0 0.0
        %3202 = vmatpush1.msra.mxu0 %v2921
        %3203 = vmatprep.subr.mxu0 0.0
        %3204 = vmatpush1.msra.mxu0 %v2926
        %3205 = vmatprep.subr.mxu0 0.0
        %3206 = vmatpush1.msra.mxu0 0.0
        %3207 = vmatprep.subr.mxu0 0.0
        %3208 = vmatpush1.msra.mxu0 0.0
        %3209 = vmatprep.subr.mxu0 0.0
        %3210 = vmatpush1.msra.mxu0 0.0
        %3211 = vmatprep.subr.mxu0 0.0
        %3212 = vmatpush1.msra.mxu0 0.0
        %3213 = vmatprep.subr.mxu0 0.0
        %3214 = vmatpush1.msra.mxu0 0.0
        %3215 = vmatprep.subr.mxu0 0.0
        %3216 = vmatpush1.msra.mxu0 0.0
        %3217 = vmatprep.subr.mxu0 0.0
        %3218 = vmatpush1.msra.mxu0 0.0
        %3219 = vmatprep.subr.mxu0 0.0
        %3220 = vmatpush1.msra.mxu0 0.0
        %3221 = vmatprep.subr.mxu0 0.0
        %3222 = vmatpush1.msra.mxu0 0.0
        %3223 = vmatprep.subr.mxu0 0.0
        %3224 = vmatpush1.msra.mxu0 0.0
        %3225 = vmatprep.subr.mxu0 0.0
        %3226 = vmatpush1.msra.mxu0 0.0
        %3227 = vmatprep.subr.mxu0 0.0
        %3228 = vmatpush1.msra.mxu0 0.0
        %3229 = vmatprep.subr.mxu0 0.0
        %3230 = vmatpush1.msra.mxu0 0.0
        %3231 = vmatprep.subr.mxu0 0.0
        %3232 = vmatpush1.msra.mxu0 0.0
        %3233 = vmatprep.subr.mxu0 0.0
        %3234 = vmatpush1.msra.mxu0 0.0
        %3235 = vmatprep.subr.mxu0 0.0
        %3236 = vmatpush1.msra.mxu0 0.0
        %3237 = vmatprep.subr.mxu0 0.0
        %3238 = vmatpush1.msra.mxu0 0.0
        %3239 = vmatprep.subr.mxu0 0.0
        %3240 = vmatpush1.msra.mxu0 0.0
        %3241 = vmatprep.subr.mxu0 0.0
        %3242 = vmatpush1.msra.mxu0 0.0
        %3243 = vmatprep.subr.mxu0 0.0
        %3244 = vmatpush1.msra.mxu0 0.0
        %3245 = vmatprep.subr.mxu0 0.0
        %3246 = vmatpush1.msra.mxu0 0.0
        %3247 = vmatprep.subr.mxu0 0.0
        %3248 = vmatpush1.msra.mxu0 0.0
        %3249 = vmatprep.subr.mxu0 0.0
        %3250 = vmatpush1.msra.mxu0 0.0
        %3251 = vmatprep.subr.mxu0 0.0
        %3252 = vmatpush1.msra.mxu0 0.0
        %3253 = vmatprep.subr.mxu0 0.0
        %3254 = vmatpush1.msra.mxu0 0.0
        %3255 = vmatprep.subr.mxu0 0.0
        %3256 = vmatpush1.msra.mxu0 0.0
        %3257 = vmatprep.subr.mxu0 0.0
        %3258 = vmatpush1.msra.mxu0 0.0
        %3259 = vmatprep.subr.mxu0 0.0
        %3260 = vmatpush1.msra.mxu0 0.0
        %3261 = vmatprep.mubr.f32.mxu0 0.0
        %3262 = vmatmul.mubr.f32.gmra.mrb[0].mxu0 %v2059
        %v3263 = vpop.f32.mrb[0].mxu0
        %v3264 = vpop.f32.mrb[0].mxu0
        %3265 = vmatprep.mubr.f32.mxu0 0.0
        %3266 = vmatmul.mubr.f32.gmra.mrb[0].mxu0 %v2062
        %v3267 = vpop.f32.mrb[0].mxu0
        %v3268 = vadd.f32 0.0, %v3267
        %v3269 = vpop.f32.mrb[0].mxu0
        %3270 = vmatprep.mubr.f32.mxu0 0.0
        %3271 = vmatmul.mubr.f32.gmra.mrb[0].mxu0 %v2065
        %v3272 = vpop.f32.mrb[0].mxu0
        %v3273 = vadd.f32 0.0, %v3272
        %v3274 = vpop.f32.mrb[0].mxu0
        %3275 = vmatprep.mubr.f32.mxu0 0.0
        %3276 = vmatmul.mubr.f32.gmra.mrb[0].mxu0 %v2068
        %v3277 = vpop.f32.mrb[0].mxu0
        %v3278 = vadd.f32 0.0, %v3277
        %v3279 = vpop.f32.mrb[0].mxu0
        %3280 = vdwg.mxu0
        %3281 = vmatprep.subr.mxu0 0.0
        %3282 = vmatpush1.msra.mxu0 %v2931
        %3283 = vmatprep.subr.mxu0 0.0
        %3284 = vmatpush1.msra.mxu0 %v2936
        %3285 = vmatprep.subr.mxu0 0.0
        %3286 = vmatpush1.msra.mxu0 %v2941
        %3287 = vmatprep.subr.mxu0 0.0
        %3288 = vmatpush1.msra.mxu0 %v2946
        %3289 = vmatprep.subr.mxu0 0.0
        %3290 = vmatpush1.msra.mxu0 0.0
        %3291 = vmatprep.subr.mxu0 0.0
        %3292 = vmatpush1.msra.mxu0 0.0
        %3293 = vmatprep.subr.mxu0 0.0
        %3294 = vmatpush1.msra.mxu0 0.0
        %3295 = vmatprep.subr.mxu0 0.0
        %3296 = vmatpush1.msra.mxu0 0.0
        %3297 = vmatprep.subr.mxu0 0.0
        %3298 = vmatpush1.msra.mxu0 0.0
        %3299 = vmatprep.subr.mxu0 0.0
        %3300 = vmatpush1.msra.mxu0 0.0
        %3301 = vmatprep.subr.mxu0 0.0
        %3302 = vmatpush1.msra.mxu0 0.0
        %3303 = vmatprep.subr.mxu0 0.0
        %3304 = vmatpush1.msra.mxu0 0.0
        %3305 = vmatprep.subr.mxu0 0.0
        %3306 = vmatpush1.msra.mxu0 0.0
        %3307 = vmatprep.subr.mxu0 0.0
        %3308 = vmatpush1.msra.mxu0 0.0
        %3309 = vmatprep.subr.mxu0 0.0
        %3310 = vmatpush1.msra.mxu0 0.0
        %3311 = vmatprep.subr.mxu0 0.0
        %3312 = vmatpush1.msra.mxu0 0.0
        %3313 = vmatprep.subr.mxu0 0.0
        %3314 = vmatpush1.msra.mxu0 0.0
        %3315 = vmatprep.subr.mxu0 0.0
        %3316 = vmatpush1.msra.mxu0 0.0
        %3317 = vmatprep.subr.mxu0 0.0
        %3318 = vmatpush1.msra.mxu0 0.0
        %3319 = vmatprep.subr.mxu0 0.0
        %3320 = vmatpush1.msra.mxu0 0.0
        %3321 = vmatprep.subr.mxu0 0.0
        %3322 = vmatpush1.msra.mxu0 0.0
        %3323 = vmatprep.subr.mxu0 0.0
        %3324 = vmatpush1.msra.mxu0 0.0
        %3325 = vmatprep.subr.mxu0 0.0
        %3326 = vmatpush1.msra.mxu0 0.0
        %3327 = vmatprep.subr.mxu0 0.0
        %3328 = vmatpush1.msra.mxu0 0.0
        %3329 = vmatprep.subr.mxu0 0.0
        %3330 = vmatpush1.msra.mxu0 0.0
        %3331 = vmatprep.subr.mxu0 0.0
        %3332 = vmatpush1.msra.mxu0 0.0
        %3333 = vmatprep.subr.mxu0 0.0
        %3334 = vmatpush1.msra.mxu0 0.0
        %3335 = vmatprep.subr.mxu0 0.0
        %3336 = vmatpush1.msra.mxu0 0.0
        %3337 = vmatprep.subr.mxu0 0.0
        %3338 = vmatpush1.msra.mxu0 0.0
        %3339 = vmatprep.subr.mxu0 0.0
        %3340 = vmatpush1.msra.mxu0 0.0
        %3341 = vmatprep.subr.mxu0 0.0
        %3342 = vmatpush1.msra.mxu0 0.0
        %3343 = vmatprep.subr.mxu0 0.0
        %3344 = vmatpush1.msra.mxu0 0.0
        %3345 = vmatprep.mubr.f32.mxu0 0.0
        %3346 = vmatmul.mubr.f32.gmra.mrb[0].mxu0 %v2156
        %v3347 = vpop.f32.mrb[0].mxu0
        %v3348 = vpop.f32.mrb[0].mxu0
        %3349 = vmatprep.mubr.f32.mxu0 0.0
        %3350 = vmatmul.mubr.f32.gmra.mrb[0].mxu0 %v2159
        %v3351 = vpop.f32.mrb[0].mxu0
        %v3352 = vadd.f32 0.0, %v3351
        %v3353 = vpop.f32.mrb[0].mxu0
        %3354 = vmatprep.mubr.f32.mxu0 0.0
        %3355 = vmatmul.mubr.f32.gmra.mrb[0].mxu0 %v2162
        %v3356 = vpop.f32.mrb[0].mxu0
        %v3357 = vadd.f32 0.0, %v3356
        %v3358 = vpop.f32.mrb[0].mxu0
        %3359 = vmatprep.mubr.f32.mxu0 0.0
        %3360 = vmatmul.mubr.f32.gmra.mrb[0].mxu0 %v2165
        %v3361 = vpop.f32.mrb[0].mxu0
        %v3362 = vadd.f32 0.0, %v3361
        %v3363 = vpop.f32.mrb[0].mxu0
        %3364 = vdwg.mxu0
        %3365 = vmatprep.subr.mxu0 0.0
        %3366 = vmatpush1.msra.mxu0 %v2951
        %3367 = vmatprep.subr.mxu0 0.0
        %3368 = vmatpush1.msra.mxu0 %v2956
        %3369 = vmatprep.subr.mxu0 0.0
        %3370 = vmatpush1.msra.mxu0 %v2961
        %3371 = vmatprep.subr.mxu0 0.0
        %3372 = vmatpush1.msra.mxu0 %v2966
        %3373 = vmatprep.subr.mxu0 0.0
        %3374 = vmatpush1.msra.mxu0 0.0
        %3375 = vmatprep.subr.mxu0 0.0
        %3376 = vmatpush1.msra.mxu0 0.0
        %3377 = vmatprep.subr.mxu0 0.0
        %3378 = vmatpush1.msra.mxu0 0.0
        %3379 = vmatprep.subr.mxu0 0.0
        %3380 = vmatpush1.msra.mxu0 0.0
        %3381 = vmatprep.subr.mxu0 0.0
        %3382 = vmatpush1.msra.mxu0 0.0
        %3383 = vmatprep.subr.mxu0 0.0
        %3384 = vmatpush1.msra.mxu0 0.0
        %3385 = vmatprep.subr.mxu0 0.0
        %3386 = vmatpush1.msra.mxu0 0.0
        %3387 = vmatprep.subr.mxu0 0.0
        %3388 = vmatpush1.msra.mxu0 0.0
        %3389 = vmatprep.subr.mxu0 0.0
        %3390 = vmatpush1.msra.mxu0 0.0
        %3391 = vmatprep.subr.mxu0 0.0
        %3392 = vmatpush1.msra.mxu0 0.0
        %3393 = vmatprep.subr.mxu0 0.0
        %3394 = vmatpush1.msra.mxu0 0.0
        %3395 = vmatprep.subr.mxu0 0.0
        %3396 = vmatpush1.msra.mxu0 0.0
        %3397 = vmatprep.subr.mxu0 0.0
        %3398 = vmatpush1.msra.mxu0 0.0
        %3399 = vmatprep.subr.mxu0 0.0
        %3400 = vmatpush1.msra.mxu0 0.0
        %3401 = vmatprep.subr.mxu0 0.0
        %3402 = vmatpush1.msra.mxu0 0.0
        %3403 = vmatprep.subr.mxu0 0.0
        %3404 = vmatpush1.msra.mxu0 0.0
        %3405 = vmatprep.subr.mxu0 0.0
        %3406 = vmatpush1.msra.mxu0 0.0
        %3407 = vmatprep.subr.mxu0 0.0
        %3408 = vmatpush1.msra.mxu0 0.0
        %3409 = vmatprep.subr.mxu0 0.0
        %3410 = vmatpush1.msra.mxu0 0.0
        %3411 = vmatprep.subr.mxu0 0.0
        %3412 = vmatpush1.msra.mxu0 0.0
        %3413 = vmatprep.subr.mxu0 0.0
        %3414 = vmatpush1.msra.mxu0 0.0
        %3415 = vmatprep.subr.mxu0 0.0
        %3416 = vmatpush1.msra.mxu0 0.0
        %3417 = vmatprep.subr.mxu0 0.0
        %3418 = vmatpush1.msra.mxu0 0.0
        %3419 = vmatprep.subr.mxu0 0.0
        %3420 = vmatpush1.msra.mxu0 0.0
        %3421 = vmatprep.subr.mxu0 0.0
        %3422 = vmatpush1.msra.mxu0 0.0
        %3423 = vmatprep.subr.mxu0 0.0
        %3424 = vmatpush1.msra.mxu0 0.0
        %3425 = vmatprep.subr.mxu0 0.0
        %3426 = vmatpush1.msra.mxu0 0.0
        %3427 = vmatprep.subr.mxu0 0.0
        %3428 = vmatpush1.msra.mxu0 0.0
        %3429 = vmatprep.mubr.f32.mxu0 0.0
        %3430 = vmatmul.mubr.f32.gmra.mrb[0].mxu0 %v2253
        %v3431 = vpop.f32.mrb[0].mxu0
        %v3432 = vpop.f32.mrb[0].mxu0
        %3433 = vmatprep.mubr.f32.mxu0 0.0
        %3434 = vmatmul.mubr.f32.gmra.mrb[0].mxu0 %v2256
        %v3435 = vpop.f32.mrb[0].mxu0
        %v3436 = vadd.f32 0.0, %v3435
        %v3437 = vpop.f32.mrb[0].mxu0
        %3438 = vmatprep.mubr.f32.mxu0 0.0
        %3439 = vmatmul.mubr.f32.gmra.mrb[0].mxu0 %v2259
        %v3440 = vpop.f32.mrb[0].mxu0
        %v3441 = vadd.f32 0.0, %v3440
        %v3442 = vpop.f32.mrb[0].mxu0
        %3443 = vmatprep.mubr.f32.mxu0 0.0
        %3444 = vmatmul.mubr.f32.gmra.mrb[0].mxu0 %v2262
        %v3445 = vpop.f32.mrb[0].mxu0
        %v3446 = vadd.f32 0.0, %v3445
        %v3447 = vpop.f32.mrb[0].mxu0
        %3448 = vdwg.mxu0
        %3449 = vmatprep.subr.mxu0 0.0
        %3450 = vmatpush1.msra.mxu0 %v2971
        %3451 = vmatprep.subr.mxu0 0.0
        %3452 = vmatpush1.msra.mxu0 %v2976
        %3453 = vmatprep.subr.mxu0 0.0
        %3454 = vmatpush1.msra.mxu0 %v2981
        %3455 = vmatprep.subr.mxu0 0.0
        %3456 = vmatpush1.msra.mxu0 %v2986
        %3457 = vmatprep.subr.mxu0 0.0
        %3458 = vmatpush1.msra.mxu0 0.0
        %3459 = vmatprep.subr.mxu0 0.0
        %3460 = vmatpush1.msra.mxu0 0.0
        %3461 = vmatprep.subr.mxu0 0.0
        %3462 = vmatpush1.msra.mxu0 0.0
        %3463 = vmatprep.subr.mxu0 0.0
        %3464 = vmatpush1.msra.mxu0 0.0
        %3465 = vmatprep.subr.mxu0 0.0
        %3466 = vmatpush1.msra.mxu0 0.0
        %3467 = vmatprep.subr.mxu0 0.0
        %3468 = vmatpush1.msra.mxu0 0.0
        %3469 = vmatprep.subr.mxu0 0.0
        %3470 = vmatpush1.msra.mxu0 0.0
        %3471 = vmatprep.subr.mxu0 0.0
        %3472 = vmatpush1.msra.mxu0 0.0
        %3473 = vmatprep.subr.mxu0 0.0
        %3474 = vmatpush1.msra.mxu0 0.0
        %3475 = vmatprep.subr.mxu0 0.0
        %3476 = vmatpush1.msra.mxu0 0.0
        %3477 = vmatprep.subr.mxu0 0.0
        %3478 = vmatpush1.msra.mxu0 0.0
        %3479 = vmatprep.subr.mxu0 0.0
        %3480 = vmatpush1.msra.mxu0 0.0
        %3481 = vmatprep.subr.mxu0 0.0
        %3482 = vmatpush1.msra.mxu0 0.0
        %3483 = vmatprep.subr.mxu0 0.0
        %3484 = vmatpush1.msra.mxu0 0.0
        %3485 = vmatprep.subr.mxu0 0.0
        %3486 = vmatpush1.msra.mxu0 0.0
        %3487 = vmatprep.subr.mxu0 0.0
        %3488 = vmatpush1.msra.mxu0 0.0
        %3489 = vmatprep.subr.mxu0 0.0
        %3490 = vmatpush1.msra.mxu0 0.0
        %3491 = vmatprep.subr.mxu0 0.0
        %3492 = vmatpush1.msra.mxu0 0.0
        %3493 = vmatprep.subr.mxu0 0.0
        %3494 = vmatpush1.msra.mxu0 0.0
        %3495 = vmatprep.subr.mxu0 0.0
        %3496 = vmatpush1.msra.mxu0 0.0
        %3497 = vmatprep.subr.mxu0 0.0
        %3498 = vmatpush1.msra.mxu0 0.0
        %3499 = vmatprep.subr.mxu0 0.0
        %3500 = vmatpush1.msra.mxu0 0.0
        %3501 = vmatprep.subr.mxu0 0.0
        %3502 = vmatpush1.msra.mxu0 0.0
        %3503 = vmatprep.subr.mxu0 0.0
        %3504 = vmatpush1.msra.mxu0 0.0
        %3505 = vmatprep.subr.mxu0 0.0
        %3506 = vmatpush1.msra.mxu0 0.0
        %3507 = vmatprep.subr.mxu0 0.0
        %3508 = vmatpush1.msra.mxu0 0.0
        %3509 = vmatprep.subr.mxu0 0.0
        %3510 = vmatpush1.msra.mxu0 0.0
        %3511 = vmatprep.subr.mxu0 0.0
        %3512 = vmatpush1.msra.mxu0 0.0
        %3513 = vmatprep.mubr.f32.mxu0 0.0
        %3514 = vmatmul.mubr.f32.gmra.mrb[0].mxu0 %v2350
        %v3515 = vpop.f32.mrb[0].mxu0
        %v3516 = vpop.f32.mrb[0].mxu0
        %3517 = vmatprep.mubr.f32.mxu0 0.0
        %3518 = vmatmul.mubr.f32.gmra.mrb[0].mxu0 %v2353
        %v3519 = vpop.f32.mrb[0].mxu0
        %v3520 = vadd.f32 0.0, %v3519
        %v3521 = vpop.f32.mrb[0].mxu0
        %3522 = vmatprep.mubr.f32.mxu0 0.0
        %3523 = vmatmul.mubr.f32.gmra.mrb[0].mxu0 %v2356
        %v3524 = vpop.f32.mrb[0].mxu0
        %v3525 = vadd.f32 0.0, %v3524
        %v3526 = vpop.f32.mrb[0].mxu0
        %3527 = vmatprep.mubr.f32.mxu0 0.0
        %3528 = vmatmul.mubr.f32.gmra.mrb[0].mxu0 %v2359
        %v3529 = vpop.f32.mrb[0].mxu0
        %v3530 = vadd.f32 0.0, %v3529
        %v3531 = vpop.f32.mrb[0].mxu0
        %3532 = vdwg.mxu0
        %3533 = vmatprep.subr.mxu0 0.0
        %3534 = vmatpush1.msra.mxu0 %v2991
        %3535 = vmatprep.subr.mxu0 0.0
        %3536 = vmatpush1.msra.mxu0 %v2996
        %3537 = vmatprep.subr.mxu0 0.0
        %3538 = vmatpush1.msra.mxu0 %v3001
        %3539 = vmatprep.subr.mxu0 0.0
        %3540 = vmatpush1.msra.mxu0 %v3006
        %3541 = vmatprep.subr.mxu0 0.0
        %3542 = vmatpush1.msra.mxu0 0.0
        %3543 = vmatprep.subr.mxu0 0.0
        %3544 = vmatpush1.msra.mxu0 0.0
        %3545 = vmatprep.subr.mxu0 0.0
        %3546 = vmatpush1.msra.mxu0 0.0
        %3547 = vmatprep.subr.mxu0 0.0
        %3548 = vmatpush1.msra.mxu0 0.0
        %3549 = vmatprep.subr.mxu0 0.0
        %3550 = vmatpush1.msra.mxu0 0.0
        %3551 = vmatprep.subr.mxu0 0.0
        %3552 = vmatpush1.msra.mxu0 0.0
        %3553 = vmatprep.subr.mxu0 0.0
        %3554 = vmatpush1.msra.mxu0 0.0
        %3555 = vmatprep.subr.mxu0 0.0
        %3556 = vmatpush1.msra.mxu0 0.0
        %3557 = vmatprep.subr.mxu0 0.0
        %3558 = vmatpush1.msra.mxu0 0.0
        %3559 = vmatprep.subr.mxu0 0.0
        %3560 = vmatpush1.msra.mxu0 0.0
        %3561 = vmatprep.subr.mxu0 0.0
        %3562 = vmatpush1.msra.mxu0 0.0
        %3563 = vmatprep.subr.mxu0 0.0
        %3564 = vmatpush1.msra.mxu0 0.0
        %3565 = vmatprep.subr.mxu0 0.0
        %3566 = vmatpush1.msra.mxu0 0.0
        %3567 = vmatprep.subr.mxu0 0.0
        %3568 = vmatpush1.msra.mxu0 0.0
        %3569 = vmatprep.subr.mxu0 0.0
        %3570 = vmatpush1.msra.mxu0 0.0
        %3571 = vmatprep.subr.mxu0 0.0
        %3572 = vmatpush1.msra.mxu0 0.0
        %3573 = vmatprep.subr.mxu0 0.0
        %3574 = vmatpush1.msra.mxu0 0.0
        %3575 = vmatprep.subr.mxu0 0.0
        %3576 = vmatpush1.msra.mxu0 0.0
        %3577 = vmatprep.subr.mxu0 0.0
        %3578 = vmatpush1.msra.mxu0 0.0
        %3579 = vmatprep.subr.mxu0 0.0
        %3580 = vmatpush1.msra.mxu0 0.0
        %3581 = vmatprep.subr.mxu0 0.0
        %3582 = vmatpush1.msra.mxu0 0.0
        %3583 = vmatprep.subr.mxu0 0.0
        %3584 = vmatpush1.msra.mxu0 0.0
        %3585 = vmatprep.subr.mxu0 0.0
        %3586 = vmatpush1.msra.mxu0 0.0
        %3587 = vmatprep.subr.mxu0 0.0
        %3588 = vmatpush1.msra.mxu0 0.0
        %3589 = vmatprep.subr.mxu0 0.0
        %3590 = vmatpush1.msra.mxu0 0.0
        %3591 = vmatprep.subr.mxu0 0.0
        %3592 = vmatpush1.msra.mxu0 0.0
        %3593 = vmatprep.subr.mxu0 0.0
        %3594 = vmatpush1.msra.mxu0 0.0
        %3595 = vmatprep.subr.mxu0 0.0
        %3596 = vmatpush1.msra.mxu0 0.0
        %3597 = vmatprep.mubr.f32.mxu0 0.0
        %3598 = vmatmul.mubr.f32.gmra.mrb[0].mxu0 %v2447
        %v3599 = vpop.f32.mrb[0].mxu0
        %v3600 = vpop.f32.mrb[0].mxu0
        %3601 = vmatprep.mubr.f32.mxu0 0.0
        %3602 = vmatmul.mubr.f32.gmra.mrb[0].mxu0 %v2450
        %v3603 = vpop.f32.mrb[0].mxu0
        %v3604 = vadd.f32 0.0, %v3603
        %v3605 = vpop.f32.mrb[0].mxu0
        %3606 = vmatprep.mubr.f32.mxu0 0.0
        %3607 = vmatmul.mubr.f32.gmra.mrb[0].mxu0 %v2453
        %v3608 = vpop.f32.mrb[0].mxu0
        %v3609 = vadd.f32 0.0, %v3608
        %v3610 = vpop.f32.mrb[0].mxu0
        %3611 = vmatprep.mubr.f32.mxu0 0.0
        %3612 = vmatmul.mubr.f32.gmra.mrb[0].mxu0 %v2456
        %v3613 = vpop.f32.mrb[0].mxu0
        %v3614 = vadd.f32 0.0, %v3613
        %v3615 = vpop.f32.mrb[0].mxu0
        %3616 = vdwg.mxu0
        %3617 = vmatprep.subr.mxu0 0.0
        %3618 = vmatpush1.msra.mxu0 %v3011
        %3619 = vmatprep.subr.mxu0 0.0
        %3620 = vmatpush1.msra.mxu0 %v3016
        %3621 = vmatprep.subr.mxu0 0.0
        %3622 = vmatpush1.msra.mxu0 %v3021
        %3623 = vmatprep.subr.mxu0 0.0
        %3624 = vmatpush1.msra.mxu0 %v3026
        %3625 = vmatprep.subr.mxu0 0.0
        %3626 = vmatpush1.msra.mxu0 0.0
        %3627 = vmatprep.subr.mxu0 0.0
        %3628 = vmatpush1.msra.mxu0 0.0
        %3629 = vmatprep.subr.mxu0 0.0
        %3630 = vmatpush1.msra.mxu0 0.0
        %3631 = vmatprep.subr.mxu0 0.0
        %3632 = vmatpush1.msra.mxu0 0.0
        %3633 = vmatprep.subr.mxu0 0.0
        %3634 = vmatpush1.msra.mxu0 0.0
        %3635 = vmatprep.subr.mxu0 0.0
        %3636 = vmatpush1.msra.mxu0 0.0
        %3637 = vmatprep.subr.mxu0 0.0
        %3638 = vmatpush1.msra.mxu0 0.0
        %3639 = vmatprep.subr.mxu0 0.0
        %3640 = vmatpush1.msra.mxu0 0.0
        %3641 = vmatprep.subr.mxu0 0.0
        %3642 = vmatpush1.msra.mxu0 0.0
        %3643 = vmatprep.subr.mxu0 0.0
        %3644 = vmatpush1.msra.mxu0 0.0
        %3645 = vmatprep.subr.mxu0 0.0
        %3646 = vmatpush1.msra.mxu0 0.0
        %3647 = vmatprep.subr.mxu0 0.0
        %3648 = vmatpush1.msra.mxu0 0.0
        %3649 = vmatprep.subr.mxu0 0.0
        %3650 = vmatpush1.msra.mxu0 0.0
        %3651 = vmatprep.subr.mxu0 0.0
        %3652 = vmatpush1.msra.mxu0 0.0
        %3653 = vmatprep.subr.mxu0 0.0
        %3654 = vmatpush1.msra.mxu0 0.0
        %3655 = vmatprep.subr.mxu0 0.0
        %3656 = vmatpush1.msra.mxu0 0.0
        %3657 = vmatprep.subr.mxu0 0.0
        %3658 = vmatpush1.msra.mxu0 0.0
        %3659 = vmatprep.subr.mxu0 0.0
        %3660 = vmatpush1.msra.mxu0 0.0
        %3661 = vmatprep.subr.mxu0 0.0
        %3662 = vmatpush1.msra.mxu0 0.0
        %3663 = vmatprep.subr.mxu0 0.0
        %3664 = vmatpush1.msra.mxu0 0.0
        %3665 = vmatprep.subr.mxu0 0.0
        %3666 = vmatpush1.msra.mxu0 0.0
        %3667 = vmatprep.subr.mxu0 0.0
        %3668 = vmatpush1.msra.mxu0 0.0
        %3669 = vmatprep.subr.mxu0 0.0
        %3670 = vmatpush1.msra.mxu0 0.0
        %3671 = vmatprep.subr.mxu0 0.0
        %3672 = vmatpush1.msra.mxu0 0.0
        %3673 = vmatprep.subr.mxu0 0.0
        %3674 = vmatpush1.msra.mxu0 0.0
        %3675 = vmatprep.subr.mxu0 0.0
        %3676 = vmatpush1.msra.mxu0 0.0
        %3677 = vmatprep.subr.mxu0 0.0
        %3678 = vmatpush1.msra.mxu0 0.0
        %3679 = vmatprep.subr.mxu0 0.0
        %3680 = vmatpush1.msra.mxu0 0.0
        %3681 = vmatprep.mubr.f32.mxu0 0.0
        %3682 = vmatmul.mubr.f32.gmra.mrb[0].mxu0 %v2544
        %v3683 = vpop.f32.mrb[0].mxu0
        %v3684 = vpop.f32.mrb[0].mxu0
        %3685 = vmatprep.mubr.f32.mxu0 0.0
        %3686 = vmatmul.mubr.f32.gmra.mrb[0].mxu0 %v2547
        %v3687 = vpop.f32.mrb[0].mxu0
        %v3688 = vadd.f32 0.0, %v3687
        %v3689 = vpop.f32.mrb[0].mxu0
        %3690 = vmatprep.mubr.f32.mxu0 0.0
        %3691 = vmatmul.mubr.f32.gmra.mrb[0].mxu0 %v2550
        %v3692 = vpop.f32.mrb[0].mxu0
        %v3693 = vadd.f32 0.0, %v3692
        %v3694 = vpop.f32.mrb[0].mxu0
        %3695 = vmatprep.mubr.f32.mxu0 0.0
        %3696 = vmatmul.mubr.f32.gmra.mrb[0].mxu0 %v2553
        %v3697 = vpop.f32.mrb[0].mxu0
        %v3698 = vadd.f32 0.0, %v3697
        %v3699 = vpop.f32.mrb[0].mxu0
        %3700 = vdwg.mxu0
        %v3701 = vadd.f32 %v3100, %v2643
        %v3702 = vadd.f32 %v3105, %v2643
        %v3703 = vadd.f32 %v3110, %v2643
        %v3704 = vadd.f32 %v3184, %v2643
        %v3705 = vadd.f32 %v3189, %v2643
        %v3706 = vadd.f32 %v3194, %v2643
        %v3707 = vadd.f32 %v3268, %v2643
        %v3708 = vadd.f32 %v3273, %v2643
        %v3709 = vadd.f32 %v3278, %v2643
        %v3710 = vadd.f32 %v3352, %v2643
        %v3711 = vadd.f32 %v3357, %v2643
        %v3712 = vadd.f32 %v3362, %v2643
        %v3713 = vadd.f32 %v3436, %v2643
        %v3714 = vadd.f32 %v3441, %v2643
        %v3715 = vadd.f32 %v3446, %v2643
        %v3716 = vadd.f32 %v3520, %v2643
        %v3717 = vadd.f32 %v3525, %v2643
        %v3718 = vadd.f32 %v3530, %v2643
        %v3719 = vadd.f32 %v3604, %v2643
        %v3720 = vadd.f32 %v3609, %v2643
        %v3721 = vadd.f32 %v3614, %v2643
        %v3722 = vadd.f32 %v3688, %v2643
        %v3723 = vadd.f32 %v3693, %v2643
        %v3724 = vadd.f32 %v3698, %v2643
        %v3725 = vmax.f32 %v3701, 0.0
        %v3726 = vmax.f32 %v3702, 0.0
        %v3727 = vmax.f32 %v3703, 0.0
        %v3728 = vmax.f32 %v3704, 0.0
        %v3729 = vmax.f32 %v3705, 0.0
        %v3730 = vmax.f32 %v3706, 0.0
        %v3731 = vmax.f32 %v3707, 0.0
        %v3732 = vmax.f32 %v3708, 0.0
        %v3733 = vmax.f32 %v3709, 0.0
        %v3734 = vmax.f32 %v3710, 0.0
        %v3735 = vmax.f32 %v3711, 0.0
        %v3736 = vmax.f32 %v3712, 0.0
        %v3737 = vmax.f32 %v3713, 0.0
        %v3738 = vmax.f32 %v3714, 0.0
        %v3739 = vmax.f32 %v3715, 0.0
        %v3740 = vmax.f32 %v3716, 0.0
        %v3741 = vmax.f32 %v3717, 0.0
        %v3742 = vmax.f32 %v3718, 0.0
        %v3743 = vmax.f32 %v3719, 0.0
        %v3744 = vmax.f32 %v3720, 0.0
        %v3745 = vmax.f32 %v3721, 0.0
        %v3746 = vmax.f32 %v3722, 0.0
        %v3747 = vmax.f32 %v3723, 0.0
        %v3748 = vmax.f32 %v3724, 0.0
        %v3749 = vlaneseq
        %v3750 = vshrl.u32 %v3749, 7
        %v3751 = vsub.s32 0, %v3750
        %v3752 = vrot.slane %v278, %v3751
        %v3754 = vsel %vm698, %v3725, 0
        %v3757 = vsel %vm698, %v3726, 0
        %v3760 = vsel %vm698, %v3727, 0
        %v3763 = vsel %vm698, %v3728, 0
        %v3766 = vsel %vm698, %v3729, 0
        %v3769 = vsel %vm698, %v3730, 0
        %v3772 = vsel %vm698, %v3731, 0
        %v3775 = vsel %vm698, %v3732, 0
        %v3778 = vsel %vm698, %v3733, 0
        %v3781 = vsel %vm698, %v3734, 0
        %v3784 = vsel %vm698, %v3735, 0
        %v3787 = vsel %vm698, %v3736, 0
        %v3790 = vsel %vm698, %v3737, 0
        %v3793 = vsel %vm698, %v3738, 0
        %v3796 = vsel %vm698, %v3739, 0
        %v3799 = vsel %vm698, %v3740, 0
        %v3802 = vsel %vm698, %v3741, 0
        %v3805 = vsel %vm698, %v3742, 0
        %v3808 = vsel %vm698, %v3743, 0
        %v3811 = vsel %vm698, %v3744, 0
        %v3814 = vsel %vm698, %v3745, 0
        %v3817 = vsel %vm698, %v3746, 0
        %v3820 = vsel %vm698, %v3747, 0
        %v3823 = vsel %vm698, %v3748, 0
        %3825 = vmatprep.subr.mxu0 0.0
        %3826 = vmatpush1.msra.mxu0 %v274
        %3827 = vmatprep.subr.mxu0 0.0
        %3828 = vmatpush1.msra.mxu0 %v275
        %3829 = vmatprep.subr.mxu0 0.0
        %3830 = vmatpush1.msra.mxu0 %v276
        %3831 = vmatprep.subr.mxu0 0.0
        %3832 = vmatpush1.msra.mxu0 %v277
        %3833 = vmatprep.subr.mxu0 0.0
        %3834 = vmatpush1.msra.mxu0 0.0
        %3835 = vmatprep.subr.mxu0 0.0
        %3836 = vmatpush1.msra.mxu0 0.0
        %3837 = vmatprep.subr.mxu0 0.0
        %3838 = vmatpush1.msra.mxu0 0.0
        %3839 = vmatprep.subr.mxu0 0.0
        %3840 = vmatpush1.msra.mxu0 0.0
        %3841 = vmatprep.subr.mxu0 0.0
        %3842 = vmatpush1.msra.mxu0 0.0
        %3843 = vmatprep.subr.mxu0 0.0
        %3844 = vmatpush1.msra.mxu0 0.0
        %3845 = vmatprep.subr.mxu0 0.0
        %3846 = vmatpush1.msra.mxu0 0.0
        %3847 = vmatprep.subr.mxu0 0.0
        %3848 = vmatpush1.msra.mxu0 0.0
        %3849 = vmatprep.subr.mxu0 0.0
        %3850 = vmatpush1.msra.mxu0 0.0
        %3851 = vmatprep.subr.mxu0 0.0
        %3852 = vmatpush1.msra.mxu0 0.0
        %3853 = vmatprep.subr.mxu0 0.0
        %3854 = vmatpush1.msra.mxu0 0.0
        %3855 = vmatprep.subr.mxu0 0.0
        %3856 = vmatpush1.msra.mxu0 0.0
        %3857 = vmatprep.subr.mxu0 0.0
        %3858 = vmatpush1.msra.mxu0 0.0
        %3859 = vmatprep.subr.mxu0 0.0
        %3860 = vmatpush1.msra.mxu0 0.0
        %3861 = vmatprep.subr.mxu0 0.0
        %3862 = vmatpush1.msra.mxu0 0.0
        %3863 = vmatprep.subr.mxu0 0.0
        %3864 = vmatpush1.msra.mxu0 0.0
        %3865 = vmatprep.subr.mxu0 0.0
        %3866 = vmatpush1.msra.mxu0 0.0
        %3867 = vmatprep.subr.mxu0 0.0
        %3868 = vmatpush1.msra.mxu0 0.0
        %3869 = vmatprep.subr.mxu0 0.0
        %3870 = vmatpush1.msra.mxu0 0.0
        %3871 = vmatprep.subr.mxu0 0.0
        %3872 = vmatpush1.msra.mxu0 0.0
        %3873 = vmatprep.subr.mxu0 0.0
        %3874 = vmatpush1.msra.mxu0 0.0
        %3875 = vmatprep.subr.mxu0 0.0
        %3876 = vmatpush1.msra.mxu0 0.0
        %3877 = vmatprep.subr.mxu0 0.0
        %3878 = vmatpush1.msra.mxu0 0.0
        %3879 = vmatprep.subr.mxu0 0.0
        %3880 = vmatpush1.msra.mxu0 0.0
        %3881 = vmatprep.subr.mxu0 0.0
        %3882 = vmatpush1.msra.mxu0 0.0
        %3883 = vmatprep.subr.mxu0 0.0
        %3884 = vmatpush1.msra.mxu0 0.0
        %3885 = vmatprep.subr.mxu0 0.0
        %3886 = vmatpush1.msra.mxu0 0.0
        %3887 = vmatprep.subr.mxu0 0.0
        %3888 = vmatpush1.msra.mxu0 0.0
        %3889 = vmatprep.mubr.f32.mxu0 0.0
        %3890 = vmatmul.mubr.f32.gmra.mrb[0].mxu0 %v3754
        %v3891 = vpop.f32.mrb[0].mxu0
        %v3892 = vadd.f32 %v3752, %v3891
        %v3893 = vpop.f32.mrb[0].mxu0
        %3894 = vmatprep.mubr.f32.mxu0 0.0
        %3895 = vmatmul.mubr.f32.gmra.mrb[0].mxu0 %v3757
        %v3896 = vpop.f32.mrb[0].mxu0
        %v3897 = vadd.f32 %v3752, %v3896
        %v3898 = vpop.f32.mrb[0].mxu0
        %3899 = vmatprep.mubr.f32.mxu0 0.0
        %3900 = vmatmul.mubr.f32.gmra.mrb[0].mxu0 %v3760
        %v3901 = vpop.f32.mrb[0].mxu0
        %v3902 = vadd.f32 %v3752, %v3901
        %v3903 = vpop.f32.mrb[0].mxu0
        %3904 = vmatprep.mubr.f32.mxu0 0.0
        %3905 = vmatmul.mubr.f32.gmra.mrb[0].mxu0 %v3763
        %v3906 = vpop.f32.mrb[0].mxu0
        %v3907 = vadd.f32 %v3752, %v3906
        %v3908 = vpop.f32.mrb[0].mxu0
        %3909 = vmatprep.mubr.f32.mxu0 0.0
        %3910 = vmatmul.mubr.f32.gmra.mrb[0].mxu0 %v3766
        %v3911 = vpop.f32.mrb[0].mxu0
        %v3912 = vadd.f32 %v3752, %v3911
        %v3913 = vpop.f32.mrb[0].mxu0
        %3914 = vmatprep.mubr.f32.mxu0 0.0
        %3915 = vmatmul.mubr.f32.gmra.mrb[0].mxu0 %v3769
        %v3916 = vpop.f32.mrb[0].mxu0
        %v3917 = vadd.f32 %v3752, %v3916
        %v3918 = vpop.f32.mrb[0].mxu0
        %3919 = vmatprep.mubr.f32.mxu0 0.0
        %3920 = vmatmul.mubr.f32.gmra.mrb[0].mxu0 %v3772
        %v3921 = vpop.f32.mrb[0].mxu0
        %v3922 = vadd.f32 %v3752, %v3921
        %v3923 = vpop.f32.mrb[0].mxu0
        %3924 = vmatprep.mubr.f32.mxu0 0.0
        %3925 = vmatmul.mubr.f32.gmra.mrb[0].mxu0 %v3775
        %v3926 = vpop.f32.mrb[0].mxu0
        %v3927 = vadd.f32 %v3752, %v3926
        %v3928 = vpop.f32.mrb[0].mxu0
        %3929 = vmatprep.mubr.f32.mxu0 0.0
        %3930 = vmatmul.mubr.f32.gmra.mrb[0].mxu0 %v3778
        %v3931 = vpop.f32.mrb[0].mxu0
        %v3932 = vadd.f32 %v3752, %v3931
        %v3933 = vpop.f32.mrb[0].mxu0
        %3934 = vmatprep.mubr.f32.mxu0 0.0
        %3935 = vmatmul.mubr.f32.gmra.mrb[0].mxu0 %v3781
        %v3936 = vpop.f32.mrb[0].mxu0
        %v3937 = vadd.f32 %v3752, %v3936
        %v3938 = vpop.f32.mrb[0].mxu0
        %3939 = vmatprep.mubr.f32.mxu0 0.0
        %3940 = vmatmul.mubr.f32.gmra.mrb[0].mxu0 %v3784
        %v3941 = vpop.f32.mrb[0].mxu0
        %v3942 = vadd.f32 %v3752, %v3941
        %v3943 = vpop.f32.mrb[0].mxu0
        %3944 = vmatprep.mubr.f32.mxu0 0.0
        %3945 = vmatmul.mubr.f32.gmra.mrb[0].mxu0 %v3787
        %v3946 = vpop.f32.mrb[0].mxu0
        %v3947 = vadd.f32 %v3752, %v3946
        %v3948 = vpop.f32.mrb[0].mxu0
        %3949 = vmatprep.mubr.f32.mxu0 0.0
        %3950 = vmatmul.mubr.f32.gmra.mrb[0].mxu0 %v3790
        %v3951 = vpop.f32.mrb[0].mxu0
        %v3952 = vadd.f32 %v3752, %v3951
        %v3953 = vpop.f32.mrb[0].mxu0
        %3954 = vmatprep.mubr.f32.mxu0 0.0
        %3955 = vmatmul.mubr.f32.gmra.mrb[0].mxu0 %v3793
        %v3956 = vpop.f32.mrb[0].mxu0
        %v3957 = vadd.f32 %v3752, %v3956
        %v3958 = vpop.f32.mrb[0].mxu0
        %3959 = vmatprep.mubr.f32.mxu0 0.0
        %3960 = vmatmul.mubr.f32.gmra.mrb[0].mxu0 %v3796
        %v3961 = vpop.f32.mrb[0].mxu0
        %v3962 = vadd.f32 %v3752, %v3961
        %v3963 = vpop.f32.mrb[0].mxu0
        %3964 = vmatprep.mubr.f32.mxu0 0.0
        %3965 = vmatmul.mubr.f32.gmra.mrb[0].mxu0 %v3799
        %v3966 = vpop.f32.mrb[0].mxu0
        %v3967 = vadd.f32 %v3752, %v3966
        %v3968 = vpop.f32.mrb[0].mxu0
        %3969 = vmatprep.mubr.f32.mxu0 0.0
        %3970 = vmatmul.mubr.f32.gmra.mrb[0].mxu0 %v3802
        %v3971 = vpop.f32.mrb[0].mxu0
        %v3972 = vadd.f32 %v3752, %v3971
        %v3973 = vpop.f32.mrb[0].mxu0
        %3974 = vmatprep.mubr.f32.mxu0 0.0
        %3975 = vmatmul.mubr.f32.gmra.mrb[0].mxu0 %v3805
        %v3976 = vpop.f32.mrb[0].mxu0
        %v3977 = vadd.f32 %v3752, %v3976
        %v3978 = vpop.f32.mrb[0].mxu0
        %3979 = vmatprep.mubr.f32.mxu0 0.0
        %3980 = vmatmul.mubr.f32.gmra.mrb[0].mxu0 %v3808
        %v3981 = vpop.f32.mrb[0].mxu0
        %v3982 = vadd.f32 %v3752, %v3981
        %v3983 = vpop.f32.mrb[0].mxu0
        %3984 = vmatprep.mubr.f32.mxu0 0.0
        %3985 = vmatmul.mubr.f32.gmra.mrb[0].mxu0 %v3811
        %v3986 = vpop.f32.mrb[0].mxu0
        %v3987 = vadd.f32 %v3752, %v3986
        %v3988 = vpop.f32.mrb[0].mxu0
        %3989 = vmatprep.mubr.f32.mxu0 0.0
        %3990 = vmatmul.mubr.f32.gmra.mrb[0].mxu0 %v3814
        %v3991 = vpop.f32.mrb[0].mxu0
        %v3992 = vadd.f32 %v3752, %v3991
        %v3993 = vpop.f32.mrb[0].mxu0
        %3994 = vmatprep.mubr.f32.mxu0 0.0
        %3995 = vmatmul.mubr.f32.gmra.mrb[0].mxu0 %v3817
        %v3996 = vpop.f32.mrb[0].mxu0
        %v3997 = vadd.f32 %v3752, %v3996
        %v3998 = vpop.f32.mrb[0].mxu0
        %3999 = vmatprep.mubr.f32.mxu0 0.0
        %4000 = vmatmul.mubr.f32.gmra.mrb[0].mxu0 %v3820
        %v4001 = vpop.f32.mrb[0].mxu0
        %v4002 = vadd.f32 %v3752, %v4001
        %v4003 = vpop.f32.mrb[0].mxu0
        %4004 = vmatprep.mubr.f32.mxu0 0.0
        %4005 = vmatmul.mubr.f32.gmra.mrb[0].mxu0 %v3823
        %v4006 = vpop.f32.mrb[0].mxu0
        %v4007 = vadd.f32 %v3752, %v4006
        %v4008 = vpop.f32.mrb[0].mxu0
        %4009 = vdwg.mxu0
        %4010 = vmax.xlane.f32.xlu0 %v3892
        %v4011 = vpop.xlane.xlu0 %4010
        %4012 = vmax.xlane.f32.xlu0 %v3897
        %v4013 = vpop.xlane.xlu0 %4012
        %4014 = vmax.xlane.f32.xlu0 %v3902
        %v4015 = vpop.xlane.xlu0 %4014
        %4016 = vmax.xlane.f32.xlu0 %v3907
        %v4017 = vpop.xlane.xlu0 %4016
        %4018 = vmax.xlane.f32.xlu0 %v3912
        %v4019 = vpop.xlane.xlu0 %4018
        %4020 = vmax.xlane.f32.xlu0 %v3917
        %v4021 = vpop.xlane.xlu0 %4020
        %4022 = vmax.xlane.f32.xlu0 %v3922
        %v4023 = vpop.xlane.xlu0 %4022
        %4024 = vmax.xlane.f32.xlu0 %v3927
        %v4025 = vpop.xlane.xlu0 %4024
        %4026 = vmax.xlane.f32.xlu0 %v3932
        %v4027 = vpop.xlane.xlu0 %4026
        %4028 = vmax.xlane.f32.xlu0 %v3937
        %v4029 = vpop.xlane.xlu0 %4028
        %4030 = vmax.xlane.f32.xlu0 %v3942
        %v4031 = vpop.xlane.xlu0 %4030
        %4032 = vmax.xlane.f32.xlu0 %v3947
        %v4033 = vpop.xlane.xlu0 %4032
        %4034 = vmax.xlane.f32.xlu0 %v3952
        %v4035 = vpop.xlane.xlu0 %4034
        %4036 = vmax.xlane.f32.xlu0 %v3957
        %v4037 = vpop.xlane.xlu0 %4036
        %4038 = vmax.xlane.f32.xlu0 %v3962
        %v4039 = vpop.xlane.xlu0 %4038
        %4040 = vmax.xlane.f32.xlu0 %v3967
        %v4041 = vpop.xlane.xlu0 %4040
        %4042 = vmax.xlane.f32.xlu0 %v3972
        %v4043 = vpop.xlane.xlu0 %4042
        %4044 = vmax.xlane.f32.xlu0 %v3977
        %v4045 = vpop.xlane.xlu0 %4044
        %4046 = vmax.xlane.f32.xlu0 %v3982
        %v4047 = vpop.xlane.xlu0 %4046
        %4048 = vmax.xlane.f32.xlu0 %v3987
        %v4049 = vpop.xlane.xlu0 %4048
        %4050 = vmax.xlane.f32.xlu0 %v3992
        %v4051 = vpop.xlane.xlu0 %4050
        %4052 = vmax.xlane.f32.xlu0 %v3997
        %v4053 = vpop.xlane.xlu0 %4052
        %4054 = vmax.xlane.f32.xlu0 %v4002
        %v4055 = vpop.xlane.xlu0 %4054
        %4056 = vmax.xlane.f32.xlu0 %v4007
        %v4057 = vpop.xlane.xlu0 %4056
        %v4058 = vsub.f32 %v3892, %v4011
        %v4059 = vsub.f32 %v3897, %v4013
        %v4060 = vsub.f32 %v3902, %v4015
        %v4061 = vsub.f32 %v3907, %v4017
        %v4062 = vsub.f32 %v3912, %v4019
        %v4063 = vsub.f32 %v3917, %v4021
        %v4064 = vsub.f32 %v3922, %v4023
        %v4065 = vsub.f32 %v3927, %v4025
        %v4066 = vsub.f32 %v3932, %v4027
        %v4067 = vsub.f32 %v3937, %v4029
        %v4068 = vsub.f32 %v3942, %v4031
        %v4069 = vsub.f32 %v3947, %v4033
        %v4070 = vsub.f32 %v3952, %v4035
        %v4071 = vsub.f32 %v3957, %v4037
        %v4072 = vsub.f32 %v3962, %v4039
        %v4073 = vsub.f32 %v3967, %v4041
        %v4074 = vsub.f32 %v3972, %v4043
        %v4075 = vsub.f32 %v3977, %v4045
        %v4076 = vsub.f32 %v3982, %v4047
        %v4077 = vsub.f32 %v3987, %v4049
        %v4078 = vsub.f32 %v3992, %v4051
        %v4079 = vsub.f32 %v3997, %v4053
        %v4080 = vsub.f32 %v4002, %v4055
        %v4081 = vsub.f32 %v4007, %v4057
        %v4082 = vmul.f32 %v4058, 1.442695
        %v4083 = vpow.pop %v4082
        %v4084 = vmul.f32 %v4059, 1.442695
        %v4085 = vpow.pop %v4084
        %v4086 = vmul.f32 %v4060, 1.442695
        %v4087 = vpow.pop %v4086
        %v4088 = vmul.f32 %v4061, 1.442695
        %v4089 = vpow.pop %v4088
        %v4090 = vmul.f32 %v4062, 1.442695
        %v4091 = vpow.pop %v4090
        %v4092 = vmul.f32 %v4063, 1.442695
        %v4093 = vpow.pop %v4092
        %v4094 = vmul.f32 %v4064, 1.442695
        %v4095 = vpow.pop %v4094
        %v4096 = vmul.f32 %v4065, 1.442695
        %v4097 = vpow.pop %v4096
        %v4098 = vmul.f32 %v4066, 1.442695
        %v4099 = vpow.pop %v4098
        %v4100 = vmul.f32 %v4067, 1.442695
        %v4101 = vpow.pop %v4100
        %v4102 = vmul.f32 %v4068, 1.442695
        %v4103 = vpow.pop %v4102
        %v4104 = vmul.f32 %v4069, 1.442695
        %v4105 = vpow.pop %v4104
        %v4106 = vmul.f32 %v4070, 1.442695
        %v4107 = vpow.pop %v4106
        %v4108 = vmul.f32 %v4071, 1.442695
        %v4109 = vpow.pop %v4108
        %v4110 = vmul.f32 %v4072, 1.442695
        %v4111 = vpow.pop %v4110
        %v4112 = vmul.f32 %v4073, 1.442695
        %v4113 = vpow.pop %v4112
        %v4114 = vmul.f32 %v4074, 1.442695
        %v4115 = vpow.pop %v4114
        %v4116 = vmul.f32 %v4075, 1.442695
        %v4117 = vpow.pop %v4116
        %v4118 = vmul.f32 %v4076, 1.442695
        %v4119 = vpow.pop %v4118
        %v4120 = vmul.f32 %v4077, 1.442695
        %v4121 = vpow.pop %v4120
        %v4122 = vmul.f32 %v4078, 1.442695
        %v4123 = vpow.pop %v4122
        %v4124 = vmul.f32 %v4079, 1.442695
        %v4125 = vpow.pop %v4124
        %v4126 = vmul.f32 %v4080, 1.442695
        %v4127 = vpow.pop %v4126
        %v4128 = vmul.f32 %v4081, 1.442695
        %v4129 = vpow.pop %v4128
        %4130 = vadd.xlane.f32.xlu0 %v4083
        %v4131 = vpop.xlane.xlu0 %4130
        %4132 = vadd.xlane.f32.xlu0 %v4085
        %v4133 = vpop.xlane.xlu0 %4132
        %4134 = vadd.xlane.f32.xlu0 %v4087
        %v4135 = vpop.xlane.xlu0 %4134
        %4136 = vadd.xlane.f32.xlu0 %v4089
        %v4137 = vpop.xlane.xlu0 %4136
        %4138 = vadd.xlane.f32.xlu0 %v4091
        %v4139 = vpop.xlane.xlu0 %4138
        %4140 = vadd.xlane.f32.xlu0 %v4093
        %v4141 = vpop.xlane.xlu0 %4140
        %4142 = vadd.xlane.f32.xlu0 %v4095
        %v4143 = vpop.xlane.xlu0 %4142
        %4144 = vadd.xlane.f32.xlu0 %v4097
        %v4145 = vpop.xlane.xlu0 %4144
        %4146 = vadd.xlane.f32.xlu0 %v4099
        %v4147 = vpop.xlane.xlu0 %4146
        %4148 = vadd.xlane.f32.xlu0 %v4101
        %v4149 = vpop.xlane.xlu0 %4148
        %4150 = vadd.xlane.f32.xlu0 %v4103
        %v4151 = vpop.xlane.xlu0 %4150
        %4152 = vadd.xlane.f32.xlu0 %v4105
        %v4153 = vpop.xlane.xlu0 %4152
        %4154 = vadd.xlane.f32.xlu0 %v4107
        %v4155 = vpop.xlane.xlu0 %4154
        %4156 = vadd.xlane.f32.xlu0 %v4109
        %v4157 = vpop.xlane.xlu0 %4156
        %4158 = vadd.xlane.f32.xlu0 %v4111
        %v4159 = vpop.xlane.xlu0 %4158
        %4160 = vadd.xlane.f32.xlu0 %v4113
        %v4161 = vpop.xlane.xlu0 %4160
        %4162 = vadd.xlane.f32.xlu0 %v4115
        %v4163 = vpop.xlane.xlu0 %4162
        %4164 = vadd.xlane.f32.xlu0 %v4117
        %v4165 = vpop.xlane.xlu0 %4164
        %4166 = vadd.xlane.f32.xlu0 %v4119
        %v4167 = vpop.xlane.xlu0 %4166
        %4168 = vadd.xlane.f32.xlu0 %v4121
        %v4169 = vpop.xlane.xlu0 %4168
        %4170 = vadd.xlane.f32.xlu0 %v4123
        %v4171 = vpop.xlane.xlu0 %4170
        %4172 = vadd.xlane.f32.xlu0 %v4125
        %v4173 = vpop.xlane.xlu0 %4172
        %4174 = vadd.xlane.f32.xlu0 %v4127
        %v4175 = vpop.xlane.xlu0 %4174
        %4176 = vadd.xlane.f32.xlu0 %v4129
        %v4177 = vpop.xlane.xlu0 %4176
        %v4178 = vlog2.pop %v4131
        %v4179 = vmul.f32 %v4178, 0.6931472
        %v4180 = vlog2.pop %v4133
        %v4181 = vmul.f32 %v4180, 0.6931472
        %v4182 = vlog2.pop %v4135
        %v4183 = vmul.f32 %v4182, 0.6931472
        %v4184 = vlog2.pop %v4137
        %v4185 = vmul.f32 %v4184, 0.6931472
        %v4186 = vlog2.pop %v4139
        %v4187 = vmul.f32 %v4186, 0.6931472
        %v4188 = vlog2.pop %v4141
        %v4189 = vmul.f32 %v4188, 0.6931472
        %v4190 = vlog2.pop %v4143
        %v4191 = vmul.f32 %v4190, 0.6931472
        %v4192 = vlog2.pop %v4145
        %v4193 = vmul.f32 %v4192, 0.6931472
        %v4194 = vlog2.pop %v4147
        %v4195 = vmul.f32 %v4194, 0.6931472
        %v4196 = vlog2.pop %v4149
        %v4197 = vmul.f32 %v4196, 0.6931472
        %v4198 = vlog2.pop %v4151
        %v4199 = vmul.f32 %v4198, 0.6931472
        %v4200 = vlog2.pop %v4153
        %v4201 = vmul.f32 %v4200, 0.6931472
        %v4202 = vlog2.pop %v4155
        %v4203 = vmul.f32 %v4202, 0.6931472
        %v4204 = vlog2.pop %v4157
        %v4205 = vmul.f32 %v4204, 0.6931472
        %v4206 = vlog2.pop %v4159
        %v4207 = vmul.f32 %v4206, 0.6931472
        %v4208 = vlog2.pop %v4161
        %v4209 = vmul.f32 %v4208, 0.6931472
        %v4210 = vlog2.pop %v4163
        %v4211 = vmul.f32 %v4210, 0.6931472
        %v4212 = vlog2.pop %v4165
        %v4213 = vmul.f32 %v4212, 0.6931472
        %v4214 = vlog2.pop %v4167
        %v4215 = vmul.f32 %v4214, 0.6931472
        %v4216 = vlog2.pop %v4169
        %v4217 = vmul.f32 %v4216, 0.6931472
        %v4218 = vlog2.pop %v4171
        %v4219 = vmul.f32 %v4218, 0.6931472
        %v4220 = vlog2.pop %v4173
        %v4221 = vmul.f32 %v4220, 0.6931472
        %v4222 = vlog2.pop %v4175
        %v4223 = vmul.f32 %v4222, 0.6931472
        %v4224 = vlog2.pop %v4177
        %v4225 = vmul.f32 %v4224, 0.6931472
        %v4226 = vsub.f32 %v4058, %v4179
        %v4227 = vsub.f32 %v4059, %v4181
        %v4228 = vsub.f32 %v4060, %v4183
        %v4229 = vsub.f32 %v4061, %v4185
        %v4230 = vsub.f32 %v4062, %v4187
        %v4231 = vsub.f32 %v4063, %v4189
        %v4232 = vsub.f32 %v4064, %v4191
        %v4233 = vsub.f32 %v4065, %v4193
        %v4234 = vsub.f32 %v4066, %v4195
        %v4235 = vsub.f32 %v4067, %v4197
        %v4236 = vsub.f32 %v4068, %v4199
        %v4237 = vsub.f32 %v4069, %v4201
        %v4238 = vsub.f32 %v4070, %v4203
        %v4239 = vsub.f32 %v4071, %v4205
        %v4240 = vsub.f32 %v4072, %v4207
        %v4241 = vsub.f32 %v4073, %v4209
        %v4242 = vsub.f32 %v4074, %v4211
        %v4243 = vsub.f32 %v4075, %v4213
        %v4244 = vsub.f32 %v4076, %v4215
        %v4245 = vsub.f32 %v4077, %v4217
        %v4246 = vsub.f32 %v4078, %v4219
        %v4247 = vsub.f32 %v4079, %v4221
        %v4248 = vsub.f32 %v4080, %v4223
        %v4249 = vsub.f32 %v4081, %v4225
        %4250 = vst [vmem:[%s257] sm:$0xff] %v4226
        %4251 = vst [vmem:[%s257 + $0x8] sm:$0xff] %v4227
        %4252 = vst [vmem:[%s257 + $0x10] sm:$0xff] %v4228
        %4253 = vst [vmem:[%s257 + $0x18] sm:$0xff] %v4229
        %4254 = vst [vmem:[%s257 + $0x20] sm:$0xff] %v4230
        %4255 = vst [vmem:[%s257 + $0x28] sm:$0xff] %v4231
        %4256 = vst [vmem:[%s257 + $0x30] sm:$0xff] %v4232
        %4257 = vst [vmem:[%s257 + $0x38] sm:$0xff] %v4233
        %4258 = vst [vmem:[%s257 + $0x40] sm:$0xff] %v4234
        %4259 = vst [vmem:[%s257 + $0x48] sm:$0xff] %v4235
        %4260 = vst [vmem:[%s257 + $0x50] sm:$0xff] %v4236
        %4261 = vst [vmem:[%s257 + $0x58] sm:$0xff] %v4237
        %4262 = vst [vmem:[%s257 + $0x60] sm:$0xff] %v4238
        %4263 = vst [vmem:[%s257 + $0x68] sm:$0xff] %v4239
        %4264 = vst [vmem:[%s257 + $0x70] sm:$0xff] %v4240
        %4265 = vst [vmem:[%s257 + $0x78] sm:$0xff] %v4241
        %4266 = vst [vmem:[%s257 + $0x80] sm:$0xff] %v4242
        %4267 = vst [vmem:[%s257 + $0x88] sm:$0xff] %v4243
        %4268 = vst [vmem:[%s257 + $0x90] sm:$0xff] %v4244
        %4269 = vst [vmem:[%s257 + $0x98] sm:$0xff] %v4245
        %4270 = vst [vmem:[%s257 + $0xa0] sm:$0xff] %v4246
        %4271 = vst [vmem:[%s257 + $0xa8] sm:$0xff] %v4247
        %4272 = vst [vmem:[%s257 + $0xb0] sm:$0xff] %v4248
        %4273 = vst [vmem:[%s257 + $0xb8] sm:$0xff] %v4249
        %s4274 = sand.u32 %s123, 1
        %s4275 = scalar_lea.sflag [#allocation4], %s4274
        %s4276 = sand.u32 %s123, 1
        %s4277 = smul.addr %s4276, 192
        %s4278 = scalar_lea.vmem [#allocation5], %s4277
        // Predicated region
        $region41: #{tpu_custom_call.1} parent=35 // pred_check
          %p4279 = pneg %p133
        $region42: #{tpu_custom_call.1} parent=35 // pred_check_branch
          %4281 = sbr.rel (%p4279) target = $region44
        $region43: #{tpu_custom_call.1} parent=35 // pred_region
          %s4282 = smul.u32 24, %s21
          %s4284 = ssub.s32 3072, 3072
          %4285 = vsyncadd %s4275, %s4284
          %s4286 = smul.addr %s4282, 128
          %s4287 = scalar_lea.hbm %s4, %s4286
          %s4288 = sshll.u32 %s4278, 4
          %s4289 = int_to_ptr.vmem [resolvable:$true] %s4288
          %4294 = dma.vmem_to_hbm [thread:$0]  %s4289, 3072, %s4287, %s4275, 128, 128, 8
        $region44: #{tpu_custom_call.1} parent=35 // pred_fallthru
          _
      $region36: #{tpu_custom_call.1} parent=5 // pred_fallthru
        _
      %p4295 = scmp.le.s32.totalorder 2, %s16
      // Predicated region
      $region45: #{tpu_custom_call.1} parent=5 // pred_check
        %p4296 = pneg %p4295
      $region46: #{tpu_custom_call.1} parent=5 // pred_check_branch
        %4298 = sbr.rel (%p4296) target = $region48
      $region47: #{tpu_custom_call.1} parent=5 // pred_region
        %s4299 = ssub.s32 %s16, 2
        // Predicated region
        $region49: #{tpu_custom_call.1} parent=47 // pred_check
          %p4300 = pneg %p139
        $region50: #{tpu_custom_call.1} parent=47 // pred_check_branch
          %4302 = sbr.rel (%p4300) target = $region52
        $region51: #{tpu_custom_call.1} parent=47 // pred_region
          %s4303 = sand.u32 %s124, 1
          %s4304 = scalar_lea.sflag [#allocation4], %s4303
          %s4305 = sand.u32 %s124, 1
          %s4306 = smul.addr %s4305, 192
          %s4307 = scalar_lea.vmem [#allocation5], %s4306
          %4308 = dma.done %s4304, 3072
        $region52: #{tpu_custom_call.1} parent=47 // pred_fallthru
          _
      $region48: #{tpu_custom_call.1} parent=5 // pred_fallthru
        _
    $region6: #{tpu_custom_call.1} parent=1 // loop_footer
      %s20 = sadd.s32 1, %s16
    $region7: #{tpu_custom_call.1} parent=1 // loop_footer_branch
      %15 = sbr.rel target = $region3
    $region8: #{tpu_custom_call.1} parent=1 // loop_exit
      _
    %4309 = vsyncpa [#allocation3], 1
    %s4310 = scalar_lea.sflag [#allocation3], 1
    %4311 = vsyncpa %s4310, 1
    %4312 = vsyncpa [#allocation4], 1
    %s4313 = scalar_lea.sflag [#allocation4], 1
    %4314 = vsyncpa %s4313, 1

</llo_original>
